<compile_context>
chip_gen: v7x
topology: tpu7x:2x2x1
jax: 0.10.0
libtpu: 0.0.40
codegen_flags: <defaults>
</compile_context>

<pallas_src>
import functools

import jax
import jax.numpy as jnp
from jax.experimental import pallas as pl
from jax.experimental.pallas import tpu as pltpu


def _elu(v):
    # ELU(alpha=1.0). exp() on the positive branch is discarded by where (safe).
    return jnp.where(v > 0, v, jnp.exp(v) - 1.0)


def _generator_mlp_kernel(
    x_ref, z_ref,
    w1_ref, b1_ref,
    w2_ref, b2_ref,
    w3_ref, b3_ref,
    w4_ref, b4_ref,
    w5_ref, b5_ref,
    w6_ref, b6_ref,
    out_ref,
):
    n = w1_ref.shape[1]  # n_tokens (layer-1 output width); w1 is [2n, n]

    # Layer 1: fused "concat" -> two matmuls against static halves of w1.
    x_bf = x_ref[...].astype(jnp.bfloat16)
    z_bf = z_ref[...].astype(jnp.bfloat16)
    h = (jnp.dot(x_bf, w1_ref[:n, :], preferred_element_type=jnp.float32)
         + jnp.dot(z_bf, w1_ref[n:, :], preferred_element_type=jnp.float32)
         + b1_ref[...])
    h = _elu(h)

    # Encoder layers 2-3 and decoder layers 1-2 (all followed by ELU).
    for w_ref, b_ref in ((w2_ref, b2_ref), (w3_ref, b3_ref),
                         (w4_ref, b4_ref), (w5_ref, b5_ref)):
        h = _elu(jnp.dot(h.astype(jnp.bfloat16), w_ref[...],
                         preferred_element_type=jnp.float32) + b_ref[...])

    # Decoder layer 3: no activation.
    h = jnp.dot(h.astype(jnp.bfloat16), w6_ref[...],
                preferred_element_type=jnp.float32) + b6_ref[...]
    out_ref[...] = h.astype(out_ref.dtype)


@functools.partial(jax.jit, static_argnames=("tile_b",))
def generator_mlp_forward(x, z, params, *, tile_b=128):
    """x, z: [B, n_tokens] float32.  Returns [B, n_tokens] float32."""
    B, n = x.shape
    tb = tile_b if (B % tile_b == 0 and B >= tile_b) else B
    grid = (B // tb,)

    (w1, b1), (w2, b2), (w3, b3), (w4, b4), (w5, b5), (w6, b6) = params

    def act_spec(feat):
        # Activation/output tiles move with the batch-tile grid index.
        return pl.BlockSpec((tb, feat), lambda i: (i, 0))

    def resident_spec(shape):
        # Weights/biases: same block for every grid step -> DMA'd once,
        # resident in VMEM across batch tiles.
        return pl.BlockSpec(shape, lambda i: tuple(0 for _ in shape))

    weight_arrays = (w1, b1, w2, b2, w3, b3, w4, b4, w5, b5, w6, b6)
    in_specs = ([act_spec(n), act_spec(n)]
                + [resident_spec(a.shape) for a in weight_arrays])

    dims = [(2 * n, n), (n, n // 2), (n // 2, n // 4),
            (n // 4, n // 2), (n // 2, n // 2), (n // 2, n)]
    flops = 2 * B * sum(fi * fo for fi, fo in dims)
    transcendentals = B * (n + n // 2 + n // 4 + n // 2 + n // 2)  # ELU exps
    weight_bytes = sum(int(a.size) * a.dtype.itemsize for a in weight_arrays)
    act_bytes = (x.size + z.size + B * n) * 4
    cost = pl.CostEstimate(flops=flops, transcendentals=transcendentals,
                           bytes_accessed=weight_bytes + act_bytes)

    out = pl.pallas_call(
        _generator_mlp_kernel,
        out_shape=jax.ShapeDtypeStruct((B, n), jnp.float32),
        grid=grid,
        in_specs=in_specs,
        out_specs=act_spec(n),
        compiler_params=pltpu.CompilerParams(
            dimension_semantics=("parallel",),
            vmem_limit_bytes=16 << 20,
        ),
        cost_estimate=cost,
    )(x, z, *weight_arrays)
    return out


def init_params(key, n_tokens):
    """Deterministic synthetic init.  Weights [in, out] bf16; biases (1, out) f32."""
    dims = [
        (2 * n_tokens, n_tokens),        # encoder Linear 1
        (n_tokens, n_tokens // 2),       # encoder Linear 2
        (n_tokens // 2, n_tokens // 4),  # encoder Linear 3
        (n_tokens // 4, n_tokens // 2),  # decoder Linear 1
        (n_tokens // 2, n_tokens // 2),  # decoder Linear 2
        (n_tokens // 2, n_tokens),       # decoder Linear 3
    ]
    params = []
    for (fan_in, fan_out) in dims:
        key, kw, kb = jax.random.split(key, 3)
        bound = 1.0 / (fan_in ** 0.5)  # matches nn.Linear uniform bound
        w = jax.random.uniform(kw, (fan_in, fan_out), jnp.float32, -bound, bound)
        b = jax.random.uniform(kb, (1, fan_out), jnp.float32, -bound, bound)
        params.append((w.astype(jnp.bfloat16), b))
    return params


def reference_forward(x, z, params):
    """XLA reference emulating the kernel's bf16-in / f32-accumulate math."""
    h = jnp.concatenate([x, z], axis=1)
    for i, (w, b) in enumerate(params):
        h = jnp.dot(h.astype(jnp.bfloat16), w,
                    preferred_element_type=jnp.float32) + b
        if i < len(params) - 1:
            h = jnp.where(h > 0, h, jnp.exp(h) - 1.0)
    return h


if __name__ == "__main__":
    # Small shapes consistent with the module (n_tokens scaled down from 1024).
    B = 256          # 2 batch tiles of 128 -> exercises the grid + resident weights
    n_tokens = 512

    key = jax.random.PRNGKey(0)
    kx, kz, kp = jax.random.split(key, 3)
    x = jax.random.normal(kx, (B, n_tokens), jnp.float32)
    z = jax.random.normal(kz, (B, n_tokens), jnp.float32)
    params = init_params(kp, n_tokens)

    out = generator_mlp_forward(x, z, params)
    out = jax.block_until_ready(out)

    ref = reference_forward(x, z, params)
    assert out.shape == (B, n_tokens)
    assert jnp.allclose(out, ref, atol=2e-3, rtol=2e-3), (
        float(jnp.max(jnp.abs(out - ref))))

    print("KERNEL_OK")
</pallas_src>

<mosaic_0001>
module attributes {stable_mosaic.version = 11 : i64} {
  func.func @_generator_mlp_kernel(%arg0: i32, %arg1: memref<128x512xf32, #tpu.memory_space<vmem>>, %arg2: memref<128x512xf32, #tpu.memory_space<vmem>>, %arg3: memref<1024x512xbf16, #tpu.memory_space<vmem>>, %arg4: memref<1x512xf32, #tpu.memory_space<vmem>>, %arg5: memref<512x256xbf16, #tpu.memory_space<vmem>>, %arg6: memref<1x256xf32, #tpu.memory_space<vmem>>, %arg7: memref<256x128xbf16, #tpu.memory_space<vmem>>, %arg8: memref<1x128xf32, #tpu.memory_space<vmem>>, %arg9: memref<128x256xbf16, #tpu.memory_space<vmem>>, %arg10: memref<1x256xf32, #tpu.memory_space<vmem>>, %arg11: memref<256x256xbf16, #tpu.memory_space<vmem>>, %arg12: memref<1x256xf32, #tpu.memory_space<vmem>>, %arg13: memref<256x512xbf16, #tpu.memory_space<vmem>>, %arg14: memref<1x512xf32, #tpu.memory_space<vmem>>, %arg15: memref<128x512xf32, #tpu.memory_space<vmem>>) attributes {dimension_semantics = [#tpu.dimension_semantics<parallel>], iteration_bounds = array<i64: 2>, scalar_prefetch = 0 : i64, scratch_operands = 0 : i64, tpu.core_type = #tpu.core_type<tc>, window_params = [{transform_indices = @transform_0, window_bounds = array<i64: 128, 512>}, {transform_indices = @transform_1, window_bounds = array<i64: 128, 512>}, {pipeline_mode = #tpu.pipeline_mode<synchronous>, transform_indices = @transform_2, window_bounds = array<i64: 1024, 512>}, {pipeline_mode = #tpu.pipeline_mode<synchronous>, transform_indices = @transform_3, window_bounds = array<i64: 1, 512>}, {pipeline_mode = #tpu.pipeline_mode<synchronous>, transform_indices = @transform_4, window_bounds = array<i64: 512, 256>}, {pipeline_mode = #tpu.pipeline_mode<synchronous>, transform_indices = @transform_5, window_bounds = array<i64: 1, 256>}, {pipeline_mode = #tpu.pipeline_mode<synchronous>, transform_indices = @transform_6, window_bounds = array<i64: 256, 128>}, {pipeline_mode = #tpu.pipeline_mode<synchronous>, transform_indices = @transform_7, window_bounds = array<i64: 1, 128>}, {pipeline_mode = #tpu.pipeline_mode<synchronous>, transform_indices = @transform_8, window_bounds = array<i64: 128, 256>}, {pipeline_mode = #tpu.pipeline_mode<synchronous>, transform_indices = @transform_9, window_bounds = array<i64: 1, 256>}, {pipeline_mode = #tpu.pipeline_mode<synchronous>, transform_indices = @transform_10, window_bounds = array<i64: 256, 256>}, {pipeline_mode = #tpu.pipeline_mode<synchronous>, transform_indices = @transform_11, window_bounds = array<i64: 1, 256>}, {pipeline_mode = #tpu.pipeline_mode<synchronous>, transform_indices = @transform_12, window_bounds = array<i64: 256, 512>}, {pipeline_mode = #tpu.pipeline_mode<synchronous>, transform_indices = @transform_13, window_bounds = array<i64: 1, 512>}, {transform_indices = @transform_14, window_bounds = array<i64: 128, 512>}]} {
    %c0 = arith.constant 0 : index
    %c0_0 = arith.constant 0 : index
    %0 = vector.load %arg1[%c0, %c0_0] : memref<128x512xf32, #tpu.memory_space<vmem>>, vector<128x512xf32>
    %1 = arith.truncf %0 : vector<128x512xf32> to vector<128x512xbf16>
    %c0_1 = arith.constant 0 : index
    %c0_2 = arith.constant 0 : index
    %2 = vector.load %arg2[%c0_1, %c0_2] : memref<128x512xf32, #tpu.memory_space<vmem>>, vector<128x512xf32>
    %3 = arith.truncf %2 : vector<128x512xf32> to vector<128x512xbf16>
    %c0_3 = arith.constant 0 : index
    %c0_4 = arith.constant 0 : index
    %4 = vector.load %arg3[%c0_3, %c0_4] : memref<1024x512xbf16, #tpu.memory_space<vmem>>, vector<512x512xbf16>
    %cst = arith.constant dense<0.000000e+00> : vector<128x512xf32>
    %5 = tpu.matmul %1, %4, %cst {dimension_numbers = #tpu.dot_dimension_numbers<[1], [0], [0], [1], [0, 0, 1, 1], [], []>} : vector<128x512xbf16>, vector<512x512xbf16>, vector<128x512xf32> -> vector<128x512xf32>
    %c512 = arith.constant 512 : index
    %c0_5 = arith.constant 0 : index
    %6 = vector.load %arg3[%c512, %c0_5] : memref<1024x512xbf16, #tpu.memory_space<vmem>>, vector<512x512xbf16>
    %cst_6 = arith.constant dense<0.000000e+00> : vector<128x512xf32>
    %7 = tpu.matmul %3, %6, %cst_6 {dimension_numbers = #tpu.dot_dimension_numbers<[1], [0], [0], [1], [0, 0, 1, 1], [], []>} : vector<128x512xbf16>, vector<512x512xbf16>, vector<128x512xf32> -> vector<128x512xf32>
    %8 = arith.addf %5, %7 : vector<128x512xf32>
    %c0_7 = arith.constant 0 : index
    %c0_8 = arith.constant 0 : index
    %9 = vector.load %arg4[%c0_7, %c0_8] : memref<1x512xf32, #tpu.memory_space<vmem>>, vector<1x512xf32>
    %10 = vector.broadcast %9 : vector<1x512xf32> to vector<128x512xf32>
    %11 = arith.addf %8, %10 : vector<128x512xf32>
    %cst_9 = arith.constant 0.000000e+00 : f32
    %12 = vector.broadcast %cst_9 : f32 to vector<128x512xf32>
    %13 = arith.cmpf ogt, %11, %12 : vector<128x512xf32>
    %14 = math.exp %11 : vector<128x512xf32>
    %cst_10 = arith.constant 1.000000e+00 : f32
    %15 = vector.broadcast %cst_10 : f32 to vector<128x512xf32>
    %16 = arith.subf %14, %15 : vector<128x512xf32>
    %17 = arith.select %13, %11, %16 : vector<128x512xi1>, vector<128x512xf32>
    %18 = arith.truncf %17 : vector<128x512xf32> to vector<128x512xbf16>
    %c0_11 = arith.constant 0 : index
    %c0_12 = arith.constant 0 : index
    %19 = vector.load %arg5[%c0_11, %c0_12] : memref<512x256xbf16, #tpu.memory_space<vmem>>, vector<512x256xbf16>
    %cst_13 = arith.constant dense<0.000000e+00> : vector<128x256xf32>
    %20 = tpu.matmul %18, %19, %cst_13 {dimension_numbers = #tpu.dot_dimension_numbers<[1], [0], [0], [1], [0, 0, 1, 1], [], []>} : vector<128x512xbf16>, vector<512x256xbf16>, vector<128x256xf32> -> vector<128x256xf32>
    %c0_14 = arith.constant 0 : index
    %c0_15 = arith.constant 0 : index
    %21 = vector.load %arg6[%c0_14, %c0_15] : memref<1x256xf32, #tpu.memory_space<vmem>>, vector<1x256xf32>
    %22 = vector.broadcast %21 : vector<1x256xf32> to vector<128x256xf32>
    %23 = arith.addf %20, %22 : vector<128x256xf32>
    %cst_16 = arith.constant 0.000000e+00 : f32
    %24 = vector.broadcast %cst_16 : f32 to vector<128x256xf32>
    %25 = arith.cmpf ogt, %23, %24 : vector<128x256xf32>
    %26 = math.exp %23 : vector<128x256xf32>
    %cst_17 = arith.constant 1.000000e+00 : f32
    %27 = vector.broadcast %cst_17 : f32 to vector<128x256xf32>
    %28 = arith.subf %26, %27 : vector<128x256xf32>
    %29 = arith.select %25, %23, %28 : vector<128x256xi1>, vector<128x256xf32>
    %30 = arith.truncf %29 : vector<128x256xf32> to vector<128x256xbf16>
    %c0_18 = arith.constant 0 : index
    %c0_19 = arith.constant 0 : index
    %31 = vector.load %arg7[%c0_18, %c0_19] : memref<256x128xbf16, #tpu.memory_space<vmem>>, vector<256x128xbf16>
    %cst_20 = arith.constant dense<0.000000e+00> : vector<128x128xf32>
    %32 = tpu.matmul %30, %31, %cst_20 {dimension_numbers = #tpu.dot_dimension_numbers<[1], [0], [0], [1], [0, 0, 1, 1], [], []>} : vector<128x256xbf16>, vector<256x128xbf16>, vector<128x128xf32> -> vector<128x128xf32>
    %c0_21 = arith.constant 0 : index
    %c0_22 = arith.constant 0 : index
    %33 = vector.load %arg8[%c0_21, %c0_22] : memref<1x128xf32, #tpu.memory_space<vmem>>, vector<1x128xf32>
    %34 = vector.broadcast %33 : vector<1x128xf32> to vector<128x128xf32>
    %35 = arith.addf %32, %34 : vector<128x128xf32>
    %cst_23 = arith.constant 0.000000e+00 : f32
    %36 = vector.broadcast %cst_23 : f32 to vector<128x128xf32>
    %37 = arith.cmpf ogt, %35, %36 : vector<128x128xf32>
    %38 = math.exp %35 : vector<128x128xf32>
    %cst_24 = arith.constant 1.000000e+00 : f32
    %39 = vector.broadcast %cst_24 : f32 to vector<128x128xf32>
    %40 = arith.subf %38, %39 : vector<128x128xf32>
    %41 = arith.select %37, %35, %40 : vector<128x128xi1>, vector<128x128xf32>
    %42 = arith.truncf %41 : vector<128x128xf32> to vector<128x128xbf16>
    %c0_25 = arith.constant 0 : index
    %c0_26 = arith.constant 0 : index
    %43 = vector.load %arg9[%c0_25, %c0_26] : memref<128x256xbf16, #tpu.memory_space<vmem>>, vector<128x256xbf16>
    %cst_27 = arith.constant dense<0.000000e+00> : vector<128x256xf32>
    %44 = tpu.matmul %42, %43, %cst_27 {dimension_numbers = #tpu.dot_dimension_numbers<[1], [0], [0], [1], [0, 0, 1, 1], [], []>} : vector<128x128xbf16>, vector<128x256xbf16>, vector<128x256xf32> -> vector<128x256xf32>
    %c0_28 = arith.constant 0 : index
    %c0_29 = arith.constant 0 : index
    %45 = vector.load %arg10[%c0_28, %c0_29] : memref<1x256xf32, #tpu.memory_space<vmem>>, vector<1x256xf32>
    %46 = vector.broadcast %45 : vector<1x256xf32> to vector<128x256xf32>
    %47 = arith.addf %44, %46 : vector<128x256xf32>
    %cst_30 = arith.constant 0.000000e+00 : f32
    %48 = vector.broadcast %cst_30 : f32 to vector<128x256xf32>
    %49 = arith.cmpf ogt, %47, %48 : vector<128x256xf32>
    %50 = math.exp %47 : vector<128x256xf32>
    %cst_31 = arith.constant 1.000000e+00 : f32
    %51 = vector.broadcast %cst_31 : f32 to vector<128x256xf32>
    %52 = arith.subf %50, %51 : vector<128x256xf32>
    %53 = arith.select %49, %47, %52 : vector<128x256xi1>, vector<128x256xf32>
    %54 = arith.truncf %53 : vector<128x256xf32> to vector<128x256xbf16>
    %c0_32 = arith.constant 0 : index
    %c0_33 = arith.constant 0 : index
    %55 = vector.load %arg11[%c0_32, %c0_33] : memref<256x256xbf16, #tpu.memory_space<vmem>>, vector<256x256xbf16>
    %cst_34 = arith.constant dense<0.000000e+00> : vector<128x256xf32>
    %56 = tpu.matmul %54, %55, %cst_34 {dimension_numbers = #tpu.dot_dimension_numbers<[1], [0], [0], [1], [0, 0, 1, 1], [], []>} : vector<128x256xbf16>, vector<256x256xbf16>, vector<128x256xf32> -> vector<128x256xf32>
    %c0_35 = arith.constant 0 : index
    %c0_36 = arith.constant 0 : index
    %57 = vector.load %arg12[%c0_35, %c0_36] : memref<1x256xf32, #tpu.memory_space<vmem>>, vector<1x256xf32>
    %58 = vector.broadcast %57 : vector<1x256xf32> to vector<128x256xf32>
    %59 = arith.addf %56, %58 : vector<128x256xf32>
    %cst_37 = arith.constant 0.000000e+00 : f32
    %60 = vector.broadcast %cst_37 : f32 to vector<128x256xf32>
    %61 = arith.cmpf ogt, %59, %60 : vector<128x256xf32>
    %62 = math.exp %59 : vector<128x256xf32>
    %cst_38 = arith.constant 1.000000e+00 : f32
    %63 = vector.broadcast %cst_38 : f32 to vector<128x256xf32>
    %64 = arith.subf %62, %63 : vector<128x256xf32>
    %65 = arith.select %61, %59, %64 : vector<128x256xi1>, vector<128x256xf32>
    %66 = arith.truncf %65 : vector<128x256xf32> to vector<128x256xbf16>
    %c0_39 = arith.constant 0 : index
    %c0_40 = arith.constant 0 : index
    %67 = vector.load %arg13[%c0_39, %c0_40] : memref<256x512xbf16, #tpu.memory_space<vmem>>, vector<256x512xbf16>
    %cst_41 = arith.constant dense<0.000000e+00> : vector<128x512xf32>
    %68 = tpu.matmul %66, %67, %cst_41 {dimension_numbers = #tpu.dot_dimension_numbers<[1], [0], [0], [1], [0, 0, 1, 1], [], []>} : vector<128x256xbf16>, vector<256x512xbf16>, vector<128x512xf32> -> vector<128x512xf32>
    %c0_42 = arith.constant 0 : index
    %c0_43 = arith.constant 0 : index
    %69 = vector.load %arg14[%c0_42, %c0_43] : memref<1x512xf32, #tpu.memory_space<vmem>>, vector<1x512xf32>
    %70 = vector.broadcast %69 : vector<1x512xf32> to vector<128x512xf32>
    %71 = arith.addf %68, %70 : vector<128x512xf32>
    %c0_44 = arith.constant 0 : index
    %c0_45 = arith.constant 0 : index
    %72 = vector.load %arg15[%c0_44, %c0_45] : memref<128x512xf32, #tpu.memory_space<vmem>>, vector<128x512xf32>
    tpu.vector_store %arg15[%c0_44, %c0_45], %71 {strides = array<i32>} : memref<128x512xf32, #tpu.memory_space<vmem>>, vector<128x512xf32>,
    return
  }
  func.func @transform_0(%arg0: i32) -> (i32, i32) {
    %c0_i32 = arith.constant 0 : i32
    %c0_i32_0 = arith.constant 0 : i32
    return %arg0, %c0_i32 : i32, i32
  }
  func.func @transform_1(%arg0: i32) -> (i32, i32) {
    %c0_i32 = arith.constant 0 : i32
    %c0_i32_0 = arith.constant 0 : i32
    return %arg0, %c0_i32 : i32, i32
  }
  func.func @transform_2(%arg0: i32) -> (i32, i32) {
    %c0_i32 = arith.constant 0 : i32
    %c0_i32_0 = arith.constant 0 : i32
    %c0_i32_1 = arith.constant 0 : i32
    return %c0_i32, %c0_i32_0 : i32, i32
  }
  func.func @transform_3(%arg0: i32) -> (i32, i32) {
    %c0_i32 = arith.constant 0 : i32
    %c0_i32_0 = arith.constant 0 : i32
    %c0_i32_1 = arith.constant 0 : i32
    return %c0_i32, %c0_i32_0 : i32, i32
  }
  func.func @transform_4(%arg0: i32) -> (i32, i32) {
    %c0_i32 = arith.constant 0 : i32
    %c0_i32_0 = arith.constant 0 : i32
    %c0_i32_1 = arith.constant 0 : i32
    return %c0_i32, %c0_i32_0 : i32, i32
  }
  func.func @transform_5(%arg0: i32) -> (i32, i32) {
    %c0_i32 = arith.constant 0 : i32
    %c0_i32_0 = arith.constant 0 : i32
    %c0_i32_1 = arith.constant 0 : i32
    return %c0_i32, %c0_i32_0 : i32, i32
  }
  func.func @transform_6(%arg0: i32) -> (i32, i32) {
    %c0_i32 = arith.constant 0 : i32
    %c0_i32_0 = arith.constant 0 : i32
    %c0_i32_1 = arith.constant 0 : i32
    return %c0_i32, %c0_i32_0 : i32, i32
  }
  func.func @transform_7(%arg0: i32) -> (i32, i32) {
    %c0_i32 = arith.constant 0 : i32
    %c0_i32_0 = arith.constant 0 : i32
    %c0_i32_1 = arith.constant 0 : i32
    return %c0_i32, %c0_i32_0 : i32, i32
  }
  func.func @transform_8(%arg0: i32) -> (i32, i32) {
    %c0_i32 = arith.constant 0 : i32
    %c0_i32_0 = arith.constant 0 : i32
    %c0_i32_1 = arith.constant 0 : i32
    return %c0_i32, %c0_i32_0 : i32, i32
  }
  func.func @transform_9(%arg0: i32) -> (i32, i32) {
    %c0_i32 = arith.constant 0 : i32
    %c0_i32_0 = arith.constant 0 : i32
    %c0_i32_1 = arith.constant 0 : i32
    return %c0_i32, %c0_i32_0 : i32, i32
  }
  func.func @transform_10(%arg0: i32) -> (i32, i32) {
    %c0_i32 = arith.constant 0 : i32
    %c0_i32_0 = arith.constant 0 : i32
    %c0_i32_1 = arith.constant 0 : i32
    return %c0_i32, %c0_i32_0 : i32, i32
  }
  func.func @transform_11(%arg0: i32) -> (i32, i32) {
    %c0_i32 = arith.constant 0 : i32
    %c0_i32_0 = arith.constant 0 : i32
    %c0_i32_1 = arith.constant 0 : i32
    return %c0_i32, %c0_i32_0 : i32, i32
  }
  func.func @transform_12(%arg0: i32) -> (i32, i32) {
    %c0_i32 = arith.constant 0 : i32
    %c0_i32_0 = arith.constant 0 : i32
    %c0_i32_1 = arith.constant 0 : i32
    return %c0_i32, %c0_i32_0 : i32, i32
  }
  func.func @transform_13(%arg0: i32) -> (i32, i32) {
    %c0_i32 = arith.constant 0 : i32
    %c0_i32_0 = arith.constant 0 : i32
    %c0_i32_1 = arith.constant 0 : i32
    return %c0_i32, %c0_i32_0 : i32, i32
  }
  func.func @transform_14(%arg0: i32) -> (i32, i32) {
    %c0_i32 = arith.constant 0 : i32
    %c0_i32_0 = arith.constant 0 : i32
    return %arg0, %c0_i32 : i32, i32
  }
}

</mosaic_0001>

<llo_original>
// kernel: generator_mlp_forward.1
$region0: #{generator_mlp_forward.1}
  #allocation0 [shape = 'u32[]', space=smem, size = 0x4, offset = 0x4, fixed_abs, tag = 'smem constant byte address 0x4 - core index']
  #allocation1 [shape = 'u32[144,128]{1,0:T(1,128)}', space=vmem, size = 0x12000, scoped, tag = 'internal scratch']
  %s0 = inlined_call_operand.hbm [shape: f32[256,512], index: 0, kind: input, shape index: {}]
  %s1 = inlined_call_operand.hbm [shape: f32[256,512], index: 1, kind: input, shape index: {}]
  %s2 = inlined_call_operand.hbm [shape: bf16[1024,512], index: 2, kind: input, shape index: {}]
  %s3 = inlined_call_operand.vmem [shape: f32[1,512], index: 3, kind: input, shape index: {}]
  %s4 = inlined_call_operand.hbm [shape: bf16[512,256], index: 4, kind: input, shape index: {}]
  %s5 = inlined_call_operand.vmem [shape: f32[1,256], index: 5, kind: input, shape index: {}]
  %s6 = inlined_call_operand.hbm [shape: bf16[256,128], index: 6, kind: input, shape index: {}]
  %s7 = inlined_call_operand.vmem [shape: f32[1,128], index: 7, kind: input, shape index: {}]
  %s8 = inlined_call_operand.hbm [shape: bf16[128,256], index: 8, kind: input, shape index: {}]
  %s9 = inlined_call_operand.vmem [shape: f32[1,256], index: 9, kind: input, shape index: {}]
  %s10 = inlined_call_operand.hbm [shape: bf16[256,256], index: 10, kind: input, shape index: {}]
  %s11 = inlined_call_operand.vmem [shape: f32[1,256], index: 11, kind: input, shape index: {}]
  %s12 = inlined_call_operand.hbm [shape: bf16[256,512], index: 12, kind: input, shape index: {}]
  %s13 = inlined_call_operand.vmem [shape: f32[1,512], index: 13, kind: input, shape index: {}]
  %s14 = inlined_call_operand.hbm [shape: f32[256,512], index: 14, kind: output, shape index: {}]
  %s15 = sld [smem:[#allocation0]]
  $region121: #{generator_mlp_forward.1} parent=0
    _
  %s17 = ssub.s32 1, %s15
  %s18 = scalar_select 0, %s17, %s15
  $region1: #{generator_mlp_forward.1} parent=0
    #allocation2 [shape = 'u8[524288]{0}', space=vmem, size = 0x80000, scoped, tag = 'input window, operand 0']
    #allocation3 [shape = 's32[2]{0}', space=sflag, size = 0x8, scoped, tag = 'scoped memory for generator_mlp_forward.1']
    #allocation4 [shape = 's32[2]{0}', space=sflag, size = 0x8, scoped, tag = 'scoped memory for generator_mlp_forward.1']
    #allocation5 [shape = 'u8[524288]{0}', space=vmem, size = 0x80000, scoped, tag = 'input window, operand 1']
    #allocation6 [shape = 's32[2]{0}', space=sflag, size = 0x8, scoped, tag = 'scoped memory for generator_mlp_forward.1']
    #allocation7 [shape = 'u8[1048576]{0}', space=vmem, size = 0x100000, scoped, tag = 'input window, operand 2, single buffered']
    #allocation8 [shape = 'u8[262144]{0}', space=vmem, size = 0x40000, scoped, tag = 'input window, operand 4, single buffered']
    #allocation9 [shape = 's32[1]{0}', space=sflag, size = 0x4, scoped, tag = 'scoped memory for generator_mlp_forward.1']
    #allocation10 [shape = 'u8[65536]{0}', space=vmem, size = 0x10000, scoped, tag = 'input window, operand 6, single buffered']
    #allocation11 [shape = 'u8[65536]{0}', space=vmem, size = 0x10000, scoped, tag = 'input window, operand 8, single buffered']
    #allocation12 [shape = 's32[1]{0}', space=sflag, size = 0x4, scoped, tag = 'scoped memory for generator_mlp_forward.1']
    #allocation13 [shape = 'u8[131072]{0}', space=vmem, size = 0x20000, scoped, tag = 'input window, operand 10, single buffered']
    #allocation14 [shape = 'u8[262144]{0}', space=vmem, size = 0x40000, scoped, tag = 'input window, operand 12, single buffered']
    #allocation15 [shape = 's32[1]{0}', space=sflag, size = 0x4, scoped, tag = 'scoped memory for generator_mlp_forward.1']
    #allocation16 [shape = 'u8[524288]{0}', space=vmem, size = 0x80000, scoped, tag = 'output window, operand 0']
    %19 = vsyncpa [#allocation3], 0
    %s20 = scalar_lea.sflag [#allocation3], 1
    %21 = vsyncpa %s20, 0
    %22 = vsyncpa [#allocation6], 0
    %s23 = scalar_lea.sflag [#allocation6], 1
    %24 = vsyncpa %s23, 0
    %25 = vsyncpa [#allocation9], 0
    %26 = vsyncpa [#allocation12], 0
    %27 = vsyncpa [#allocation15], 0
    %28 = vsyncpa [#allocation4], 0
    %s29 = scalar_lea.sflag [#allocation4], 1
    %30 = vsyncpa %s29, 0
    loop: start=0, step=1, limit=4
    $region2: #{generator_mlp_forward.1} parent=1 // loop_pre_header
      _
    $region3: #{generator_mlp_forward.1} parent=1 // loop_header
      %s32 = sphi 0, %s36
      %p33 = scmp.ge.s32.totalorder %s32, 4
      %s42 = sphi 0, %s44
      %s45 = sphi 0, %s42
      %s46 = sphi 0, %s45
      %s62 = sphi 0, %s46
      %s68 = sphi 0, %s70
      %s71 = sphi 0, %s68
      %s72 = sphi 0, %s71
      %s88 = sphi 0, %s72
      %s92 = sphi 0, %s92
      %s94 = sphi 0, %s92
      %s95 = sphi 0, %s94
      %s109 = sphi 0, %s95
      %s113 = sphi 0, %s113
      %s115 = sphi 0, %s113
      %s116 = sphi 0, %s115
      %s130 = sphi 0, %s116
      %s134 = sphi 0, %s134
      %s136 = sphi 0, %s134
      %s137 = sphi 0, %s136
      %s151 = sphi 0, %s137
      %s155 = sphi 0, %s155
      %s157 = sphi 0, %s155
      %s158 = sphi 0, %s157
      %s172 = sphi 0, %s158
      %s176 = sphi 0, %s176
      %s178 = sphi 0, %s176
      %s179 = sphi 0, %s178
      %s193 = sphi 0, %s179
      %s197 = sphi 0, %s197
      %s199 = sphi 0, %s197
      %s200 = sphi 0, %s199
      %s214 = sphi 0, %s200
      %s218 = sphi 0, %s218
      %s220 = sphi 0, %s218
      %s221 = sphi 0, %s220
      %s235 = sphi 0, %s221
      %s239 = sphi 0, %s239
      %s241 = sphi 0, %s239
      %s242 = sphi 0, %s241
      %s256 = sphi 0, %s242
      %s260 = sphi 0, %s260
      %s262 = sphi 0, %s260
      %s263 = sphi 0, %s262
      %s277 = sphi 0, %s263
      %s281 = sphi 0, %s281
      %s283 = sphi 0, %s281
      %s284 = sphi 0, %s283
      %s298 = sphi 0, %s284
      %s302 = sphi 0, %s302
      %s304 = sphi 0, %s302
      %s305 = sphi 0, %s304
      %s319 = sphi 0, %s305
      %s323 = sphi 0, %s323
      %s325 = sphi 0, %s323
      %s326 = sphi 0, %s325
      %s340 = sphi 0, %s326
      %s346 = sphi 0, %s348
      %s349 = sphi 0, %s346
      %s350 = sphi 0, %s349
      %s366 = sphi 0, %s350
    $region4: #{generator_mlp_forward.1} parent=1 // loop_header_branch
      %35 = sbr.rel (%p33) target = $region8
    $region5: #{generator_mlp_forward.1} parent=1 // loop_body
      %s37 = ssub.s32 %s32, 1
      %s38 = ssub.s32 %s32, 2
      %s39 = sadd.s32 %s32, 1
      %s40 = ssub.s32 %s32, %s39
      %p41 = scmp.eq.s32.totalorder %s40, 0
      %s43 = sadd.s32 %s42, 1
      %s44 = scalar_select %p41, %s42, %s43
      %p47 = pneg %p41
      %p48 = scmp.eq.s32.totalorder %s32, 1
      %p49 = por %p47, %p48
      %p50 = scmp.ne.s32.totalorder %s42, %s45
      %p51 = scmp.eq.s32.totalorder %s32, 0
      %p52 = por %p50, %p51
      %p53 = scmp.ne.s32.totalorder %s42, %s45
      %p54 = scmp.eq.s32.totalorder %s37, 1
      %p55 = por %p53, %p54
      %p56 = scmp.ne.s32.totalorder %s45, %s46
      %p57 = scmp.eq.s32.totalorder %s37, 0
      %p58 = por %p56, %p57
      %p59 = scmp.ne.s32.totalorder %s45, %s46
      %p60 = scmp.eq.s32.totalorder %s38, 1
      %p61 = por %p59, %p60
      %p63 = scmp.ne.s32.totalorder %s46, %s62
      %p64 = scmp.eq.s32.totalorder %s38, 0
      %p65 = por %p63, %p64
      %s66 = ssub.s32 %s32, %s39
      %p67 = scmp.eq.s32.totalorder %s66, 0
      %s69 = sadd.s32 %s68, 1
      %s70 = scalar_select %p67, %s68, %s69
      %p73 = pneg %p67
      %p74 = scmp.eq.s32.totalorder %s32, 1
      %p75 = por %p73, %p74
      %p76 = scmp.ne.s32.totalorder %s68, %s71
      %p77 = scmp.eq.s32.totalorder %s32, 0
      %p78 = por %p76, %p77
      %p79 = scmp.ne.s32.totalorder %s68, %s71
      %p80 = scmp.eq.s32.totalorder %s37, 1
      %p81 = por %p79, %p80
      %p82 = scmp.ne.s32.totalorder %s71, %s72
      %p83 = scmp.eq.s32.totalorder %s37, 0
      %p84 = por %p82, %p83
      %p85 = scmp.ne.s32.totalorder %s71, %s72
      %p86 = scmp.eq.s32.totalorder %s38, 1
      %p87 = por %p85, %p86
      %p89 = scmp.ne.s32.totalorder %s72, %s88
      %p90 = scmp.eq.s32.totalorder %s38, 0
      %p91 = por %p89, %p90
      %s93 = sadd.s32 %s92, 1
      %p96 = scmp.eq.s32.totalorder %s32, 1
      %p97 = scmp.ne.s32.totalorder %s92, %s94
      %p98 = scmp.eq.s32.totalorder %s32, 0
      %p99 = por %p97, %p98
      %p100 = scmp.ne.s32.totalorder %s92, %s94
      %p101 = scmp.eq.s32.totalorder %s37, 1
      %p102 = por %p100, %p101
      %p103 = scmp.ne.s32.totalorder %s94, %s95
      %p104 = scmp.eq.s32.totalorder %s37, 0
      %p105 = por %p103, %p104
      %p106 = scmp.ne.s32.totalorder %s94, %s95
      %p107 = scmp.eq.s32.totalorder %s38, 1
      %p108 = por %p106, %p107
      %p110 = scmp.ne.s32.totalorder %s95, %s109
      %p111 = scmp.eq.s32.totalorder %s38, 0
      %p112 = por %p110, %p111
      %s114 = sadd.s32 %s113, 1
      %p117 = scmp.eq.s32.totalorder %s32, 1
      %p118 = scmp.ne.s32.totalorder %s113, %s115
      %p119 = scmp.eq.s32.totalorder %s32, 0
      %p120 = por %p118, %p119
      %p121 = scmp.ne.s32.totalorder %s113, %s115
      %p122 = scmp.eq.s32.totalorder %s37, 1
      %p123 = por %p121, %p122
      %p124 = scmp.ne.s32.totalorder %s115, %s116
      %p125 = scmp.eq.s32.totalorder %s37, 0
      %p126 = por %p124, %p125
      %p127 = scmp.ne.s32.totalorder %s115, %s116
      %p128 = scmp.eq.s32.totalorder %s38, 1
      %p129 = por %p127, %p128
      %p131 = scmp.ne.s32.totalorder %s116, %s130
      %p132 = scmp.eq.s32.totalorder %s38, 0
      %p133 = por %p131, %p132
      %s135 = sadd.s32 %s134, 1
      %p138 = scmp.eq.s32.totalorder %s32, 1
      %p139 = scmp.ne.s32.totalorder %s134, %s136
      %p140 = scmp.eq.s32.totalorder %s32, 0
      %p141 = por %p139, %p140
      %p142 = scmp.ne.s32.totalorder %s134, %s136
      %p143 = scmp.eq.s32.totalorder %s37, 1
      %p144 = por %p142, %p143
      %p145 = scmp.ne.s32.totalorder %s136, %s137
      %p146 = scmp.eq.s32.totalorder %s37, 0
      %p147 = por %p145, %p146
      %p148 = scmp.ne.s32.totalorder %s136, %s137
      %p149 = scmp.eq.s32.totalorder %s38, 1
      %p150 = por %p148, %p149
      %p152 = scmp.ne.s32.totalorder %s137, %s151
      %p153 = scmp.eq.s32.totalorder %s38, 0
      %p154 = por %p152, %p153
      %s156 = sadd.s32 %s155, 1
      %p159 = scmp.eq.s32.totalorder %s32, 1
      %p160 = scmp.ne.s32.totalorder %s155, %s157
      %p161 = scmp.eq.s32.totalorder %s32, 0
      %p162 = por %p160, %p161
      %p163 = scmp.ne.s32.totalorder %s155, %s157
      %p164 = scmp.eq.s32.totalorder %s37, 1
      %p165 = por %p163, %p164
      %p166 = scmp.ne.s32.totalorder %s157, %s158
      %p167 = scmp.eq.s32.totalorder %s37, 0
      %p168 = por %p166, %p167
      %p169 = scmp.ne.s32.totalorder %s157, %s158
      %p170 = scmp.eq.s32.totalorder %s38, 1
      %p171 = por %p169, %p170
      %p173 = scmp.ne.s32.totalorder %s158, %s172
      %p174 = scmp.eq.s32.totalorder %s38, 0
      %p175 = por %p173, %p174
      %s177 = sadd.s32 %s176, 1
      %p180 = scmp.eq.s32.totalorder %s32, 1
      %p181 = scmp.ne.s32.totalorder %s176, %s178
      %p182 = scmp.eq.s32.totalorder %s32, 0
      %p183 = por %p181, %p182
      %p184 = scmp.ne.s32.totalorder %s176, %s178
      %p185 = scmp.eq.s32.totalorder %s37, 1
      %p186 = por %p184, %p185
      %p187 = scmp.ne.s32.totalorder %s178, %s179
      %p188 = scmp.eq.s32.totalorder %s37, 0
      %p189 = por %p187, %p188
      %p190 = scmp.ne.s32.totalorder %s178, %s179
      %p191 = scmp.eq.s32.totalorder %s38, 1
      %p192 = por %p190, %p191
      %p194 = scmp.ne.s32.totalorder %s179, %s193
      %p195 = scmp.eq.s32.totalorder %s38, 0
      %p196 = por %p194, %p195
      %s198 = sadd.s32 %s197, 1
      %p201 = scmp.eq.s32.totalorder %s32, 1
      %p202 = scmp.ne.s32.totalorder %s197, %s199
      %p203 = scmp.eq.s32.totalorder %s32, 0
      %p204 = por %p202, %p203
      %p205 = scmp.ne.s32.totalorder %s197, %s199
      %p206 = scmp.eq.s32.totalorder %s37, 1
      %p207 = por %p205, %p206
      %p208 = scmp.ne.s32.totalorder %s199, %s200
      %p209 = scmp.eq.s32.totalorder %s37, 0
      %p210 = por %p208, %p209
      %p211 = scmp.ne.s32.totalorder %s199, %s200
      %p212 = scmp.eq.s32.totalorder %s38, 1
      %p213 = por %p211, %p212
      %p215 = scmp.ne.s32.totalorder %s200, %s214
      %p216 = scmp.eq.s32.totalorder %s38, 0
      %p217 = por %p215, %p216
      %s219 = sadd.s32 %s218, 1
      %p222 = scmp.eq.s32.totalorder %s32, 1
      %p223 = scmp.ne.s32.totalorder %s218, %s220
      %p224 = scmp.eq.s32.totalorder %s32, 0
      %p225 = por %p223, %p224
      %p226 = scmp.ne.s32.totalorder %s218, %s220
      %p227 = scmp.eq.s32.totalorder %s37, 1
      %p228 = por %p226, %p227
      %p229 = scmp.ne.s32.totalorder %s220, %s221
      %p230 = scmp.eq.s32.totalorder %s37, 0
      %p231 = por %p229, %p230
      %p232 = scmp.ne.s32.totalorder %s220, %s221
      %p233 = scmp.eq.s32.totalorder %s38, 1
      %p234 = por %p232, %p233
      %p236 = scmp.ne.s32.totalorder %s221, %s235
      %p237 = scmp.eq.s32.totalorder %s38, 0
      %p238 = por %p236, %p237
      %s240 = sadd.s32 %s239, 1
      %p243 = scmp.eq.s32.totalorder %s32, 1
      %p244 = scmp.ne.s32.totalorder %s239, %s241
      %p245 = scmp.eq.s32.totalorder %s32, 0
      %p246 = por %p244, %p245
      %p247 = scmp.ne.s32.totalorder %s239, %s241
      %p248 = scmp.eq.s32.totalorder %s37, 1
      %p249 = por %p247, %p248
      %p250 = scmp.ne.s32.totalorder %s241, %s242
      %p251 = scmp.eq.s32.totalorder %s37, 0
      %p252 = por %p250, %p251
      %p253 = scmp.ne.s32.totalorder %s241, %s242
      %p254 = scmp.eq.s32.totalorder %s38, 1
      %p255 = por %p253, %p254
      %p257 = scmp.ne.s32.totalorder %s242, %s256
      %p258 = scmp.eq.s32.totalorder %s38, 0
      %p259 = por %p257, %p258
      %s261 = sadd.s32 %s260, 1
      %p264 = scmp.eq.s32.totalorder %s32, 1
      %p265 = scmp.ne.s32.totalorder %s260, %s262
      %p266 = scmp.eq.s32.totalorder %s32, 0
      %p267 = por %p265, %p266
      %p268 = scmp.ne.s32.totalorder %s260, %s262
      %p269 = scmp.eq.s32.totalorder %s37, 1
      %p270 = por %p268, %p269
      %p271 = scmp.ne.s32.totalorder %s262, %s263
      %p272 = scmp.eq.s32.totalorder %s37, 0
      %p273 = por %p271, %p272
      %p274 = scmp.ne.s32.totalorder %s262, %s263
      %p275 = scmp.eq.s32.totalorder %s38, 1
      %p276 = por %p274, %p275
      %p278 = scmp.ne.s32.totalorder %s263, %s277
      %p279 = scmp.eq.s32.totalorder %s38, 0
      %p280 = por %p278, %p279
      %s282 = sadd.s32 %s281, 1
      %p285 = scmp.eq.s32.totalorder %s32, 1
      %p286 = scmp.ne.s32.totalorder %s281, %s283
      %p287 = scmp.eq.s32.totalorder %s32, 0
      %p288 = por %p286, %p287
      %p289 = scmp.ne.s32.totalorder %s281, %s283
      %p290 = scmp.eq.s32.totalorder %s37, 1
      %p291 = por %p289, %p290
      %p292 = scmp.ne.s32.totalorder %s283, %s284
      %p293 = scmp.eq.s32.totalorder %s37, 0
      %p294 = por %p292, %p293
      %p295 = scmp.ne.s32.totalorder %s283, %s284
      %p296 = scmp.eq.s32.totalorder %s38, 1
      %p297 = por %p295, %p296
      %p299 = scmp.ne.s32.totalorder %s284, %s298
      %p300 = scmp.eq.s32.totalorder %s38, 0
      %p301 = por %p299, %p300
      %s303 = sadd.s32 %s302, 1
      %p306 = scmp.eq.s32.totalorder %s32, 1
      %p307 = scmp.ne.s32.totalorder %s302, %s304
      %p308 = scmp.eq.s32.totalorder %s32, 0
      %p309 = por %p307, %p308
      %p310 = scmp.ne.s32.totalorder %s302, %s304
      %p311 = scmp.eq.s32.totalorder %s37, 1
      %p312 = por %p310, %p311
      %p313 = scmp.ne.s32.totalorder %s304, %s305
      %p314 = scmp.eq.s32.totalorder %s37, 0
      %p315 = por %p313, %p314
      %p316 = scmp.ne.s32.totalorder %s304, %s305
      %p317 = scmp.eq.s32.totalorder %s38, 1
      %p318 = por %p316, %p317
      %p320 = scmp.ne.s32.totalorder %s305, %s319
      %p321 = scmp.eq.s32.totalorder %s38, 0
      %p322 = por %p320, %p321
      %s324 = sadd.s32 %s323, 1
      %p327 = scmp.eq.s32.totalorder %s32, 1
      %p328 = scmp.ne.s32.totalorder %s323, %s325
      %p329 = scmp.eq.s32.totalorder %s32, 0
      %p330 = por %p328, %p329
      %p331 = scmp.ne.s32.totalorder %s323, %s325
      %p332 = scmp.eq.s32.totalorder %s37, 1
      %p333 = por %p331, %p332
      %p334 = scmp.ne.s32.totalorder %s325, %s326
      %p335 = scmp.eq.s32.totalorder %s37, 0
      %p336 = por %p334, %p335
      %p337 = scmp.ne.s32.totalorder %s325, %s326
      %p338 = scmp.eq.s32.totalorder %s38, 1
      %p339 = por %p337, %p338
      %p341 = scmp.ne.s32.totalorder %s326, %s340
      %p342 = scmp.eq.s32.totalorder %s38, 0
      %p343 = por %p341, %p342
      %s344 = ssub.s32 %s32, %s39
      %p345 = scmp.eq.s32.totalorder %s344, 0
      %s347 = sadd.s32 %s346, 1
      %s348 = scalar_select %p345, %s346, %s347
      %p351 = pneg %p345
      %p352 = scmp.eq.s32.totalorder %s32, 1
      %p353 = por %p351, %p352
      %p354 = scmp.ne.s32.totalorder %s346, %s349
      %p355 = scmp.eq.s32.totalorder %s32, 0
      %p356 = por %p354, %p355
      %p357 = scmp.ne.s32.totalorder %s346, %s349
      %p358 = scmp.eq.s32.totalorder %s37, 1
      %p359 = por %p357, %p358
      %p360 = scmp.ne.s32.totalorder %s349, %s350
      %p361 = scmp.eq.s32.totalorder %s37, 0
      %p362 = por %p360, %p361
      %p363 = scmp.ne.s32.totalorder %s349, %s350
      %p364 = scmp.eq.s32.totalorder %s38, 1
      %p365 = por %p363, %p364
      %p367 = scmp.ne.s32.totalorder %s350, %s366
      %p368 = scmp.eq.s32.totalorder %s38, 0
      %p369 = por %p367, %p368
      %p370 = scmp.le.s32.totalorder 1, %s32
      %p371 = scmp.lt.s32.totalorder %s32, 3
      %p372 = pnand %p370, %p371
      %p373 = pneg %p372
      // Predicated region
      $region9: #{generator_mlp_forward.1} parent=5 // pred_check
        _
      $region10: #{generator_mlp_forward.1} parent=5 // pred_check_branch
        %375 = sbr.rel (%p372) target = $region12
      $region11: #{generator_mlp_forward.1} parent=5 // pred_region
        %s376 = ssub.s32 %s32, 1
        // Predicated region
        $region13: #{generator_mlp_forward.1} parent=11 // pred_check
          %p377 = pneg %p105
        $region14: #{generator_mlp_forward.1} parent=11 // pred_check_branch
          %379 = sbr.rel (%p377) target = $region16
        $region15: #{generator_mlp_forward.1} parent=11 // pred_region
          %s381 = ssub.s32 32768, 32768
          %382 = vsyncadd [#allocation6], %s381
          %s383 = sshll.u32 [#allocation7], 4
          %s384 = int_to_ptr.vmem [resolvable:$true] %s383
          %389 = dma.hbm_to_vmem [thread:$0]  %s2, 32768, %s384, [#allocation6], 256, 256, 16
        $region16: #{generator_mlp_forward.1} parent=11 // pred_fallthru
          _
        // Predicated region
        $region17: #{generator_mlp_forward.1} parent=11 // pred_check
          %p390 = pneg %p126
        $region18: #{generator_mlp_forward.1} parent=11 // pred_check_branch
          %392 = sbr.rel (%p390) target = $region20
        $region19: #{generator_mlp_forward.1} parent=11 // pred_region
          _
        $region20: #{generator_mlp_forward.1} parent=11 // pred_fallthru
          _
        // Predicated region
        $region21: #{generator_mlp_forward.1} parent=11 // pred_check
          %p393 = pneg %p147
        $region22: #{generator_mlp_forward.1} parent=11 // pred_check_branch
          %395 = sbr.rel (%p393) target = $region24
        $region23: #{generator_mlp_forward.1} parent=11 // pred_region
          %s397 = ssub.s32 8192, 8192
          %398 = vsyncadd [#allocation9], %s397
          %s399 = sshll.u32 [#allocation8], 4
          %s400 = int_to_ptr.vmem [resolvable:$true] %s399
          %405 = dma.hbm_to_vmem [thread:$0]  %s4, 8192, %s400, [#allocation9], 128, 128, 8
        $region24: #{generator_mlp_forward.1} parent=11 // pred_fallthru
          _
        // Predicated region
        $region25: #{generator_mlp_forward.1} parent=11 // pred_check
          %p406 = pneg %p168
        $region26: #{generator_mlp_forward.1} parent=11 // pred_check_branch
          %408 = sbr.rel (%p406) target = $region28
        $region27: #{generator_mlp_forward.1} parent=11 // pred_region
          _
        $region28: #{generator_mlp_forward.1} parent=11 // pred_fallthru
          _
        // Predicated region
        $region29: #{generator_mlp_forward.1} parent=11 // pred_check
          %p409 = pneg %p189
        $region30: #{generator_mlp_forward.1} parent=11 // pred_check_branch
          %411 = sbr.rel (%p409) target = $region32
        $region31: #{generator_mlp_forward.1} parent=11 // pred_region
          %s413 = ssub.s32 2048, 2048
          %414 = vsyncadd [#allocation9], %s413
          %s415 = sshll.u32 [#allocation10], 4
          %s416 = int_to_ptr.vmem [resolvable:$true] %s415
          %421 = dma.hbm_to_vmem [thread:$0]  %s6, 2048, %s416, [#allocation9], 64, 64, 4
        $region32: #{generator_mlp_forward.1} parent=11 // pred_fallthru
          _
        // Predicated region
        $region33: #{generator_mlp_forward.1} parent=11 // pred_check
          %p422 = pneg %p210
        $region34: #{generator_mlp_forward.1} parent=11 // pred_check_branch
          %424 = sbr.rel (%p422) target = $region36
        $region35: #{generator_mlp_forward.1} parent=11 // pred_region
          _
        $region36: #{generator_mlp_forward.1} parent=11 // pred_fallthru
          _
        // Predicated region
        $region37: #{generator_mlp_forward.1} parent=11 // pred_check
          %p425 = pneg %p231
        $region38: #{generator_mlp_forward.1} parent=11 // pred_check_branch
          %427 = sbr.rel (%p425) target = $region40
        $region39: #{generator_mlp_forward.1} parent=11 // pred_region
          %s429 = ssub.s32 2048, 2048
          %430 = vsyncadd [#allocation12], %s429
          %s431 = sshll.u32 [#allocation11], 4
          %s432 = int_to_ptr.vmem [resolvable:$true] %s431
          %437 = dma.hbm_to_vmem [thread:$0]  %s8, 2048, %s432, [#allocation12], 128, 128, 8
        $region40: #{generator_mlp_forward.1} parent=11 // pred_fallthru
          _
        // Predicated region
        $region41: #{generator_mlp_forward.1} parent=11 // pred_check
          %p438 = pneg %p252
        $region42: #{generator_mlp_forward.1} parent=11 // pred_check_branch
          %440 = sbr.rel (%p438) target = $region44
        $region43: #{generator_mlp_forward.1} parent=11 // pred_region
          _
        $region44: #{generator_mlp_forward.1} parent=11 // pred_fallthru
          _
        // Predicated region
        $region45: #{generator_mlp_forward.1} parent=11 // pred_check
          %p441 = pneg %p273
        $region46: #{generator_mlp_forward.1} parent=11 // pred_check_branch
          %443 = sbr.rel (%p441) target = $region48
        $region47: #{generator_mlp_forward.1} parent=11 // pred_region
          %s445 = ssub.s32 4096, 4096
          %446 = vsyncadd [#allocation12], %s445
          %s447 = sshll.u32 [#allocation13], 4
          %s448 = int_to_ptr.vmem [resolvable:$true] %s447
          %453 = dma.hbm_to_vmem [thread:$0]  %s10, 4096, %s448, [#allocation12], 128, 128, 8
        $region48: #{generator_mlp_forward.1} parent=11 // pred_fallthru
          _
        // Predicated region
        $region49: #{generator_mlp_forward.1} parent=11 // pred_check
          %p454 = pneg %p294
        $region50: #{generator_mlp_forward.1} parent=11 // pred_check_branch
          %456 = sbr.rel (%p454) target = $region52
        $region51: #{generator_mlp_forward.1} parent=11 // pred_region
          _
        $region52: #{generator_mlp_forward.1} parent=11 // pred_fallthru
          _
        // Predicated region
        $region53: #{generator_mlp_forward.1} parent=11 // pred_check
          %p457 = pneg %p315
        $region54: #{generator_mlp_forward.1} parent=11 // pred_check_branch
          %459 = sbr.rel (%p457) target = $region56
        $region55: #{generator_mlp_forward.1} parent=11 // pred_region
          %s461 = ssub.s32 8192, 8192
          %462 = vsyncadd [#allocation15], %s461
          %s463 = sshll.u32 [#allocation14], 4
          %s464 = int_to_ptr.vmem [resolvable:$true] %s463
          %469 = dma.hbm_to_vmem [thread:$0]  %s12, 8192, %s464, [#allocation15], 256, 256, 16
        $region56: #{generator_mlp_forward.1} parent=11 // pred_fallthru
          _
        // Predicated region
        $region57: #{generator_mlp_forward.1} parent=11 // pred_check
          %p470 = pneg %p336
        $region58: #{generator_mlp_forward.1} parent=11 // pred_check_branch
          %472 = sbr.rel (%p470) target = $region60
        $region59: #{generator_mlp_forward.1} parent=11 // pred_region
          _
        $region60: #{generator_mlp_forward.1} parent=11 // pred_fallthru
          _
      $region12: #{generator_mlp_forward.1} parent=5 // pred_fallthru
        _
      %p473 = scmp.lt.s32.totalorder %s32, 2
      // Predicated region
      $region61: #{generator_mlp_forward.1} parent=5 // pred_check
        %p474 = pneg %p473
      $region62: #{generator_mlp_forward.1} parent=5 // pred_check_branch
        %476 = sbr.rel (%p474) target = $region64
      $region63: #{generator_mlp_forward.1} parent=5 // pred_region
        // Predicated region
        $region65: #{generator_mlp_forward.1} parent=63 // pred_check
          %p477 = pneg %p52
        $region66: #{generator_mlp_forward.1} parent=63 // pred_check_branch
          %479 = sbr.rel (%p477) target = $region68
        $region67: #{generator_mlp_forward.1} parent=63 // pred_region
          %s480 = sand.u32 %s42, 1
          %s481 = scalar_lea.sflag [#allocation3], %s480
          %s482 = sand.u32 %s42, 1
          %s483 = smul.addr %s482, 512
          %s484 = scalar_lea.vmem [#allocation2], %s483
          %s485 = smul.u32 16, %s32
          %s487 = ssub.s32 8192, 8192
          %488 = vsyncadd %s481, %s487
          %s489 = smul.addr %s485, 4
          %s490 = smul.addr %s489, 128
          %s491 = scalar_lea.hbm %s0, %s490
          %s492 = sshll.u32 %s484, 4
          %s493 = int_to_ptr.vmem [resolvable:$true] %s492
          %498 = dma.hbm_to_vmem [thread:$0]  %s491, 8192, %s493, %s481, 512, 512, 32
        $region68: #{generator_mlp_forward.1} parent=63 // pred_fallthru
          _
        // Predicated region
        $region69: #{generator_mlp_forward.1} parent=63 // pred_check
          %p499 = pneg %p78
        $region70: #{generator_mlp_forward.1} parent=63 // pred_check_branch
          %501 = sbr.rel (%p499) target = $region72
        $region71: #{generator_mlp_forward.1} parent=63 // pred_region
          %s502 = sand.u32 %s32, 1
          %s503 = scalar_lea.sflag [#allocation6], %s502
          %s504 = sand.u32 %s68, 1
          %s505 = smul.addr %s504, 512
          %s506 = scalar_lea.vmem [#allocation5], %s505
          %s507 = smul.u32 16, %s32
          %s509 = ssub.s32 8192, 8192
          %510 = vsyncadd %s503, %s509
          %s511 = smul.addr %s507, 4
          %s512 = smul.addr %s511, 128
          %s513 = scalar_lea.hbm %s1, %s512
          %s514 = sshll.u32 %s506, 4
          %s515 = int_to_ptr.vmem [resolvable:$true] %s514
          %520 = dma.hbm_to_vmem [thread:$0]  %s513, 8192, %s515, %s503, 512, 512, 32
        $region72: #{generator_mlp_forward.1} parent=63 // pred_fallthru
          _
      $region64: #{generator_mlp_forward.1} parent=5 // pred_fallthru
        _
      %p521 = scmp.le.s32.totalorder 1, %s32
      %p522 = scmp.lt.s32.totalorder %s32, 3
      %p523 = pnand %p521, %p522
      %p524 = pneg %p523
      // Predicated region
      $region73: #{generator_mlp_forward.1} parent=5 // pred_check
        _
      $region74: #{generator_mlp_forward.1} parent=5 // pred_check_branch
        %526 = sbr.rel (%p523) target = $region76
      $region75: #{generator_mlp_forward.1} parent=5 // pred_region
        %s527 = ssub.s32 %s32, 1
        %s528 = sand.u32 %s45, 1
        %s529 = scalar_lea.sflag [#allocation3], %s528
        %s530 = sand.u32 %s45, 1
        %s531 = smul.addr %s530, 512
        %s532 = scalar_lea.vmem [#allocation2], %s531
        // Predicated region
        $region77: #{generator_mlp_forward.1} parent=75 // pred_check
          %p533 = pneg %p58
        $region78: #{generator_mlp_forward.1} parent=75 // pred_check_branch
          %535 = sbr.rel (%p533) target = $region80
        $region79: #{generator_mlp_forward.1} parent=75 // pred_region
          %536 = dma.done %s529, 8192
        $region80: #{generator_mlp_forward.1} parent=75 // pred_fallthru
          _
        %s537 = sand.u32 %s37, 1
        %s538 = scalar_lea.sflag [#allocation6], %s537
        %s539 = sand.u32 %s71, 1
        %s540 = smul.addr %s539, 512
        %s541 = scalar_lea.vmem [#allocation5], %s540
        // Predicated region
        $region81: #{generator_mlp_forward.1} parent=75 // pred_check
          %p542 = pneg %p84
        $region82: #{generator_mlp_forward.1} parent=75 // pred_check_branch
          %544 = sbr.rel (%p542) target = $region84
        $region83: #{generator_mlp_forward.1} parent=75 // pred_region
          %545 = dma.done %s538, 8192
        $region84: #{generator_mlp_forward.1} parent=75 // pred_fallthru
          _
        // Predicated region
        $region85: #{generator_mlp_forward.1} parent=75 // pred_check
          %p546 = pneg %p105
        $region86: #{generator_mlp_forward.1} parent=75 // pred_check_branch
          %548 = sbr.rel (%p546) target = $region88
        $region87: #{generator_mlp_forward.1} parent=75 // pred_region
          %549 = dma.done [#allocation6], 32768
        $region88: #{generator_mlp_forward.1} parent=75 // pred_fallthru
          _
        // Predicated region
        $region89: #{generator_mlp_forward.1} parent=75 // pred_check
          %p550 = pneg %p147
        $region90: #{generator_mlp_forward.1} parent=75 // pred_check_branch
          %552 = sbr.rel (%p550) target = $region92
        $region91: #{generator_mlp_forward.1} parent=75 // pred_region
          %553 = dma.done [#allocation9], 8192
        $region92: #{generator_mlp_forward.1} parent=75 // pred_fallthru
          _
        // Predicated region
        $region93: #{generator_mlp_forward.1} parent=75 // pred_check
          %p554 = pneg %p189
        $region94: #{generator_mlp_forward.1} parent=75 // pred_check_branch
          %556 = sbr.rel (%p554) target = $region96
        $region95: #{generator_mlp_forward.1} parent=75 // pred_region
          %557 = dma.done [#allocation9], 2048
        $region96: #{generator_mlp_forward.1} parent=75 // pred_fallthru
          _
        // Predicated region
        $region97: #{generator_mlp_forward.1} parent=75 // pred_check
          %p558 = pneg %p231
        $region98: #{generator_mlp_forward.1} parent=75 // pred_check_branch
          %560 = sbr.rel (%p558) target = $region100
        $region99: #{generator_mlp_forward.1} parent=75 // pred_region
          %561 = dma.done [#allocation12], 2048
        $region100: #{generator_mlp_forward.1} parent=75 // pred_fallthru
          _
        // Predicated region
        $region101: #{generator_mlp_forward.1} parent=75 // pred_check
          %p562 = pneg %p273
        $region102: #{generator_mlp_forward.1} parent=75 // pred_check_branch
          %564 = sbr.rel (%p562) target = $region104
        $region103: #{generator_mlp_forward.1} parent=75 // pred_region
          %565 = dma.done [#allocation12], 4096
        $region104: #{generator_mlp_forward.1} parent=75 // pred_fallthru
          _
        // Predicated region
        $region105: #{generator_mlp_forward.1} parent=75 // pred_check
          %p566 = pneg %p315
        $region106: #{generator_mlp_forward.1} parent=75 // pred_check_branch
          %568 = sbr.rel (%p566) target = $region108
        $region107: #{generator_mlp_forward.1} parent=75 // pred_region
          %569 = dma.done [#allocation15], 8192
        $region108: #{generator_mlp_forward.1} parent=75 // pred_fallthru
          _
        %s570 = sand.u32 %s45, 1
        %s571 = scalar_lea.sflag [#allocation3], %s570
        %s572 = sand.u32 %s45, 1
        %s573 = smul.addr %s572, 512
        %s574 = scalar_lea.vmem [#allocation2], %s573
        %p575 = pneg %p58
        %p576 = pneg %p55
        %s577 = sand.u32 %s37, 1
        %s578 = scalar_lea.sflag [#allocation6], %s577
        %s579 = sand.u32 %s71, 1
        %s580 = smul.addr %s579, 512
        %s581 = scalar_lea.vmem [#allocation5], %s580
        %p582 = pneg %p84
        %p583 = pneg %p81
        %p584 = pneg %p105
        %p585 = pneg %p102
        %p586 = pneg %p126
        %p587 = pneg %p123
        %p588 = pneg %p147
        %p589 = pneg %p144
        %p590 = pneg %p168
        %p591 = pneg %p165
        %p592 = pneg %p189
        %p593 = pneg %p186
        %p594 = pneg %p210
        %p595 = pneg %p207
        %p596 = pneg %p231
        %p597 = pneg %p228
        %p598 = pneg %p252
        %p599 = pneg %p249
        %p600 = pneg %p273
        %p601 = pneg %p270
        %p602 = pneg %p294
        %p603 = pneg %p291
        %p604 = pneg %p315
        %p605 = pneg %p312
        %p606 = pneg %p336
        %p607 = pneg %p333
        %p608 = pneg %p362
        %p609 = pneg %p359
        %s610 = sand.u32 %s349, 1
        %s611 = scalar_lea.sflag [#allocation4], %s610
        %s612 = sand.u32 %s349, 1
        %s613 = smul.addr %s612, 512
        %s614 = scalar_lea.vmem [#allocation16], %s613
        %s615 = smul.u32 16, %s37
        %s616 = smul.u32 16, %s37
        %s617 = smul.u32 16, %s37
        %v619 = vld [vmem:[%s532] sm:$0xff]
        %v620 = vld [vmem:[%s532 + $0x8] sm:$0xff]
        %v621 = vld [vmem:[%s532 + $0x10] sm:$0xff]
        %v622 = vld [vmem:[%s532 + $0x18] sm:$0xff]
        %v623 = vld [vmem:[%s532 + $0x20] sm:$0xff]
        %v624 = vld [vmem:[%s532 + $0x28] sm:$0xff]
        %v625 = vld [vmem:[%s532 + $0x30] sm:$0xff]
        %v626 = vld [vmem:[%s532 + $0x38] sm:$0xff]
        %v627 = vld [vmem:[%s532 + $0x40] sm:$0xff]
        %v628 = vld [vmem:[%s532 + $0x48] sm:$0xff]
        %v629 = vld [vmem:[%s532 + $0x50] sm:$0xff]
        %v630 = vld [vmem:[%s532 + $0x58] sm:$0xff]
        %v631 = vld [vmem:[%s532 + $0x60] sm:$0xff]
        %v632 = vld [vmem:[%s532 + $0x68] sm:$0xff]
        %v633 = vld [vmem:[%s532 + $0x70] sm:$0xff]
        %v634 = vld [vmem:[%s532 + $0x78] sm:$0xff]
        %v635 = vld [vmem:[%s532 + $0x80] sm:$0xff]
        %v636 = vld [vmem:[%s532 + $0x88] sm:$0xff]
        %v637 = vld [vmem:[%s532 + $0x90] sm:$0xff]
        %v638 = vld [vmem:[%s532 + $0x98] sm:$0xff]
        %v639 = vld [vmem:[%s532 + $0xa0] sm:$0xff]
        %v640 = vld [vmem:[%s532 + $0xa8] sm:$0xff]
        %v641 = vld [vmem:[%s532 + $0xb0] sm:$0xff]
        %v642 = vld [vmem:[%s532 + $0xb8] sm:$0xff]
        %v643 = vld [vmem:[%s532 + $0xc0] sm:$0xff]
        %v644 = vld [vmem:[%s532 + $0xc8] sm:$0xff]
        %v645 = vld [vmem:[%s532 + $0xd0] sm:$0xff]
        %v646 = vld [vmem:[%s532 + $0xd8] sm:$0xff]
        %v647 = vld [vmem:[%s532 + $0xe0] sm:$0xff]
        %v648 = vld [vmem:[%s532 + $0xe8] sm:$0xff]
        %v649 = vld [vmem:[%s532 + $0xf0] sm:$0xff]
        %v650 = vld [vmem:[%s532 + $0xf8] sm:$0xff]
        %v651 = vld [vmem:[%s532 + $0x100] sm:$0xff]
        %v652 = vld [vmem:[%s532 + $0x108] sm:$0xff]
        %v653 = vld [vmem:[%s532 + $0x110] sm:$0xff]
        %v654 = vld [vmem:[%s532 + $0x118] sm:$0xff]
        %v655 = vld [vmem:[%s532 + $0x120] sm:$0xff]
        %v656 = vld [vmem:[%s532 + $0x128] sm:$0xff]
        %v657 = vld [vmem:[%s532 + $0x130] sm:$0xff]
        %v658 = vld [vmem:[%s532 + $0x138] sm:$0xff]
        %v659 = vld [vmem:[%s532 + $0x140] sm:$0xff]
        %v660 = vld [vmem:[%s532 + $0x148] sm:$0xff]
        %v661 = vld [vmem:[%s532 + $0x150] sm:$0xff]
        %v662 = vld [vmem:[%s532 + $0x158] sm:$0xff]
        %v663 = vld [vmem:[%s532 + $0x160] sm:$0xff]
        %v664 = vld [vmem:[%s532 + $0x168] sm:$0xff]
        %v665 = vld [vmem:[%s532 + $0x170] sm:$0xff]
        %v666 = vld [vmem:[%s532 + $0x178] sm:$0xff]
        %v667 = vld [vmem:[%s532 + $0x180] sm:$0xff]
        %v668 = vld [vmem:[%s532 + $0x188] sm:$0xff]
        %v669 = vld [vmem:[%s532 + $0x190] sm:$0xff]
        %v670 = vld [vmem:[%s532 + $0x198] sm:$0xff]
        %v671 = vld [vmem:[%s532 + $0x1a0] sm:$0xff]
        %v672 = vld [vmem:[%s532 + $0x1a8] sm:$0xff]
        %v673 = vld [vmem:[%s532 + $0x1b0] sm:$0xff]
        %v674 = vld [vmem:[%s532 + $0x1b8] sm:$0xff]
        %v675 = vld [vmem:[%s532 + $0x1c0] sm:$0xff]
        %v676 = vld [vmem:[%s532 + $0x1c8] sm:$0xff]
        %v677 = vld [vmem:[%s532 + $0x1d0] sm:$0xff]
        %v678 = vld [vmem:[%s532 + $0x1d8] sm:$0xff]
        %v679 = vld [vmem:[%s532 + $0x1e0] sm:$0xff]
        %v680 = vld [vmem:[%s532 + $0x1e8] sm:$0xff]
        %v681 = vld [vmem:[%s532 + $0x1f0] sm:$0xff]
        %v682 = vld [vmem:[%s532 + $0x1f8] sm:$0xff]
        %v683 = vpack.c.bf16 %v623, %v619
        %v684 = vpack.c.bf16 %v624, %v620
        %v685 = vpack.c.bf16 %v625, %v621
        %v686 = vpack.c.bf16 %v626, %v622
        %v687 = vpack.c.bf16 %v631, %v627
        %v688 = vpack.c.bf16 %v632, %v628
        %v689 = vpack.c.bf16 %v633, %v629
        %v690 = vpack.c.bf16 %v634, %v630
        %v691 = vpack.c.bf16 %v639, %v635
        %v692 = vpack.c.bf16 %v640, %v636
        %v693 = vpack.c.bf16 %v641, %v637
        %v694 = vpack.c.bf16 %v642, %v638
        %v695 = vpack.c.bf16 %v647, %v643
        %v696 = vpack.c.bf16 %v648, %v644
        %v697 = vpack.c.bf16 %v649, %v645
        %v698 = vpack.c.bf16 %v650, %v646
        %v699 = vpack.c.bf16 %v655, %v651
        %v700 = vpack.c.bf16 %v656, %v652
        %v701 = vpack.c.bf16 %v657, %v653
        %v702 = vpack.c.bf16 %v658, %v654
        %v703 = vpack.c.bf16 %v663, %v659
        %v704 = vpack.c.bf16 %v664, %v660
        %v705 = vpack.c.bf16 %v665, %v661
        %v706 = vpack.c.bf16 %v666, %v662
        %v707 = vpack.c.bf16 %v671, %v667
        %v708 = vpack.c.bf16 %v672, %v668
        %v709 = vpack.c.bf16 %v673, %v669
        %v710 = vpack.c.bf16 %v674, %v670
        %v711 = vpack.c.bf16 %v679, %v675
        %v712 = vpack.c.bf16 %v680, %v676
        %v713 = vpack.c.bf16 %v681, %v677
        %v714 = vpack.c.bf16 %v682, %v678
        %v715 = vld [vmem:[%s541] sm:$0xff]
        %v716 = vld [vmem:[%s541 + $0x8] sm:$0xff]
        %v717 = vld [vmem:[%s541 + $0x10] sm:$0xff]
        %v718 = vld [vmem:[%s541 + $0x18] sm:$0xff]
        %v719 = vld [vmem:[%s541 + $0x20] sm:$0xff]
        %v720 = vld [vmem:[%s541 + $0x28] sm:$0xff]
        %v721 = vld [vmem:[%s541 + $0x30] sm:$0xff]
        %v722 = vld [vmem:[%s541 + $0x38] sm:$0xff]
        %v723 = vld [vmem:[%s541 + $0x40] sm:$0xff]
        %v724 = vld [vmem:[%s541 + $0x48] sm:$0xff]
        %v725 = vld [vmem:[%s541 + $0x50] sm:$0xff]
        %v726 = vld [vmem:[%s541 + $0x58] sm:$0xff]
        %v727 = vld [vmem:[%s541 + $0x60] sm:$0xff]
        %v728 = vld [vmem:[%s541 + $0x68] sm:$0xff]
        %v729 = vld [vmem:[%s541 + $0x70] sm:$0xff]
        %v730 = vld [vmem:[%s541 + $0x78] sm:$0xff]
        %v731 = vld [vmem:[%s541 + $0x80] sm:$0xff]
        %v732 = vld [vmem:[%s541 + $0x88] sm:$0xff]
        %v733 = vld [vmem:[%s541 + $0x90] sm:$0xff]
        %v734 = vld [vmem:[%s541 + $0x98] sm:$0xff]
        %v735 = vld [vmem:[%s541 + $0xa0] sm:$0xff]
        %v736 = vld [vmem:[%s541 + $0xa8] sm:$0xff]
        %v737 = vld [vmem:[%s541 + $0xb0] sm:$0xff]
        %v738 = vld [vmem:[%s541 + $0xb8] sm:$0xff]
        %v739 = vld [vmem:[%s541 + $0xc0] sm:$0xff]
        %v740 = vld [vmem:[%s541 + $0xc8] sm:$0xff]
        %v741 = vld [vmem:[%s541 + $0xd0] sm:$0xff]
        %v742 = vld [vmem:[%s541 + $0xd8] sm:$0xff]
        %v743 = vld [vmem:[%s541 + $0xe0] sm:$0xff]
        %v744 = vld [vmem:[%s541 + $0xe8] sm:$0xff]
        %v745 = vld [vmem:[%s541 + $0xf0] sm:$0xff]
        %v746 = vld [vmem:[%s541 + $0xf8] sm:$0xff]
        %v747 = vld [vmem:[%s541 + $0x100] sm:$0xff]
        %v748 = vld [vmem:[%s541 + $0x108] sm:$0xff]
        %v749 = vld [vmem:[%s541 + $0x110] sm:$0xff]
        %v750 = vld [vmem:[%s541 + $0x118] sm:$0xff]
        %v751 = vld [vmem:[%s541 + $0x120] sm:$0xff]
        %v752 = vld [vmem:[%s541 + $0x128] sm:$0xff]
        %v753 = vld [vmem:[%s541 + $0x130] sm:$0xff]
        %v754 = vld [vmem:[%s541 + $0x138] sm:$0xff]
        %v755 = vld [vmem:[%s541 + $0x140] sm:$0xff]
        %v756 = vld [vmem:[%s541 + $0x148] sm:$0xff]
        %v757 = vld [vmem:[%s541 + $0x150] sm:$0xff]
        %v758 = vld [vmem:[%s541 + $0x158] sm:$0xff]
        %v759 = vld [vmem:[%s541 + $0x160] sm:$0xff]
        %v760 = vld [vmem:[%s541 + $0x168] sm:$0xff]
        %v761 = vld [vmem:[%s541 + $0x170] sm:$0xff]
        %v762 = vld [vmem:[%s541 + $0x178] sm:$0xff]
        %v763 = vld [vmem:[%s541 + $0x180] sm:$0xff]
        %v764 = vld [vmem:[%s541 + $0x188] sm:$0xff]
        %v765 = vld [vmem:[%s541 + $0x190] sm:$0xff]
        %v766 = vld [vmem:[%s541 + $0x198] sm:$0xff]
        %v767 = vld [vmem:[%s541 + $0x1a0] sm:$0xff]
        %v768 = vld [vmem:[%s541 + $0x1a8] sm:$0xff]
        %v769 = vld [vmem:[%s541 + $0x1b0] sm:$0xff]
        %v770 = vld [vmem:[%s541 + $0x1b8] sm:$0xff]
        %v771 = vld [vmem:[%s541 + $0x1c0] sm:$0xff]
        %v772 = vld [vmem:[%s541 + $0x1c8] sm:$0xff]
        %v773 = vld [vmem:[%s541 + $0x1d0] sm:$0xff]
        %v774 = vld [vmem:[%s541 + $0x1d8] sm:$0xff]
        %v775 = vld [vmem:[%s541 + $0x1e0] sm:$0xff]
        %v776 = vld [vmem:[%s541 + $0x1e8] sm:$0xff]
        %v777 = vld [vmem:[%s541 + $0x1f0] sm:$0xff]
        %v778 = vld [vmem:[%s541 + $0x1f8] sm:$0xff]
        %v779 = vpack.c.bf16 %v719, %v715
        %v780 = vpack.c.bf16 %v720, %v716
        %v781 = vpack.c.bf16 %v721, %v717
        %v782 = vpack.c.bf16 %v722, %v718
        %v783 = vpack.c.bf16 %v727, %v723
        %v784 = vpack.c.bf16 %v728, %v724
        %v785 = vpack.c.bf16 %v729, %v725
        %v786 = vpack.c.bf16 %v730, %v726
        %v787 = vpack.c.bf16 %v735, %v731
        %v788 = vpack.c.bf16 %v736, %v732
        %v789 = vpack.c.bf16 %v737, %v733
        %v790 = vpack.c.bf16 %v738, %v734
        %v791 = vpack.c.bf16 %v743, %v739
        %v792 = vpack.c.bf16 %v744, %v740
        %v793 = vpack.c.bf16 %v745, %v741
        %v794 = vpack.c.bf16 %v746, %v742
        %v795 = vpack.c.bf16 %v751, %v747
        %v796 = vpack.c.bf16 %v752, %v748
        %v797 = vpack.c.bf16 %v753, %v749
        %v798 = vpack.c.bf16 %v754, %v750
        %v799 = vpack.c.bf16 %v759, %v755
        %v800 = vpack.c.bf16 %v760, %v756
        %v801 = vpack.c.bf16 %v761, %v757
        %v802 = vpack.c.bf16 %v762, %v758
        %v803 = vpack.c.bf16 %v767, %v763
        %v804 = vpack.c.bf16 %v768, %v764
        %v805 = vpack.c.bf16 %v769, %v765
        %v806 = vpack.c.bf16 %v770, %v766
        %v807 = vpack.c.bf16 %v775, %v771
        %v808 = vpack.c.bf16 %v776, %v772
        %v809 = vpack.c.bf16 %v777, %v773
        %v810 = vpack.c.bf16 %v778, %v774
        %v811 = vld [vmem:[#allocation7] sm:$0xff]
        %v812 = vld [vmem:[#allocation7 + $0x8] sm:$0xff]
        %v813 = vld [vmem:[#allocation7 + $0x10] sm:$0xff]
        %v814 = vld [vmem:[#allocation7 + $0x18] sm:$0xff]
        %v815 = vld [vmem:[#allocation7 + $0x20] sm:$0xff]
        %v816 = vld [vmem:[#allocation7 + $0x28] sm:$0xff]
        %v817 = vld [vmem:[#allocation7 + $0x30] sm:$0xff]
        %v818 = vld [vmem:[#allocation7 + $0x38] sm:$0xff]
        %v819 = vld [vmem:[#allocation7 + $0x40] sm:$0xff]
        %v820 = vld [vmem:[#allocation7 + $0x48] sm:$0xff]
        %v821 = vld [vmem:[#allocation7 + $0x50] sm:$0xff]
        %v822 = vld [vmem:[#allocation7 + $0x58] sm:$0xff]
        %v823 = vld [vmem:[#allocation7 + $0x60] sm:$0xff]
        %v824 = vld [vmem:[#allocation7 + $0x68] sm:$0xff]
        %v825 = vld [vmem:[#allocation7 + $0x70] sm:$0xff]
        %v826 = vld [vmem:[#allocation7 + $0x78] sm:$0xff]
        %v827 = vld [vmem:[#allocation7 + $0x80] sm:$0xff]
        %v828 = vld [vmem:[#allocation7 + $0x88] sm:$0xff]
        %v829 = vld [vmem:[#allocation7 + $0x90] sm:$0xff]
        %v830 = vld [vmem:[#allocation7 + $0x98] sm:$0xff]
        %v831 = vld [vmem:[#allocation7 + $0xa0] sm:$0xff]
        %v832 = vld [vmem:[#allocation7 + $0xa8] sm:$0xff]
        %v833 = vld [vmem:[#allocation7 + $0xb0] sm:$0xff]
        %v834 = vld [vmem:[#allocation7 + $0xb8] sm:$0xff]
        %v835 = vld [vmem:[#allocation7 + $0xc0] sm:$0xff]
        %v836 = vld [vmem:[#allocation7 + $0xc8] sm:$0xff]
        %v837 = vld [vmem:[#allocation7 + $0xd0] sm:$0xff]
        %v838 = vld [vmem:[#allocation7 + $0xd8] sm:$0xff]
        %v839 = vld [vmem:[#allocation7 + $0xe0] sm:$0xff]
        %v840 = vld [vmem:[#allocation7 + $0xe8] sm:$0xff]
        %v841 = vld [vmem:[#allocation7 + $0xf0] sm:$0xff]
        %v842 = vld [vmem:[#allocation7 + $0xf8] sm:$0xff]
        %v843 = vld [vmem:[#allocation7 + $0x100] sm:$0xff]
        %v844 = vld [vmem:[#allocation7 + $0x108] sm:$0xff]
        %v845 = vld [vmem:[#allocation7 + $0x110] sm:$0xff]
        %v846 = vld [vmem:[#allocation7 + $0x118] sm:$0xff]
        %v847 = vld [vmem:[#allocation7 + $0x120] sm:$0xff]
        %v848 = vld [vmem:[#allocation7 + $0x128] sm:$0xff]
        %v849 = vld [vmem:[#allocation7 + $0x130] sm:$0xff]
        %v850 = vld [vmem:[#allocation7 + $0x138] sm:$0xff]
        %v851 = vld [vmem:[#allocation7 + $0x140] sm:$0xff]
        %v852 = vld [vmem:[#allocation7 + $0x148] sm:$0xff]
        %v853 = vld [vmem:[#allocation7 + $0x150] sm:$0xff]
        %v854 = vld [vmem:[#allocation7 + $0x158] sm:$0xff]
        %v855 = vld [vmem:[#allocation7 + $0x160] sm:$0xff]
        %v856 = vld [vmem:[#allocation7 + $0x168] sm:$0xff]
        %v857 = vld [vmem:[#allocation7 + $0x170] sm:$0xff]
        %v858 = vld [vmem:[#allocation7 + $0x178] sm:$0xff]
        %v859 = vld [vmem:[#allocation7 + $0x180] sm:$0xff]
        %v860 = vld [vmem:[#allocation7 + $0x188] sm:$0xff]
        %v861 = vld [vmem:[#allocation7 + $0x190] sm:$0xff]
        %v862 = vld [vmem:[#allocation7 + $0x198] sm:$0xff]
        %v863 = vld [vmem:[#allocation7 + $0x1a0] sm:$0xff]
        %v864 = vld [vmem:[#allocation7 + $0x1a8] sm:$0xff]
        %v865 = vld [vmem:[#allocation7 + $0x1b0] sm:$0xff]
        %v866 = vld [vmem:[#allocation7 + $0x1b8] sm:$0xff]
        %v867 = vld [vmem:[#allocation7 + $0x1c0] sm:$0xff]
        %v868 = vld [vmem:[#allocation7 + $0x1c8] sm:$0xff]
        %v869 = vld [vmem:[#allocation7 + $0x1d0] sm:$0xff]
        %v870 = vld [vmem:[#allocation7 + $0x1d8] sm:$0xff]
        %v871 = vld [vmem:[#allocation7 + $0x1e0] sm:$0xff]
        %v872 = vld [vmem:[#allocation7 + $0x1e8] sm:$0xff]
        %v873 = vld [vmem:[#allocation7 + $0x1f0] sm:$0xff]
        %v874 = vld [vmem:[#allocation7 + $0x1f8] sm:$0xff]
        %v875 = vld [vmem:[#allocation7 + $0x200] sm:$0xff]
        %v876 = vld [vmem:[#allocation7 + $0x208] sm:$0xff]
        %v877 = vld [vmem:[#allocation7 + $0x210] sm:$0xff]
        %v878 = vld [vmem:[#allocation7 + $0x218] sm:$0xff]
        %v879 = vld [vmem:[#allocation7 + $0x220] sm:$0xff]
        %v880 = vld [vmem:[#allocation7 + $0x228] sm:$0xff]
        %v881 = vld [vmem:[#allocation7 + $0x230] sm:$0xff]
        %v882 = vld [vmem:[#allocation7 + $0x238] sm:$0xff]
        %v883 = vld [vmem:[#allocation7 + $0x240] sm:$0xff]
        %v884 = vld [vmem:[#allocation7 + $0x248] sm:$0xff]
        %v885 = vld [vmem:[#allocation7 + $0x250] sm:$0xff]
        %v886 = vld [vmem:[#allocation7 + $0x258] sm:$0xff]
        %v887 = vld [vmem:[#allocation7 + $0x260] sm:$0xff]
        %v888 = vld [vmem:[#allocation7 + $0x268] sm:$0xff]
        %v889 = vld [vmem:[#allocation7 + $0x270] sm:$0xff]
        %v890 = vld [vmem:[#allocation7 + $0x278] sm:$0xff]
        %v891 = vld [vmem:[#allocation7 + $0x280] sm:$0xff]
        %v892 = vld [vmem:[#allocation7 + $0x288] sm:$0xff]
        %v893 = vld [vmem:[#allocation7 + $0x290] sm:$0xff]
        %v894 = vld [vmem:[#allocation7 + $0x298] sm:$0xff]
        %v895 = vld [vmem:[#allocation7 + $0x2a0] sm:$0xff]
        %v896 = vld [vmem:[#allocation7 + $0x2a8] sm:$0xff]
        %v897 = vld [vmem:[#allocation7 + $0x2b0] sm:$0xff]
        %v898 = vld [vmem:[#allocation7 + $0x2b8] sm:$0xff]
        %v899 = vld [vmem:[#allocation7 + $0x2c0] sm:$0xff]
        %v900 = vld [vmem:[#allocation7 + $0x2c8] sm:$0xff]
        %v901 = vld [vmem:[#allocation7 + $0x2d0] sm:$0xff]
        %v902 = vld [vmem:[#allocation7 + $0x2d8] sm:$0xff]
        %v903 = vld [vmem:[#allocation7 + $0x2e0] sm:$0xff]
        %v904 = vld [vmem:[#allocation7 + $0x2e8] sm:$0xff]
        %v905 = vld [vmem:[#allocation7 + $0x2f0] sm:$0xff]
        %v906 = vld [vmem:[#allocation7 + $0x2f8] sm:$0xff]
        %v907 = vld [vmem:[#allocation7 + $0x300] sm:$0xff]
        %v908 = vld [vmem:[#allocation7 + $0x308] sm:$0xff]
        %v909 = vld [vmem:[#allocation7 + $0x310] sm:$0xff]
        %v910 = vld [vmem:[#allocation7 + $0x318] sm:$0xff]
        %v911 = vld [vmem:[#allocation7 + $0x320] sm:$0xff]
        %v912 = vld [vmem:[#allocation7 + $0x328] sm:$0xff]
        %v913 = vld [vmem:[#allocation7 + $0x330] sm:$0xff]
        %v914 = vld [vmem:[#allocation7 + $0x338] sm:$0xff]
        %v915 = vld [vmem:[#allocation7 + $0x340] sm:$0xff]
        %v916 = vld [vmem:[#allocation7 + $0x348] sm:$0xff]
        %v917 = vld [vmem:[#allocation7 + $0x350] sm:$0xff]
        %v918 = vld [vmem:[#allocation7 + $0x358] sm:$0xff]
        %v919 = vld [vmem:[#allocation7 + $0x360] sm:$0xff]
        %v920 = vld [vmem:[#allocation7 + $0x368] sm:$0xff]
        %v921 = vld [vmem:[#allocation7 + $0x370] sm:$0xff]
        %v922 = vld [vmem:[#allocation7 + $0x378] sm:$0xff]
        %v923 = vld [vmem:[#allocation7 + $0x380] sm:$0xff]
        %v924 = vld [vmem:[#allocation7 + $0x388] sm:$0xff]
        %v925 = vld [vmem:[#allocation7 + $0x390] sm:$0xff]
        %v926 = vld [vmem:[#allocation7 + $0x398] sm:$0xff]
        %v927 = vld [vmem:[#allocation7 + $0x3a0] sm:$0xff]
        %v928 = vld [vmem:[#allocation7 + $0x3a8] sm:$0xff]
        %v929 = vld [vmem:[#allocation7 + $0x3b0] sm:$0xff]
        %v930 = vld [vmem:[#allocation7 + $0x3b8] sm:$0xff]
        %v931 = vld [vmem:[#allocation7 + $0x3c0] sm:$0xff]
        %v932 = vld [vmem:[#allocation7 + $0x3c8] sm:$0xff]
        %v933 = vld [vmem:[#allocation7 + $0x3d0] sm:$0xff]
        %v934 = vld [vmem:[#allocation7 + $0x3d8] sm:$0xff]
        %v935 = vld [vmem:[#allocation7 + $0x3e0] sm:$0xff]
        %v936 = vld [vmem:[#allocation7 + $0x3e8] sm:$0xff]
        %v937 = vld [vmem:[#allocation7 + $0x3f0] sm:$0xff]
        %v938 = vld [vmem:[#allocation7 + $0x3f8] sm:$0xff]
        %v939 = vld [vmem:[#allocation7 + $0x400] sm:$0xff]
        %v940 = vld [vmem:[#allocation7 + $0x408] sm:$0xff]
        %v941 = vld [vmem:[#allocation7 + $0x410] sm:$0xff]
        %v942 = vld [vmem:[#allocation7 + $0x418] sm:$0xff]
        %v943 = vld [vmem:[#allocation7 + $0x420] sm:$0xff]
        %v944 = vld [vmem:[#allocation7 + $0x428] sm:$0xff]
        %v945 = vld [vmem:[#allocation7 + $0x430] sm:$0xff]
        %v946 = vld [vmem:[#allocation7 + $0x438] sm:$0xff]
        %v947 = vld [vmem:[#allocation7 + $0x440] sm:$0xff]
        %v948 = vld [vmem:[#allocation7 + $0x448] sm:$0xff]
        %v949 = vld [vmem:[#allocation7 + $0x450] sm:$0xff]
        %v950 = vld [vmem:[#allocation7 + $0x458] sm:$0xff]
        %v951 = vld [vmem:[#allocation7 + $0x460] sm:$0xff]
        %v952 = vld [vmem:[#allocation7 + $0x468] sm:$0xff]
        %v953 = vld [vmem:[#allocation7 + $0x470] sm:$0xff]
        %v954 = vld [vmem:[#allocation7 + $0x478] sm:$0xff]
        %v955 = vld [vmem:[#allocation7 + $0x480] sm:$0xff]
        %v956 = vld [vmem:[#allocation7 + $0x488] sm:$0xff]
        %v957 = vld [vmem:[#allocation7 + $0x490] sm:$0xff]
        %v958 = vld [vmem:[#allocation7 + $0x498] sm:$0xff]
        %v959 = vld [vmem:[#allocation7 + $0x4a0] sm:$0xff]
        %v960 = vld [vmem:[#allocation7 + $0x4a8] sm:$0xff]
        %v961 = vld [vmem:[#allocation7 + $0x4b0] sm:$0xff]
        %v962 = vld [vmem:[#allocation7 + $0x4b8] sm:$0xff]
        %v963 = vld [vmem:[#allocation7 + $0x4c0] sm:$0xff]
        %v964 = vld [vmem:[#allocation7 + $0x4c8] sm:$0xff]
        %v965 = vld [vmem:[#allocation7 + $0x4d0] sm:$0xff]
        %v966 = vld [vmem:[#allocation7 + $0x4d8] sm:$0xff]
        %v967 = vld [vmem:[#allocation7 + $0x4e0] sm:$0xff]
        %v968 = vld [vmem:[#allocation7 + $0x4e8] sm:$0xff]
        %v969 = vld [vmem:[#allocation7 + $0x4f0] sm:$0xff]
        %v970 = vld [vmem:[#allocation7 + $0x4f8] sm:$0xff]
        %v971 = vld [vmem:[#allocation7 + $0x500] sm:$0xff]
        %v972 = vld [vmem:[#allocation7 + $0x508] sm:$0xff]
        %v973 = vld [vmem:[#allocation7 + $0x510] sm:$0xff]
        %v974 = vld [vmem:[#allocation7 + $0x518] sm:$0xff]
        %v975 = vld [vmem:[#allocation7 + $0x520] sm:$0xff]
        %v976 = vld [vmem:[#allocation7 + $0x528] sm:$0xff]
        %v977 = vld [vmem:[#allocation7 + $0x530] sm:$0xff]
        %v978 = vld [vmem:[#allocation7 + $0x538] sm:$0xff]
        %v979 = vld [vmem:[#allocation7 + $0x540] sm:$0xff]
        %v980 = vld [vmem:[#allocation7 + $0x548] sm:$0xff]
        %v981 = vld [vmem:[#allocation7 + $0x550] sm:$0xff]
        %v982 = vld [vmem:[#allocation7 + $0x558] sm:$0xff]
        %v983 = vld [vmem:[#allocation7 + $0x560] sm:$0xff]
        %v984 = vld [vmem:[#allocation7 + $0x568] sm:$0xff]
        %v985 = vld [vmem:[#allocation7 + $0x570] sm:$0xff]
        %v986 = vld [vmem:[#allocation7 + $0x578] sm:$0xff]
        %v987 = vld [vmem:[#allocation7 + $0x580] sm:$0xff]
        %v988 = vld [vmem:[#allocation7 + $0x588] sm:$0xff]
        %v989 = vld [vmem:[#allocation7 + $0x590] sm:$0xff]
        %v990 = vld [vmem:[#allocation7 + $0x598] sm:$0xff]
        %v991 = vld [vmem:[#allocation7 + $0x5a0] sm:$0xff]
        %v992 = vld [vmem:[#allocation7 + $0x5a8] sm:$0xff]
        %v993 = vld [vmem:[#allocation7 + $0x5b0] sm:$0xff]
        %v994 = vld [vmem:[#allocation7 + $0x5b8] sm:$0xff]
        %v995 = vld [vmem:[#allocation7 + $0x5c0] sm:$0xff]
        %v996 = vld [vmem:[#allocation7 + $0x5c8] sm:$0xff]
        %v997 = vld [vmem:[#allocation7 + $0x5d0] sm:$0xff]
        %v998 = vld [vmem:[#allocation7 + $0x5d8] sm:$0xff]
        %v999 = vld [vmem:[#allocation7 + $0x5e0] sm:$0xff]
        %v1000 = vld [vmem:[#allocation7 + $0x5e8] sm:$0xff]
        %v1001 = vld [vmem:[#allocation7 + $0x5f0] sm:$0xff]
        %v1002 = vld [vmem:[#allocation7 + $0x5f8] sm:$0xff]
        %v1003 = vld [vmem:[#allocation7 + $0x600] sm:$0xff]
        %v1004 = vld [vmem:[#allocation7 + $0x608] sm:$0xff]
        %v1005 = vld [vmem:[#allocation7 + $0x610] sm:$0xff]
        %v1006 = vld [vmem:[#allocation7 + $0x618] sm:$0xff]
        %v1007 = vld [vmem:[#allocation7 + $0x620] sm:$0xff]
        %v1008 = vld [vmem:[#allocation7 + $0x628] sm:$0xff]
        %v1009 = vld [vmem:[#allocation7 + $0x630] sm:$0xff]
        %v1010 = vld [vmem:[#allocation7 + $0x638] sm:$0xff]
        %v1011 = vld [vmem:[#allocation7 + $0x640] sm:$0xff]
        %v1012 = vld [vmem:[#allocation7 + $0x648] sm:$0xff]
        %v1013 = vld [vmem:[#allocation7 + $0x650] sm:$0xff]
        %v1014 = vld [vmem:[#allocation7 + $0x658] sm:$0xff]
        %v1015 = vld [vmem:[#allocation7 + $0x660] sm:$0xff]
        %v1016 = vld [vmem:[#allocation7 + $0x668] sm:$0xff]
        %v1017 = vld [vmem:[#allocation7 + $0x670] sm:$0xff]
        %v1018 = vld [vmem:[#allocation7 + $0x678] sm:$0xff]
        %v1019 = vld [vmem:[#allocation7 + $0x680] sm:$0xff]
        %v1020 = vld [vmem:[#allocation7 + $0x688] sm:$0xff]
        %v1021 = vld [vmem:[#allocation7 + $0x690] sm:$0xff]
        %v1022 = vld [vmem:[#allocation7 + $0x698] sm:$0xff]
        %v1023 = vld [vmem:[#allocation7 + $0x6a0] sm:$0xff]
        %v1024 = vld [vmem:[#allocation7 + $0x6a8] sm:$0xff]
        %v1025 = vld [vmem:[#allocation7 + $0x6b0] sm:$0xff]
        %v1026 = vld [vmem:[#allocation7 + $0x6b8] sm:$0xff]
        %v1027 = vld [vmem:[#allocation7 + $0x6c0] sm:$0xff]
        %v1028 = vld [vmem:[#allocation7 + $0x6c8] sm:$0xff]
        %v1029 = vld [vmem:[#allocation7 + $0x6d0] sm:$0xff]
        %v1030 = vld [vmem:[#allocation7 + $0x6d8] sm:$0xff]
        %v1031 = vld [vmem:[#allocation7 + $0x6e0] sm:$0xff]
        %v1032 = vld [vmem:[#allocation7 + $0x6e8] sm:$0xff]
        %v1033 = vld [vmem:[#allocation7 + $0x6f0] sm:$0xff]
        %v1034 = vld [vmem:[#allocation7 + $0x6f8] sm:$0xff]
        %v1035 = vld [vmem:[#allocation7 + $0x700] sm:$0xff]
        %v1036 = vld [vmem:[#allocation7 + $0x708] sm:$0xff]
        %v1037 = vld [vmem:[#allocation7 + $0x710] sm:$0xff]
        %v1038 = vld [vmem:[#allocation7 + $0x718] sm:$0xff]
        %v1039 = vld [vmem:[#allocation7 + $0x720] sm:$0xff]
        %v1040 = vld [vmem:[#allocation7 + $0x728] sm:$0xff]
        %v1041 = vld [vmem:[#allocation7 + $0x730] sm:$0xff]
        %v1042 = vld [vmem:[#allocation7 + $0x738] sm:$0xff]
        %v1043 = vld [vmem:[#allocation7 + $0x740] sm:$0xff]
        %v1044 = vld [vmem:[#allocation7 + $0x748] sm:$0xff]
        %v1045 = vld [vmem:[#allocation7 + $0x750] sm:$0xff]
        %v1046 = vld [vmem:[#allocation7 + $0x758] sm:$0xff]
        %v1047 = vld [vmem:[#allocation7 + $0x760] sm:$0xff]
        %v1048 = vld [vmem:[#allocation7 + $0x768] sm:$0xff]
        %v1049 = vld [vmem:[#allocation7 + $0x770] sm:$0xff]
        %v1050 = vld [vmem:[#allocation7 + $0x778] sm:$0xff]
        %v1051 = vld [vmem:[#allocation7 + $0x780] sm:$0xff]
        %v1052 = vld [vmem:[#allocation7 + $0x788] sm:$0xff]
        %v1053 = vld [vmem:[#allocation7 + $0x790] sm:$0xff]
        %v1054 = vld [vmem:[#allocation7 + $0x798] sm:$0xff]
        %v1055 = vld [vmem:[#allocation7 + $0x7a0] sm:$0xff]
        %v1056 = vld [vmem:[#allocation7 + $0x7a8] sm:$0xff]
        %v1057 = vld [vmem:[#allocation7 + $0x7b0] sm:$0xff]
        %v1058 = vld [vmem:[#allocation7 + $0x7b8] sm:$0xff]
        %v1059 = vld [vmem:[#allocation7 + $0x7c0] sm:$0xff]
        %v1060 = vld [vmem:[#allocation7 + $0x7c8] sm:$0xff]
        %v1061 = vld [vmem:[#allocation7 + $0x7d0] sm:$0xff]
        %v1062 = vld [vmem:[#allocation7 + $0x7d8] sm:$0xff]
        %v1063 = vld [vmem:[#allocation7 + $0x7e0] sm:$0xff]
        %v1064 = vld [vmem:[#allocation7 + $0x7e8] sm:$0xff]
        %v1065 = vld [vmem:[#allocation7 + $0x7f0] sm:$0xff]
        %v1066 = vld [vmem:[#allocation7 + $0x7f8] sm:$0xff]
        %v1195 = vunpack.c.l.b16 %v939
        %v1196 = vunpack.c.h.b16 %v939
        %v1197 = vunpack.c.l.b16 %v940
        %v1198 = vunpack.c.h.b16 %v940
        %v1199 = vunpack.c.l.b16 %v941
        %v1200 = vunpack.c.h.b16 %v941
        %v1201 = vunpack.c.l.b16 %v942
        %v1202 = vunpack.c.h.b16 %v942
        %v1203 = vunpack.c.l.b16 %v943
        %v1204 = vunpack.c.h.b16 %v943
        %v1205 = vunpack.c.l.b16 %v944
        %v1206 = vunpack.c.h.b16 %v944
        %v1207 = vunpack.c.l.b16 %v945
        %v1208 = vunpack.c.h.b16 %v945
        %v1209 = vunpack.c.l.b16 %v946
        %v1210 = vunpack.c.h.b16 %v946
        %v1211 = vunpack.c.l.b16 %v947
        %v1212 = vunpack.c.h.b16 %v947
        %v1213 = vunpack.c.l.b16 %v948
        %v1214 = vunpack.c.h.b16 %v948
        %v1215 = vunpack.c.l.b16 %v949
        %v1216 = vunpack.c.h.b16 %v949
        %v1217 = vunpack.c.l.b16 %v950
        %v1218 = vunpack.c.h.b16 %v950
        %v1219 = vunpack.c.l.b16 %v951
        %v1220 = vunpack.c.h.b16 %v951
        %v1221 = vunpack.c.l.b16 %v952
        %v1222 = vunpack.c.h.b16 %v952
        %v1223 = vunpack.c.l.b16 %v953
        %v1224 = vunpack.c.h.b16 %v953
        %v1225 = vunpack.c.l.b16 %v954
        %v1226 = vunpack.c.h.b16 %v954
        %v1227 = vunpack.c.l.b16 %v955
        %v1228 = vunpack.c.h.b16 %v955
        %v1229 = vunpack.c.l.b16 %v956
        %v1230 = vunpack.c.h.b16 %v956
        %v1231 = vunpack.c.l.b16 %v957
        %v1232 = vunpack.c.h.b16 %v957
        %v1233 = vunpack.c.l.b16 %v958
        %v1234 = vunpack.c.h.b16 %v958
        %v1235 = vunpack.c.l.b16 %v959
        %v1236 = vunpack.c.h.b16 %v959
        %v1237 = vunpack.c.l.b16 %v960
        %v1238 = vunpack.c.h.b16 %v960
        %v1239 = vunpack.c.l.b16 %v961
        %v1240 = vunpack.c.h.b16 %v961
        %v1241 = vunpack.c.l.b16 %v962
        %v1242 = vunpack.c.h.b16 %v962
        %v1243 = vunpack.c.l.b16 %v963
        %v1244 = vunpack.c.h.b16 %v963
        %v1245 = vunpack.c.l.b16 %v964
        %v1246 = vunpack.c.h.b16 %v964
        %v1247 = vunpack.c.l.b16 %v965
        %v1248 = vunpack.c.h.b16 %v965
        %v1249 = vunpack.c.l.b16 %v966
        %v1250 = vunpack.c.h.b16 %v966
        %v1251 = vunpack.c.l.b16 %v967
        %v1252 = vunpack.c.h.b16 %v967
        %v1253 = vunpack.c.l.b16 %v968
        %v1254 = vunpack.c.h.b16 %v968
        %v1255 = vunpack.c.l.b16 %v969
        %v1256 = vunpack.c.h.b16 %v969
        %v1257 = vunpack.c.l.b16 %v970
        %v1258 = vunpack.c.h.b16 %v970
        %v1259 = vunpack.c.l.b16 %v971
        %v1260 = vunpack.c.h.b16 %v971
        %v1261 = vunpack.c.l.b16 %v972
        %v1262 = vunpack.c.h.b16 %v972
        %v1263 = vunpack.c.l.b16 %v973
        %v1264 = vunpack.c.h.b16 %v973
        %v1265 = vunpack.c.l.b16 %v974
        %v1266 = vunpack.c.h.b16 %v974
        %v1267 = vunpack.c.l.b16 %v975
        %v1268 = vunpack.c.h.b16 %v975
        %v1269 = vunpack.c.l.b16 %v976
        %v1270 = vunpack.c.h.b16 %v976
        %v1271 = vunpack.c.l.b16 %v977
        %v1272 = vunpack.c.h.b16 %v977
        %v1273 = vunpack.c.l.b16 %v978
        %v1274 = vunpack.c.h.b16 %v978
        %v1275 = vunpack.c.l.b16 %v979
        %v1276 = vunpack.c.h.b16 %v979
        %v1277 = vunpack.c.l.b16 %v980
        %v1278 = vunpack.c.h.b16 %v980
        %v1279 = vunpack.c.l.b16 %v981
        %v1280 = vunpack.c.h.b16 %v981
        %v1281 = vunpack.c.l.b16 %v982
        %v1282 = vunpack.c.h.b16 %v982
        %v1283 = vunpack.c.l.b16 %v983
        %v1284 = vunpack.c.h.b16 %v983
        %v1285 = vunpack.c.l.b16 %v984
        %v1286 = vunpack.c.h.b16 %v984
        %v1287 = vunpack.c.l.b16 %v985
        %v1288 = vunpack.c.h.b16 %v985
        %v1289 = vunpack.c.l.b16 %v986
        %v1290 = vunpack.c.h.b16 %v986
        %v1291 = vunpack.c.l.b16 %v987
        %v1292 = vunpack.c.h.b16 %v987
        %v1293 = vunpack.c.l.b16 %v988
        %v1294 = vunpack.c.h.b16 %v988
        %v1295 = vunpack.c.l.b16 %v989
        %v1296 = vunpack.c.h.b16 %v989
        %v1297 = vunpack.c.l.b16 %v990
        %v1298 = vunpack.c.h.b16 %v990
        %v1299 = vunpack.c.l.b16 %v991
        %v1300 = vunpack.c.h.b16 %v991
        %v1301 = vunpack.c.l.b16 %v992
        %v1302 = vunpack.c.h.b16 %v992
        %v1303 = vunpack.c.l.b16 %v993
        %v1304 = vunpack.c.h.b16 %v993
        %v1305 = vunpack.c.l.b16 %v994
        %v1306 = vunpack.c.h.b16 %v994
        %v1307 = vunpack.c.l.b16 %v995
        %v1308 = vunpack.c.h.b16 %v995
        %v1309 = vunpack.c.l.b16 %v996
        %v1310 = vunpack.c.h.b16 %v996
        %v1311 = vunpack.c.l.b16 %v997
        %v1312 = vunpack.c.h.b16 %v997
        %v1313 = vunpack.c.l.b16 %v998
        %v1314 = vunpack.c.h.b16 %v998
        %v1315 = vunpack.c.l.b16 %v999
        %v1316 = vunpack.c.h.b16 %v999
        %v1317 = vunpack.c.l.b16 %v1000
        %v1318 = vunpack.c.h.b16 %v1000
        %v1319 = vunpack.c.l.b16 %v1001
        %v1320 = vunpack.c.h.b16 %v1001
        %v1321 = vunpack.c.l.b16 %v1002
        %v1322 = vunpack.c.h.b16 %v1002
        %v1323 = vunpack.c.l.b16 %v1003
        %v1324 = vunpack.c.h.b16 %v1003
        %v1325 = vunpack.c.l.b16 %v1004
        %v1326 = vunpack.c.h.b16 %v1004
        %v1327 = vunpack.c.l.b16 %v1005
        %v1328 = vunpack.c.h.b16 %v1005
        %v1329 = vunpack.c.l.b16 %v1006
        %v1330 = vunpack.c.h.b16 %v1006
        %v1331 = vunpack.c.l.b16 %v1007
        %v1332 = vunpack.c.h.b16 %v1007
        %v1333 = vunpack.c.l.b16 %v1008
        %v1334 = vunpack.c.h.b16 %v1008
        %v1335 = vunpack.c.l.b16 %v1009
        %v1336 = vunpack.c.h.b16 %v1009
        %v1337 = vunpack.c.l.b16 %v1010
        %v1338 = vunpack.c.h.b16 %v1010
        %v1339 = vunpack.c.l.b16 %v1011
        %v1340 = vunpack.c.h.b16 %v1011
        %v1341 = vunpack.c.l.b16 %v1012
        %v1342 = vunpack.c.h.b16 %v1012
        %v1343 = vunpack.c.l.b16 %v1013
        %v1344 = vunpack.c.h.b16 %v1013
        %v1345 = vunpack.c.l.b16 %v1014
        %v1346 = vunpack.c.h.b16 %v1014
        %v1347 = vunpack.c.l.b16 %v1015
        %v1348 = vunpack.c.h.b16 %v1015
        %v1349 = vunpack.c.l.b16 %v1016
        %v1350 = vunpack.c.h.b16 %v1016
        %v1351 = vunpack.c.l.b16 %v1017
        %v1352 = vunpack.c.h.b16 %v1017
        %v1353 = vunpack.c.l.b16 %v1018
        %v1354 = vunpack.c.h.b16 %v1018
        %v1355 = vunpack.c.l.b16 %v1019
        %v1356 = vunpack.c.h.b16 %v1019
        %v1357 = vunpack.c.l.b16 %v1020
        %v1358 = vunpack.c.h.b16 %v1020
        %v1359 = vunpack.c.l.b16 %v1021
        %v1360 = vunpack.c.h.b16 %v1021
        %v1361 = vunpack.c.l.b16 %v1022
        %v1362 = vunpack.c.h.b16 %v1022
        %v1363 = vunpack.c.l.b16 %v1023
        %v1364 = vunpack.c.h.b16 %v1023
        %v1365 = vunpack.c.l.b16 %v1024
        %v1366 = vunpack.c.h.b16 %v1024
        %v1367 = vunpack.c.l.b16 %v1025
        %v1368 = vunpack.c.h.b16 %v1025
        %v1369 = vunpack.c.l.b16 %v1026
        %v1370 = vunpack.c.h.b16 %v1026
        %v1371 = vunpack.c.l.b16 %v1027
        %v1372 = vunpack.c.h.b16 %v1027
        %v1373 = vunpack.c.l.b16 %v1028
        %v1374 = vunpack.c.h.b16 %v1028
        %v1375 = vunpack.c.l.b16 %v1029
        %v1376 = vunpack.c.h.b16 %v1029
        %v1377 = vunpack.c.l.b16 %v1030
        %v1378 = vunpack.c.h.b16 %v1030
        %v1379 = vunpack.c.l.b16 %v1031
        %v1380 = vunpack.c.h.b16 %v1031
        %v1381 = vunpack.c.l.b16 %v1032
        %v1382 = vunpack.c.h.b16 %v1032
        %v1383 = vunpack.c.l.b16 %v1033
        %v1384 = vunpack.c.h.b16 %v1033
        %v1385 = vunpack.c.l.b16 %v1034
        %v1386 = vunpack.c.h.b16 %v1034
        %v1387 = vunpack.c.l.b16 %v1035
        %v1388 = vunpack.c.h.b16 %v1035
        %v1389 = vunpack.c.l.b16 %v1036
        %v1390 = vunpack.c.h.b16 %v1036
        %v1391 = vunpack.c.l.b16 %v1037
        %v1392 = vunpack.c.h.b16 %v1037
        %v1393 = vunpack.c.l.b16 %v1038
        %v1394 = vunpack.c.h.b16 %v1038
        %v1395 = vunpack.c.l.b16 %v1039
        %v1396 = vunpack.c.h.b16 %v1039
        %v1397 = vunpack.c.l.b16 %v1040
        %v1398 = vunpack.c.h.b16 %v1040
        %v1399 = vunpack.c.l.b16 %v1041
        %v1400 = vunpack.c.h.b16 %v1041
        %v1401 = vunpack.c.l.b16 %v1042
        %v1402 = vunpack.c.h.b16 %v1042
        %v1403 = vunpack.c.l.b16 %v1043
        %v1404 = vunpack.c.h.b16 %v1043
        %v1405 = vunpack.c.l.b16 %v1044
        %v1406 = vunpack.c.h.b16 %v1044
        %v1407 = vunpack.c.l.b16 %v1045
        %v1408 = vunpack.c.h.b16 %v1045
        %v1409 = vunpack.c.l.b16 %v1046
        %v1410 = vunpack.c.h.b16 %v1046
        %v1411 = vunpack.c.l.b16 %v1047
        %v1412 = vunpack.c.h.b16 %v1047
        %v1413 = vunpack.c.l.b16 %v1048
        %v1414 = vunpack.c.h.b16 %v1048
        %v1415 = vunpack.c.l.b16 %v1049
        %v1416 = vunpack.c.h.b16 %v1049
        %v1417 = vunpack.c.l.b16 %v1050
        %v1418 = vunpack.c.h.b16 %v1050
        %v1419 = vunpack.c.l.b16 %v1051
        %v1420 = vunpack.c.h.b16 %v1051
        %v1421 = vunpack.c.l.b16 %v1052
        %v1422 = vunpack.c.h.b16 %v1052
        %v1423 = vunpack.c.l.b16 %v1053
        %v1424 = vunpack.c.h.b16 %v1053
        %v1425 = vunpack.c.l.b16 %v1054
        %v1426 = vunpack.c.h.b16 %v1054
        %v1427 = vunpack.c.l.b16 %v1055
        %v1428 = vunpack.c.h.b16 %v1055
        %v1429 = vunpack.c.l.b16 %v1056
        %v1430 = vunpack.c.h.b16 %v1056
        %v1431 = vunpack.c.l.b16 %v1057
        %v1432 = vunpack.c.h.b16 %v1057
        %v1433 = vunpack.c.l.b16 %v1058
        %v1434 = vunpack.c.h.b16 %v1058
        %v1435 = vunpack.c.l.b16 %v1059
        %v1436 = vunpack.c.h.b16 %v1059
        %v1437 = vunpack.c.l.b16 %v1060
        %v1438 = vunpack.c.h.b16 %v1060
        %v1439 = vunpack.c.l.b16 %v1061
        %v1440 = vunpack.c.h.b16 %v1061
        %v1441 = vunpack.c.l.b16 %v1062
        %v1442 = vunpack.c.h.b16 %v1062
        %v1443 = vunpack.c.l.b16 %v1063
        %v1444 = vunpack.c.h.b16 %v1063
        %v1445 = vunpack.c.l.b16 %v1064
        %v1446 = vunpack.c.h.b16 %v1064
        %v1447 = vunpack.c.l.b16 %v1065
        %v1448 = vunpack.c.h.b16 %v1065
        %v1449 = vunpack.c.l.b16 %v1066
        %v1450 = vunpack.c.h.b16 %v1066
        %v1451 = vpack.c.b16 %v1199, %v1195
        %v1452 = vpack.c.b16 %v1200, %v1196
        %v1453 = vpack.c.b16 %v1201, %v1197
        %v1454 = vpack.c.b16 %v1202, %v1198
        %v1455 = vpack.c.b16 %v1207, %v1203
        %v1456 = vpack.c.b16 %v1208, %v1204
        %v1457 = vpack.c.b16 %v1209, %v1205
        %v1458 = vpack.c.b16 %v1210, %v1206
        %v1459 = vpack.c.b16 %v1215, %v1211
        %v1460 = vpack.c.b16 %v1216, %v1212
        %v1461 = vpack.c.b16 %v1217, %v1213
        %v1462 = vpack.c.b16 %v1218, %v1214
        %v1463 = vpack.c.b16 %v1223, %v1219
        %v1464 = vpack.c.b16 %v1224, %v1220
        %v1465 = vpack.c.b16 %v1225, %v1221
        %v1466 = vpack.c.b16 %v1226, %v1222
        %v1467 = vpack.c.b16 %v1231, %v1227
        %v1468 = vpack.c.b16 %v1232, %v1228
        %v1469 = vpack.c.b16 %v1233, %v1229
        %v1470 = vpack.c.b16 %v1234, %v1230
        %v1471 = vpack.c.b16 %v1239, %v1235
        %v1472 = vpack.c.b16 %v1240, %v1236
        %v1473 = vpack.c.b16 %v1241, %v1237
        %v1474 = vpack.c.b16 %v1242, %v1238
        %v1475 = vpack.c.b16 %v1247, %v1243
        %v1476 = vpack.c.b16 %v1248, %v1244
        %v1477 = vpack.c.b16 %v1249, %v1245
        %v1478 = vpack.c.b16 %v1250, %v1246
        %v1479 = vpack.c.b16 %v1255, %v1251
        %v1480 = vpack.c.b16 %v1256, %v1252
        %v1481 = vpack.c.b16 %v1257, %v1253
        %v1482 = vpack.c.b16 %v1258, %v1254
        %v1483 = vpack.c.b16 %v1263, %v1259
        %v1484 = vpack.c.b16 %v1264, %v1260
        %v1485 = vpack.c.b16 %v1265, %v1261
        %v1486 = vpack.c.b16 %v1266, %v1262
        %v1487 = vpack.c.b16 %v1271, %v1267
        %v1488 = vpack.c.b16 %v1272, %v1268
        %v1489 = vpack.c.b16 %v1273, %v1269
        %v1490 = vpack.c.b16 %v1274, %v1270
        %v1491 = vpack.c.b16 %v1279, %v1275
        %v1492 = vpack.c.b16 %v1280, %v1276
        %v1493 = vpack.c.b16 %v1281, %v1277
        %v1494 = vpack.c.b16 %v1282, %v1278
        %v1495 = vpack.c.b16 %v1287, %v1283
        %v1496 = vpack.c.b16 %v1288, %v1284
        %v1497 = vpack.c.b16 %v1289, %v1285
        %v1498 = vpack.c.b16 %v1290, %v1286
        %v1499 = vpack.c.b16 %v1295, %v1291
        %v1500 = vpack.c.b16 %v1296, %v1292
        %v1501 = vpack.c.b16 %v1297, %v1293
        %v1502 = vpack.c.b16 %v1298, %v1294
        %v1503 = vpack.c.b16 %v1303, %v1299
        %v1504 = vpack.c.b16 %v1304, %v1300
        %v1505 = vpack.c.b16 %v1305, %v1301
        %v1506 = vpack.c.b16 %v1306, %v1302
        %v1507 = vpack.c.b16 %v1311, %v1307
        %v1508 = vpack.c.b16 %v1312, %v1308
        %v1509 = vpack.c.b16 %v1313, %v1309
        %v1510 = vpack.c.b16 %v1314, %v1310
        %v1511 = vpack.c.b16 %v1319, %v1315
        %v1512 = vpack.c.b16 %v1320, %v1316
        %v1513 = vpack.c.b16 %v1321, %v1317
        %v1514 = vpack.c.b16 %v1322, %v1318
        %v1515 = vpack.c.b16 %v1327, %v1323
        %v1516 = vpack.c.b16 %v1328, %v1324
        %v1517 = vpack.c.b16 %v1329, %v1325
        %v1518 = vpack.c.b16 %v1330, %v1326
        %v1519 = vpack.c.b16 %v1335, %v1331
        %v1520 = vpack.c.b16 %v1336, %v1332
        %v1521 = vpack.c.b16 %v1337, %v1333
        %v1522 = vpack.c.b16 %v1338, %v1334
        %v1523 = vpack.c.b16 %v1343, %v1339
        %v1524 = vpack.c.b16 %v1344, %v1340
        %v1525 = vpack.c.b16 %v1345, %v1341
        %v1526 = vpack.c.b16 %v1346, %v1342
        %v1527 = vpack.c.b16 %v1351, %v1347
        %v1528 = vpack.c.b16 %v1352, %v1348
        %v1529 = vpack.c.b16 %v1353, %v1349
        %v1530 = vpack.c.b16 %v1354, %v1350
        %v1531 = vpack.c.b16 %v1359, %v1355
        %v1532 = vpack.c.b16 %v1360, %v1356
        %v1533 = vpack.c.b16 %v1361, %v1357
        %v1534 = vpack.c.b16 %v1362, %v1358
        %v1535 = vpack.c.b16 %v1367, %v1363
        %v1536 = vpack.c.b16 %v1368, %v1364
        %v1537 = vpack.c.b16 %v1369, %v1365
        %v1538 = vpack.c.b16 %v1370, %v1366
        %v1539 = vpack.c.b16 %v1375, %v1371
        %v1540 = vpack.c.b16 %v1376, %v1372
        %v1541 = vpack.c.b16 %v1377, %v1373
        %v1542 = vpack.c.b16 %v1378, %v1374
        %v1543 = vpack.c.b16 %v1383, %v1379
        %v1544 = vpack.c.b16 %v1384, %v1380
        %v1545 = vpack.c.b16 %v1385, %v1381
        %v1546 = vpack.c.b16 %v1386, %v1382
        %v1547 = vpack.c.b16 %v1391, %v1387
        %v1548 = vpack.c.b16 %v1392, %v1388
        %v1549 = vpack.c.b16 %v1393, %v1389
        %v1550 = vpack.c.b16 %v1394, %v1390
        %v1551 = vpack.c.b16 %v1399, %v1395
        %v1552 = vpack.c.b16 %v1400, %v1396
        %v1553 = vpack.c.b16 %v1401, %v1397
        %v1554 = vpack.c.b16 %v1402, %v1398
        %v1555 = vpack.c.b16 %v1407, %v1403
        %v1556 = vpack.c.b16 %v1408, %v1404
        %v1557 = vpack.c.b16 %v1409, %v1405
        %v1558 = vpack.c.b16 %v1410, %v1406
        %v1559 = vpack.c.b16 %v1415, %v1411
        %v1560 = vpack.c.b16 %v1416, %v1412
        %v1561 = vpack.c.b16 %v1417, %v1413
        %v1562 = vpack.c.b16 %v1418, %v1414
        %v1563 = vpack.c.b16 %v1423, %v1419
        %v1564 = vpack.c.b16 %v1424, %v1420
        %v1565 = vpack.c.b16 %v1425, %v1421
        %v1566 = vpack.c.b16 %v1426, %v1422
        %v1567 = vpack.c.b16 %v1431, %v1427
        %v1568 = vpack.c.b16 %v1432, %v1428
        %v1569 = vpack.c.b16 %v1433, %v1429
        %v1570 = vpack.c.b16 %v1434, %v1430
        %v1571 = vpack.c.b16 %v1439, %v1435
        %v1572 = vpack.c.b16 %v1440, %v1436
        %v1573 = vpack.c.b16 %v1441, %v1437
        %v1574 = vpack.c.b16 %v1442, %v1438
        %v1575 = vpack.c.b16 %v1447, %v1443
        %v1576 = vpack.c.b16 %v1448, %v1444
        %v1577 = vpack.c.b16 %v1449, %v1445
        %v1578 = vpack.c.b16 %v1450, %v1446
        %1707 = vmatprep.subr.bf16.mxu0 %v1452
        %1708 = vmatpush1.bf16.msra.mxu0 %v1451
        %1709 = vmatprep.subr.bf16.mxu0 %v1456
        %1710 = vmatpush1.bf16.msra.mxu0 %v1455
        %1711 = vmatprep.subr.bf16.mxu0 %v1460
        %1712 = vmatpush1.bf16.msra.mxu0 %v1459
        %1713 = vmatprep.subr.bf16.mxu0 %v1464
        %1714 = vmatpush1.bf16.msra.mxu0 %v1463
        %1715 = vmatprep.subr.bf16.mxu0 %v1468
        %1716 = vmatpush1.bf16.msra.mxu0 %v1467
        %1717 = vmatprep.subr.bf16.mxu0 %v1472
        %1718 = vmatpush1.bf16.msra.mxu0 %v1471
        %1719 = vmatprep.subr.bf16.mxu0 %v1476
        %1720 = vmatpush1.bf16.msra.mxu0 %v1475
        %1721 = vmatprep.subr.bf16.mxu0 %v1480
        %1722 = vmatpush1.bf16.msra.mxu0 %v1479
        %1723 = vmatprep.subr.bf16.mxu0 %v1484
        %1724 = vmatpush1.bf16.msra.mxu0 %v1483
        %1725 = vmatprep.subr.bf16.mxu0 %v1488
        %1726 = vmatpush1.bf16.msra.mxu0 %v1487
        %1727 = vmatprep.subr.bf16.mxu0 %v1492
        %1728 = vmatpush1.bf16.msra.mxu0 %v1491
        %1729 = vmatprep.subr.bf16.mxu0 %v1496
        %1730 = vmatpush1.bf16.msra.mxu0 %v1495
        %1731 = vmatprep.subr.bf16.mxu0 %v1500
        %1732 = vmatpush1.bf16.msra.mxu0 %v1499
        %1733 = vmatprep.subr.bf16.mxu0 %v1504
        %1734 = vmatpush1.bf16.msra.mxu0 %v1503
        %1735 = vmatprep.subr.bf16.mxu0 %v1508
        %1736 = vmatpush1.bf16.msra.mxu0 %v1507
        %1737 = vmatprep.subr.bf16.mxu0 %v1512
        %1738 = vmatpush1.bf16.msra.mxu0 %v1511
        %1739 = vmatprep.mubr.bf16.mxu0 %v780
        %1740 = vmatmul.mubr.bf16.gmra.mrb[0].mxu0 %v779
        %v1741 = vpop.f32.mrb[0].mxu0
        %v1742 = vadd.f32 0.0, %v1741
        %v1743 = vpop.f32.mrb[0].mxu0
        %v1744 = vadd.f32 0.0, %v1743
        %v1745 = vpop.f32.mrb[0].mxu0
        %v1746 = vadd.f32 0.0, %v1745
        %v1747 = vpop.f32.mrb[0].mxu0
        %v1748 = vadd.f32 0.0, %v1747
        %1749 = vmatprep.mubr.bf16.mxu0 %v784
        %1750 = vmatmul.mubr.bf16.gmra.mrb[0].mxu0 %v783
        %v1751 = vpop.f32.mrb[0].mxu0
        %v1752 = vadd.f32 0.0, %v1751
        %v1753 = vpop.f32.mrb[0].mxu0
        %v1754 = vadd.f32 0.0, %v1753
        %v1755 = vpop.f32.mrb[0].mxu0
        %v1756 = vadd.f32 0.0, %v1755
        %v1757 = vpop.f32.mrb[0].mxu0
        %v1758 = vadd.f32 0.0, %v1757
        %1759 = vmatprep.mubr.bf16.mxu0 %v788
        %1760 = vmatmul.mubr.bf16.gmra.mrb[0].mxu0 %v787
        %v1761 = vpop.f32.mrb[0].mxu0
        %v1762 = vadd.f32 0.0, %v1761
        %v1763 = vpop.f32.mrb[0].mxu0
        %v1764 = vadd.f32 0.0, %v1763
        %v1765 = vpop.f32.mrb[0].mxu0
        %v1766 = vadd.f32 0.0, %v1765
        %v1767 = vpop.f32.mrb[0].mxu0
        %v1768 = vadd.f32 0.0, %v1767
        %1769 = vmatprep.mubr.bf16.mxu0 %v792
        %1770 = vmatmul.mubr.bf16.gmra.mrb[0].mxu0 %v791
        %v1771 = vpop.f32.mrb[0].mxu0
        %v1772 = vadd.f32 0.0, %v1771
        %v1773 = vpop.f32.mrb[0].mxu0
        %v1774 = vadd.f32 0.0, %v1773
        %v1775 = vpop.f32.mrb[0].mxu0
        %v1776 = vadd.f32 0.0, %v1775
        %v1777 = vpop.f32.mrb[0].mxu0
        %v1778 = vadd.f32 0.0, %v1777
        %1779 = vmatprep.mubr.bf16.mxu0 %v796
        %1780 = vmatmul.mubr.bf16.gmra.mrb[0].mxu0 %v795
        %v1781 = vpop.f32.mrb[0].mxu0
        %v1782 = vadd.f32 0.0, %v1781
        %v1783 = vpop.f32.mrb[0].mxu0
        %v1784 = vadd.f32 0.0, %v1783
        %v1785 = vpop.f32.mrb[0].mxu0
        %v1786 = vadd.f32 0.0, %v1785
        %v1787 = vpop.f32.mrb[0].mxu0
        %v1788 = vadd.f32 0.0, %v1787
        %1789 = vmatprep.mubr.bf16.mxu0 %v800
        %1790 = vmatmul.mubr.bf16.gmra.mrb[0].mxu0 %v799
        %v1791 = vpop.f32.mrb[0].mxu0
        %v1792 = vadd.f32 0.0, %v1791
        %v1793 = vpop.f32.mrb[0].mxu0
        %v1794 = vadd.f32 0.0, %v1793
        %v1795 = vpop.f32.mrb[0].mxu0
        %v1796 = vadd.f32 0.0, %v1795
        %v1797 = vpop.f32.mrb[0].mxu0
        %v1798 = vadd.f32 0.0, %v1797
        %1799 = vmatprep.mubr.bf16.mxu0 %v804
        %1800 = vmatmul.mubr.bf16.gmra.mrb[0].mxu0 %v803
        %v1801 = vpop.f32.mrb[0].mxu0
        %v1802 = vadd.f32 0.0, %v1801
        %v1803 = vpop.f32.mrb[0].mxu0
        %v1804 = vadd.f32 0.0, %v1803
        %v1805 = vpop.f32.mrb[0].mxu0
        %v1806 = vadd.f32 0.0, %v1805
        %v1807 = vpop.f32.mrb[0].mxu0
        %v1808 = vadd.f32 0.0, %v1807
        %1809 = vmatprep.mubr.bf16.mxu0 %v808
        %1810 = vmatmul.mubr.bf16.gmra.mrb[0].mxu0 %v807
        %v1811 = vpop.f32.mrb[0].mxu0
        %v1812 = vadd.f32 0.0, %v1811
        %v1813 = vpop.f32.mrb[0].mxu0
        %v1814 = vadd.f32 0.0, %v1813
        %v1815 = vpop.f32.mrb[0].mxu0
        %v1816 = vadd.f32 0.0, %v1815
        %v1817 = vpop.f32.mrb[0].mxu0
        %v1818 = vadd.f32 0.0, %v1817
        %1819 = vdwg.mxu0
        %1820 = vmatprep.subr.bf16.mxu0 %v1516
        %1821 = vmatpush1.bf16.msra.mxu0 %v1515
        %1822 = vmatprep.subr.bf16.mxu0 %v1520
        %1823 = vmatpush1.bf16.msra.mxu0 %v1519
        %1824 = vmatprep.subr.bf16.mxu0 %v1524
        %1825 = vmatpush1.bf16.msra.mxu0 %v1523
        %1826 = vmatprep.subr.bf16.mxu0 %v1528
        %1827 = vmatpush1.bf16.msra.mxu0 %v1527
        %1828 = vmatprep.subr.bf16.mxu0 %v1532
        %1829 = vmatpush1.bf16.msra.mxu0 %v1531
        %1830 = vmatprep.subr.bf16.mxu0 %v1536
        %1831 = vmatpush1.bf16.msra.mxu0 %v1535
        %1832 = vmatprep.subr.bf16.mxu0 %v1540
        %1833 = vmatpush1.bf16.msra.mxu0 %v1539
        %1834 = vmatprep.subr.bf16.mxu0 %v1544
        %1835 = vmatpush1.bf16.msra.mxu0 %v1543
        %1836 = vmatprep.subr.bf16.mxu0 %v1548
        %1837 = vmatpush1.bf16.msra.mxu0 %v1547
        %1838 = vmatprep.subr.bf16.mxu0 %v1552
        %1839 = vmatpush1.bf16.msra.mxu0 %v1551
        %1840 = vmatprep.subr.bf16.mxu0 %v1556
        %1841 = vmatpush1.bf16.msra.mxu0 %v1555
        %1842 = vmatprep.subr.bf16.mxu0 %v1560
        %1843 = vmatpush1.bf16.msra.mxu0 %v1559
        %1844 = vmatprep.subr.bf16.mxu0 %v1564
        %1845 = vmatpush1.bf16.msra.mxu0 %v1563
        %1846 = vmatprep.subr.bf16.mxu0 %v1568
        %1847 = vmatpush1.bf16.msra.mxu0 %v1567
        %1848 = vmatprep.subr.bf16.mxu0 %v1572
        %1849 = vmatpush1.bf16.msra.mxu0 %v1571
        %1850 = vmatprep.subr.bf16.mxu0 %v1576
        %1851 = vmatpush1.bf16.msra.mxu0 %v1575
        %1852 = vmatprep.mubr.bf16.mxu0 %v782
        %1853 = vmatmul.mubr.bf16.gmra.mrb[0].mxu0 %v781
        %v1854 = vpop.f32.mrb[0].mxu0
        %v1855 = vadd.f32 %v1742, %v1854
        %v1856 = vpop.f32.mrb[0].mxu0
        %v1857 = vadd.f32 %v1744, %v1856
        %v1858 = vpop.f32.mrb[0].mxu0
        %v1859 = vadd.f32 %v1746, %v1858
        %v1860 = vpop.f32.mrb[0].mxu0
        %v1861 = vadd.f32 %v1748, %v1860
        %1862 = vmatprep.mubr.bf16.mxu0 %v786
        %1863 = vmatmul.mubr.bf16.gmra.mrb[0].mxu0 %v785
        %v1864 = vpop.f32.mrb[0].mxu0
        %v1865 = vadd.f32 %v1752, %v1864
        %v1866 = vpop.f32.mrb[0].mxu0
        %v1867 = vadd.f32 %v1754, %v1866
        %v1868 = vpop.f32.mrb[0].mxu0
        %v1869 = vadd.f32 %v1756, %v1868
        %v1870 = vpop.f32.mrb[0].mxu0
        %v1871 = vadd.f32 %v1758, %v1870
        %1872 = vmatprep.mubr.bf16.mxu0 %v790
        %1873 = vmatmul.mubr.bf16.gmra.mrb[0].mxu0 %v789
        %v1874 = vpop.f32.mrb[0].mxu0
        %v1875 = vadd.f32 %v1762, %v1874
        %v1876 = vpop.f32.mrb[0].mxu0
        %v1877 = vadd.f32 %v1764, %v1876
        %v1878 = vpop.f32.mrb[0].mxu0
        %v1879 = vadd.f32 %v1766, %v1878
        %v1880 = vpop.f32.mrb[0].mxu0
        %v1881 = vadd.f32 %v1768, %v1880
        %1882 = vmatprep.mubr.bf16.mxu0 %v794
        %1883 = vmatmul.mubr.bf16.gmra.mrb[0].mxu0 %v793
        %v1884 = vpop.f32.mrb[0].mxu0
        %v1885 = vadd.f32 %v1772, %v1884
        %v1886 = vpop.f32.mrb[0].mxu0
        %v1887 = vadd.f32 %v1774, %v1886
        %v1888 = vpop.f32.mrb[0].mxu0
        %v1889 = vadd.f32 %v1776, %v1888
        %v1890 = vpop.f32.mrb[0].mxu0
        %v1891 = vadd.f32 %v1778, %v1890
        %1892 = vmatprep.mubr.bf16.mxu0 %v798
        %1893 = vmatmul.mubr.bf16.gmra.mrb[0].mxu0 %v797
        %v1894 = vpop.f32.mrb[0].mxu0
        %v1895 = vadd.f32 %v1782, %v1894
        %v1896 = vpop.f32.mrb[0].mxu0
        %v1897 = vadd.f32 %v1784, %v1896
        %v1898 = vpop.f32.mrb[0].mxu0
        %v1899 = vadd.f32 %v1786, %v1898
        %v1900 = vpop.f32.mrb[0].mxu0
        %v1901 = vadd.f32 %v1788, %v1900
        %1902 = vmatprep.mubr.bf16.mxu0 %v802
        %1903 = vmatmul.mubr.bf16.gmra.mrb[0].mxu0 %v801
        %v1904 = vpop.f32.mrb[0].mxu0
        %v1905 = vadd.f32 %v1792, %v1904
        %v1906 = vpop.f32.mrb[0].mxu0
        %v1907 = vadd.f32 %v1794, %v1906
        %v1908 = vpop.f32.mrb[0].mxu0
        %v1909 = vadd.f32 %v1796, %v1908
        %v1910 = vpop.f32.mrb[0].mxu0
        %v1911 = vadd.f32 %v1798, %v1910
        %1912 = vmatprep.mubr.bf16.mxu0 %v806
        %1913 = vmatmul.mubr.bf16.gmra.mrb[0].mxu0 %v805
        %v1914 = vpop.f32.mrb[0].mxu0
        %v1915 = vadd.f32 %v1802, %v1914
        %v1916 = vpop.f32.mrb[0].mxu0
        %v1917 = vadd.f32 %v1804, %v1916
        %v1918 = vpop.f32.mrb[0].mxu0
        %v1919 = vadd.f32 %v1806, %v1918
        %v1920 = vpop.f32.mrb[0].mxu0
        %v1921 = vadd.f32 %v1808, %v1920
        %1922 = vmatprep.mubr.bf16.mxu0 %v810
        %1923 = vmatmul.mubr.bf16.gmra.mrb[0].mxu0 %v809
        %v1924 = vpop.f32.mrb[0].mxu0
        %v1925 = vadd.f32 %v1812, %v1924
        %v1926 = vpop.f32.mrb[0].mxu0
        %v1927 = vadd.f32 %v1814, %v1926
        %v1928 = vpop.f32.mrb[0].mxu0
        %v1929 = vadd.f32 %v1816, %v1928
        %v1930 = vpop.f32.mrb[0].mxu0
        %v1931 = vadd.f32 %v1818, %v1930
        %1932 = vdwg.mxu0
        %1933 = vmatprep.subr.bf16.mxu0 %v1454
        %1934 = vmatpush1.bf16.msra.mxu0 %v1453
        %1935 = vmatprep.subr.bf16.mxu0 %v1458
        %1936 = vmatpush1.bf16.msra.mxu0 %v1457
        %1937 = vmatprep.subr.bf16.mxu0 %v1462
        %1938 = vmatpush1.bf16.msra.mxu0 %v1461
        %1939 = vmatprep.subr.bf16.mxu0 %v1466
        %1940 = vmatpush1.bf16.msra.mxu0 %v1465
        %1941 = vmatprep.subr.bf16.mxu0 %v1470
        %1942 = vmatpush1.bf16.msra.mxu0 %v1469
        %1943 = vmatprep.subr.bf16.mxu0 %v1474
        %1944 = vmatpush1.bf16.msra.mxu0 %v1473
        %1945 = vmatprep.subr.bf16.mxu0 %v1478
        %1946 = vmatpush1.bf16.msra.mxu0 %v1477
        %1947 = vmatprep.subr.bf16.mxu0 %v1482
        %1948 = vmatpush1.bf16.msra.mxu0 %v1481
        %1949 = vmatprep.subr.bf16.mxu0 %v1486
        %1950 = vmatpush1.bf16.msra.mxu0 %v1485
        %1951 = vmatprep.subr.bf16.mxu0 %v1490
        %1952 = vmatpush1.bf16.msra.mxu0 %v1489
        %1953 = vmatprep.subr.bf16.mxu0 %v1494
        %1954 = vmatpush1.bf16.msra.mxu0 %v1493
        %1955 = vmatprep.subr.bf16.mxu0 %v1498
        %1956 = vmatpush1.bf16.msra.mxu0 %v1497
        %1957 = vmatprep.subr.bf16.mxu0 %v1502
        %1958 = vmatpush1.bf16.msra.mxu0 %v1501
        %1959 = vmatprep.subr.bf16.mxu0 %v1506
        %1960 = vmatpush1.bf16.msra.mxu0 %v1505
        %1961 = vmatprep.subr.bf16.mxu0 %v1510
        %1962 = vmatpush1.bf16.msra.mxu0 %v1509
        %1963 = vmatprep.subr.bf16.mxu0 %v1514
        %1964 = vmatpush1.bf16.msra.mxu0 %v1513
        %1965 = vmatprep.mubr.bf16.mxu0 %v780
        %1966 = vmatmul.mubr.bf16.gmra.mrb[0].mxu0 %v779
        %v1967 = vpop.f32.mrb[0].mxu0
        %v1968 = vadd.f32 0.0, %v1967
        %v1969 = vpop.f32.mrb[0].mxu0
        %v1970 = vadd.f32 0.0, %v1969
        %v1971 = vpop.f32.mrb[0].mxu0
        %v1972 = vadd.f32 0.0, %v1971
        %v1973 = vpop.f32.mrb[0].mxu0
        %v1974 = vadd.f32 0.0, %v1973
        %1975 = vmatprep.mubr.bf16.mxu0 %v784
        %1976 = vmatmul.mubr.bf16.gmra.mrb[0].mxu0 %v783
        %v1977 = vpop.f32.mrb[0].mxu0
        %v1978 = vadd.f32 0.0, %v1977
        %v1979 = vpop.f32.mrb[0].mxu0
        %v1980 = vadd.f32 0.0, %v1979
        %v1981 = vpop.f32.mrb[0].mxu0
        %v1982 = vadd.f32 0.0, %v1981
        %v1983 = vpop.f32.mrb[0].mxu0
        %v1984 = vadd.f32 0.0, %v1983
        %1985 = vmatprep.mubr.bf16.mxu0 %v788
        %1986 = vmatmul.mubr.bf16.gmra.mrb[0].mxu0 %v787
        %v1987 = vpop.f32.mrb[0].mxu0
        %v1988 = vadd.f32 0.0, %v1987
        %v1989 = vpop.f32.mrb[0].mxu0
        %v1990 = vadd.f32 0.0, %v1989
        %v1991 = vpop.f32.mrb[0].mxu0
        %v1992 = vadd.f32 0.0, %v1991
        %v1993 = vpop.f32.mrb[0].mxu0
        %v1994 = vadd.f32 0.0, %v1993
        %1995 = vmatprep.mubr.bf16.mxu0 %v792
        %1996 = vmatmul.mubr.bf16.gmra.mrb[0].mxu0 %v791
        %v1997 = vpop.f32.mrb[0].mxu0
        %v1998 = vadd.f32 0.0, %v1997
        %v1999 = vpop.f32.mrb[0].mxu0
        %v2000 = vadd.f32 0.0, %v1999
        %v2001 = vpop.f32.mrb[0].mxu0
        %v2002 = vadd.f32 0.0, %v2001
        %v2003 = vpop.f32.mrb[0].mxu0
        %v2004 = vadd.f32 0.0, %v2003
        %2005 = vmatprep.mubr.bf16.mxu0 %v796
        %2006 = vmatmul.mubr.bf16.gmra.mrb[0].mxu0 %v795
        %v2007 = vpop.f32.mrb[0].mxu0
        %v2008 = vadd.f32 0.0, %v2007
        %v2009 = vpop.f32.mrb[0].mxu0
        %v2010 = vadd.f32 0.0, %v2009
        %v2011 = vpop.f32.mrb[0].mxu0
        %v2012 = vadd.f32 0.0, %v2011
        %v2013 = vpop.f32.mrb[0].mxu0
        %v2014 = vadd.f32 0.0, %v2013
        %2015 = vmatprep.mubr.bf16.mxu0 %v800
        %2016 = vmatmul.mubr.bf16.gmra.mrb[0].mxu0 %v799
        %v2017 = vpop.f32.mrb[0].mxu0
        %v2018 = vadd.f32 0.0, %v2017
        %v2019 = vpop.f32.mrb[0].mxu0
        %v2020 = vadd.f32 0.0, %v2019
        %v2021 = vpop.f32.mrb[0].mxu0
        %v2022 = vadd.f32 0.0, %v2021
        %v2023 = vpop.f32.mrb[0].mxu0
        %v2024 = vadd.f32 0.0, %v2023
        %2025 = vmatprep.mubr.bf16.mxu0 %v804
        %2026 = vmatmul.mubr.bf16.gmra.mrb[0].mxu0 %v803
        %v2027 = vpop.f32.mrb[0].mxu0
        %v2028 = vadd.f32 0.0, %v2027
        %v2029 = vpop.f32.mrb[0].mxu0
        %v2030 = vadd.f32 0.0, %v2029
        %v2031 = vpop.f32.mrb[0].mxu0
        %v2032 = vadd.f32 0.0, %v2031
        %v2033 = vpop.f32.mrb[0].mxu0
        %v2034 = vadd.f32 0.0, %v2033
        %2035 = vmatprep.mubr.bf16.mxu0 %v808
        %2036 = vmatmul.mubr.bf16.gmra.mrb[0].mxu0 %v807
        %v2037 = vpop.f32.mrb[0].mxu0
        %v2038 = vadd.f32 0.0, %v2037
        %v2039 = vpop.f32.mrb[0].mxu0
        %v2040 = vadd.f32 0.0, %v2039
        %v2041 = vpop.f32.mrb[0].mxu0
        %v2042 = vadd.f32 0.0, %v2041
        %v2043 = vpop.f32.mrb[0].mxu0
        %v2044 = vadd.f32 0.0, %v2043
        %2045 = vdwg.mxu0
        %2046 = vmatprep.subr.bf16.mxu0 %v1518
        %2047 = vmatpush1.bf16.msra.mxu0 %v1517
        %2048 = vmatprep.subr.bf16.mxu0 %v1522
        %2049 = vmatpush1.bf16.msra.mxu0 %v1521
        %2050 = vmatprep.subr.bf16.mxu0 %v1526
        %2051 = vmatpush1.bf16.msra.mxu0 %v1525
        %2052 = vmatprep.subr.bf16.mxu0 %v1530
        %2053 = vmatpush1.bf16.msra.mxu0 %v1529
        %2054 = vmatprep.subr.bf16.mxu0 %v1534
        %2055 = vmatpush1.bf16.msra.mxu0 %v1533
        %2056 = vmatprep.subr.bf16.mxu0 %v1538
        %2057 = vmatpush1.bf16.msra.mxu0 %v1537
        %2058 = vmatprep.subr.bf16.mxu0 %v1542
        %2059 = vmatpush1.bf16.msra.mxu0 %v1541
        %2060 = vmatprep.subr.bf16.mxu0 %v1546
        %2061 = vmatpush1.bf16.msra.mxu0 %v1545
        %2062 = vmatprep.subr.bf16.mxu0 %v1550
        %2063 = vmatpush1.bf16.msra.mxu0 %v1549
        %2064 = vmatprep.subr.bf16.mxu0 %v1554
        %2065 = vmatpush1.bf16.msra.mxu0 %v1553
        %2066 = vmatprep.subr.bf16.mxu0 %v1558
        %2067 = vmatpush1.bf16.msra.mxu0 %v1557
        %2068 = vmatprep.subr.bf16.mxu0 %v1562
        %2069 = vmatpush1.bf16.msra.mxu0 %v1561
        %2070 = vmatprep.subr.bf16.mxu0 %v1566
        %2071 = vmatpush1.bf16.msra.mxu0 %v1565
        %2072 = vmatprep.subr.bf16.mxu0 %v1570
        %2073 = vmatpush1.bf16.msra.mxu0 %v1569
        %2074 = vmatprep.subr.bf16.mxu0 %v1574
        %2075 = vmatpush1.bf16.msra.mxu0 %v1573
        %2076 = vmatprep.subr.bf16.mxu0 %v1578
        %2077 = vmatpush1.bf16.msra.mxu0 %v1577
        %2078 = vmatprep.mubr.bf16.mxu0 %v782
        %2079 = vmatmul.mubr.bf16.gmra.mrb[0].mxu0 %v781
        %v2080 = vpop.f32.mrb[0].mxu0
        %v2081 = vadd.f32 %v1968, %v2080
        %v2082 = vpop.f32.mrb[0].mxu0
        %v2083 = vadd.f32 %v1970, %v2082
        %v2084 = vpop.f32.mrb[0].mxu0
        %v2085 = vadd.f32 %v1972, %v2084
        %v2086 = vpop.f32.mrb[0].mxu0
        %v2087 = vadd.f32 %v1974, %v2086
        %2088 = vmatprep.mubr.bf16.mxu0 %v786
        %2089 = vmatmul.mubr.bf16.gmra.mrb[0].mxu0 %v785
        %v2090 = vpop.f32.mrb[0].mxu0
        %v2091 = vadd.f32 %v1978, %v2090
        %v2092 = vpop.f32.mrb[0].mxu0
        %v2093 = vadd.f32 %v1980, %v2092
        %v2094 = vpop.f32.mrb[0].mxu0
        %v2095 = vadd.f32 %v1982, %v2094
        %v2096 = vpop.f32.mrb[0].mxu0
        %v2097 = vadd.f32 %v1984, %v2096
        %2098 = vmatprep.mubr.bf16.mxu0 %v790
        %2099 = vmatmul.mubr.bf16.gmra.mrb[0].mxu0 %v789
        %v2100 = vpop.f32.mrb[0].mxu0
        %v2101 = vadd.f32 %v1988, %v2100
        %v2102 = vpop.f32.mrb[0].mxu0
        %v2103 = vadd.f32 %v1990, %v2102
        %v2104 = vpop.f32.mrb[0].mxu0
        %v2105 = vadd.f32 %v1992, %v2104
        %v2106 = vpop.f32.mrb[0].mxu0
        %v2107 = vadd.f32 %v1994, %v2106
        %2108 = vmatprep.mubr.bf16.mxu0 %v794
        %2109 = vmatmul.mubr.bf16.gmra.mrb[0].mxu0 %v793
        %v2110 = vpop.f32.mrb[0].mxu0
        %v2111 = vadd.f32 %v1998, %v2110
        %v2112 = vpop.f32.mrb[0].mxu0
        %v2113 = vadd.f32 %v2000, %v2112
        %v2114 = vpop.f32.mrb[0].mxu0
        %v2115 = vadd.f32 %v2002, %v2114
        %v2116 = vpop.f32.mrb[0].mxu0
        %v2117 = vadd.f32 %v2004, %v2116
        %2118 = vmatprep.mubr.bf16.mxu0 %v798
        %2119 = vmatmul.mubr.bf16.gmra.mrb[0].mxu0 %v797
        %v2120 = vpop.f32.mrb[0].mxu0
        %v2121 = vadd.f32 %v2008, %v2120
        %v2122 = vpop.f32.mrb[0].mxu0
        %v2123 = vadd.f32 %v2010, %v2122
        %v2124 = vpop.f32.mrb[0].mxu0
        %v2125 = vadd.f32 %v2012, %v2124
        %v2126 = vpop.f32.mrb[0].mxu0
        %v2127 = vadd.f32 %v2014, %v2126
        %2128 = vmatprep.mubr.bf16.mxu0 %v802
        %2129 = vmatmul.mubr.bf16.gmra.mrb[0].mxu0 %v801
        %v2130 = vpop.f32.mrb[0].mxu0
        %v2131 = vadd.f32 %v2018, %v2130
        %v2132 = vpop.f32.mrb[0].mxu0
        %v2133 = vadd.f32 %v2020, %v2132
        %v2134 = vpop.f32.mrb[0].mxu0
        %v2135 = vadd.f32 %v2022, %v2134
        %v2136 = vpop.f32.mrb[0].mxu0
        %v2137 = vadd.f32 %v2024, %v2136
        %2138 = vmatprep.mubr.bf16.mxu0 %v806
        %2139 = vmatmul.mubr.bf16.gmra.mrb[0].mxu0 %v805
        %v2140 = vpop.f32.mrb[0].mxu0
        %v2141 = vadd.f32 %v2028, %v2140
        %v2142 = vpop.f32.mrb[0].mxu0
        %v2143 = vadd.f32 %v2030, %v2142
        %v2144 = vpop.f32.mrb[0].mxu0
        %v2145 = vadd.f32 %v2032, %v2144
        %v2146 = vpop.f32.mrb[0].mxu0
        %v2147 = vadd.f32 %v2034, %v2146
        %2148 = vmatprep.mubr.bf16.mxu0 %v810
        %2149 = vmatmul.mubr.bf16.gmra.mrb[0].mxu0 %v809
        %v2150 = vpop.f32.mrb[0].mxu0
        %v2151 = vadd.f32 %v2038, %v2150
        %v2152 = vpop.f32.mrb[0].mxu0
        %v2153 = vadd.f32 %v2040, %v2152
        %v2154 = vpop.f32.mrb[0].mxu0
        %v2155 = vadd.f32 %v2042, %v2154
        %v2156 = vpop.f32.mrb[0].mxu0
        %v2157 = vadd.f32 %v2044, %v2156
        %2158 = vdwg.mxu0
        %v2287 = vunpack.c.l.b16 %v811
        %v2288 = vunpack.c.h.b16 %v811
        %v2289 = vunpack.c.l.b16 %v812
        %v2290 = vunpack.c.h.b16 %v812
        %v2291 = vunpack.c.l.b16 %v813
        %v2292 = vunpack.c.h.b16 %v813
        %v2293 = vunpack.c.l.b16 %v814
        %v2294 = vunpack.c.h.b16 %v814
        %v2295 = vunpack.c.l.b16 %v815
        %v2296 = vunpack.c.h.b16 %v815
        %v2297 = vunpack.c.l.b16 %v816
        %v2298 = vunpack.c.h.b16 %v816
        %v2299 = vunpack.c.l.b16 %v817
        %v2300 = vunpack.c.h.b16 %v817
        %v2301 = vunpack.c.l.b16 %v818
        %v2302 = vunpack.c.h.b16 %v818
        %v2303 = vunpack.c.l.b16 %v819
        %v2304 = vunpack.c.h.b16 %v819
        %v2305 = vunpack.c.l.b16 %v820
        %v2306 = vunpack.c.h.b16 %v820
        %v2307 = vunpack.c.l.b16 %v821
        %v2308 = vunpack.c.h.b16 %v821
        %v2309 = vunpack.c.l.b16 %v822
        %v2310 = vunpack.c.h.b16 %v822
        %v2311 = vunpack.c.l.b16 %v823
        %v2312 = vunpack.c.h.b16 %v823
        %v2313 = vunpack.c.l.b16 %v824
        %v2314 = vunpack.c.h.b16 %v824
        %v2315 = vunpack.c.l.b16 %v825
        %v2316 = vunpack.c.h.b16 %v825
        %v2317 = vunpack.c.l.b16 %v826
        %v2318 = vunpack.c.h.b16 %v826
        %v2319 = vunpack.c.l.b16 %v827
        %v2320 = vunpack.c.h.b16 %v827
        %v2321 = vunpack.c.l.b16 %v828
        %v2322 = vunpack.c.h.b16 %v828
        %v2323 = vunpack.c.l.b16 %v829
        %v2324 = vunpack.c.h.b16 %v829
        %v2325 = vunpack.c.l.b16 %v830
        %v2326 = vunpack.c.h.b16 %v830
        %v2327 = vunpack.c.l.b16 %v831
        %v2328 = vunpack.c.h.b16 %v831
        %v2329 = vunpack.c.l.b16 %v832
        %v2330 = vunpack.c.h.b16 %v832
        %v2331 = vunpack.c.l.b16 %v833
        %v2332 = vunpack.c.h.b16 %v833
        %v2333 = vunpack.c.l.b16 %v834
        %v2334 = vunpack.c.h.b16 %v834
        %v2335 = vunpack.c.l.b16 %v835
        %v2336 = vunpack.c.h.b16 %v835
        %v2337 = vunpack.c.l.b16 %v836
        %v2338 = vunpack.c.h.b16 %v836
        %v2339 = vunpack.c.l.b16 %v837
        %v2340 = vunpack.c.h.b16 %v837
        %v2341 = vunpack.c.l.b16 %v838
        %v2342 = vunpack.c.h.b16 %v838
        %v2343 = vunpack.c.l.b16 %v839
        %v2344 = vunpack.c.h.b16 %v839
        %v2345 = vunpack.c.l.b16 %v840
        %v2346 = vunpack.c.h.b16 %v840
        %v2347 = vunpack.c.l.b16 %v841
        %v2348 = vunpack.c.h.b16 %v841
        %v2349 = vunpack.c.l.b16 %v842
        %v2350 = vunpack.c.h.b16 %v842
        %v2351 = vunpack.c.l.b16 %v843
        %v2352 = vunpack.c.h.b16 %v843
        %v2353 = vunpack.c.l.b16 %v844
        %v2354 = vunpack.c.h.b16 %v844
        %v2355 = vunpack.c.l.b16 %v845
        %v2356 = vunpack.c.h.b16 %v845
        %v2357 = vunpack.c.l.b16 %v846
        %v2358 = vunpack.c.h.b16 %v846
        %v2359 = vunpack.c.l.b16 %v847
        %v2360 = vunpack.c.h.b16 %v847
        %v2361 = vunpack.c.l.b16 %v848
        %v2362 = vunpack.c.h.b16 %v848
        %v2363 = vunpack.c.l.b16 %v849
        %v2364 = vunpack.c.h.b16 %v849
        %v2365 = vunpack.c.l.b16 %v850
        %v2366 = vunpack.c.h.b16 %v850
        %v2367 = vunpack.c.l.b16 %v851
        %v2368 = vunpack.c.h.b16 %v851
        %v2369 = vunpack.c.l.b16 %v852
        %v2370 = vunpack.c.h.b16 %v852
        %v2371 = vunpack.c.l.b16 %v853
        %v2372 = vunpack.c.h.b16 %v853
        %v2373 = vunpack.c.l.b16 %v854
        %v2374 = vunpack.c.h.b16 %v854
        %v2375 = vunpack.c.l.b16 %v855
        %v2376 = vunpack.c.h.b16 %v855
        %v2377 = vunpack.c.l.b16 %v856
        %v2378 = vunpack.c.h.b16 %v856
        %v2379 = vunpack.c.l.b16 %v857
        %v2380 = vunpack.c.h.b16 %v857
        %v2381 = vunpack.c.l.b16 %v858
        %v2382 = vunpack.c.h.b16 %v858
        %v2383 = vunpack.c.l.b16 %v859
        %v2384 = vunpack.c.h.b16 %v859
        %v2385 = vunpack.c.l.b16 %v860
        %v2386 = vunpack.c.h.b16 %v860
        %v2387 = vunpack.c.l.b16 %v861
        %v2388 = vunpack.c.h.b16 %v861
        %v2389 = vunpack.c.l.b16 %v862
        %v2390 = vunpack.c.h.b16 %v862
        %v2391 = vunpack.c.l.b16 %v863
        %v2392 = vunpack.c.h.b16 %v863
        %v2393 = vunpack.c.l.b16 %v864
        %v2394 = vunpack.c.h.b16 %v864
        %v2395 = vunpack.c.l.b16 %v865
        %v2396 = vunpack.c.h.b16 %v865
        %v2397 = vunpack.c.l.b16 %v866
        %v2398 = vunpack.c.h.b16 %v866
        %v2399 = vunpack.c.l.b16 %v867
        %v2400 = vunpack.c.h.b16 %v867
        %v2401 = vunpack.c.l.b16 %v868
        %v2402 = vunpack.c.h.b16 %v868
        %v2403 = vunpack.c.l.b16 %v869
        %v2404 = vunpack.c.h.b16 %v869
        %v2405 = vunpack.c.l.b16 %v870
        %v2406 = vunpack.c.h.b16 %v870
        %v2407 = vunpack.c.l.b16 %v871
        %v2408 = vunpack.c.h.b16 %v871
        %v2409 = vunpack.c.l.b16 %v872
        %v2410 = vunpack.c.h.b16 %v872
        %v2411 = vunpack.c.l.b16 %v873
        %v2412 = vunpack.c.h.b16 %v873
        %v2413 = vunpack.c.l.b16 %v874
        %v2414 = vunpack.c.h.b16 %v874
        %v2415 = vunpack.c.l.b16 %v875
        %v2416 = vunpack.c.h.b16 %v875
        %v2417 = vunpack.c.l.b16 %v876
        %v2418 = vunpack.c.h.b16 %v876
        %v2419 = vunpack.c.l.b16 %v877
        %v2420 = vunpack.c.h.b16 %v877
        %v2421 = vunpack.c.l.b16 %v878
        %v2422 = vunpack.c.h.b16 %v878
        %v2423 = vunpack.c.l.b16 %v879
        %v2424 = vunpack.c.h.b16 %v879
        %v2425 = vunpack.c.l.b16 %v880
        %v2426 = vunpack.c.h.b16 %v880
        %v2427 = vunpack.c.l.b16 %v881
        %v2428 = vunpack.c.h.b16 %v881
        %v2429 = vunpack.c.l.b16 %v882
        %v2430 = vunpack.c.h.b16 %v882
        %v2431 = vunpack.c.l.b16 %v883
        %v2432 = vunpack.c.h.b16 %v883
        %v2433 = vunpack.c.l.b16 %v884
        %v2434 = vunpack.c.h.b16 %v884
        %v2435 = vunpack.c.l.b16 %v885
        %v2436 = vunpack.c.h.b16 %v885
        %v2437 = vunpack.c.l.b16 %v886
        %v2438 = vunpack.c.h.b16 %v886
        %v2439 = vunpack.c.l.b16 %v887
        %v2440 = vunpack.c.h.b16 %v887
        %v2441 = vunpack.c.l.b16 %v888
        %v2442 = vunpack.c.h.b16 %v888
        %v2443 = vunpack.c.l.b16 %v889
        %v2444 = vunpack.c.h.b16 %v889
        %v2445 = vunpack.c.l.b16 %v890
        %v2446 = vunpack.c.h.b16 %v890
        %v2447 = vunpack.c.l.b16 %v891
        %v2448 = vunpack.c.h.b16 %v891
        %v2449 = vunpack.c.l.b16 %v892
        %v2450 = vunpack.c.h.b16 %v892
        %v2451 = vunpack.c.l.b16 %v893
        %v2452 = vunpack.c.h.b16 %v893
        %v2453 = vunpack.c.l.b16 %v894
        %v2454 = vunpack.c.h.b16 %v894
        %v2455 = vunpack.c.l.b16 %v895
        %v2456 = vunpack.c.h.b16 %v895
        %v2457 = vunpack.c.l.b16 %v896
        %v2458 = vunpack.c.h.b16 %v896
        %v2459 = vunpack.c.l.b16 %v897
        %v2460 = vunpack.c.h.b16 %v897
        %v2461 = vunpack.c.l.b16 %v898
        %v2462 = vunpack.c.h.b16 %v898
        %v2463 = vunpack.c.l.b16 %v899
        %v2464 = vunpack.c.h.b16 %v899
        %v2465 = vunpack.c.l.b16 %v900
        %v2466 = vunpack.c.h.b16 %v900
        %v2467 = vunpack.c.l.b16 %v901
        %v2468 = vunpack.c.h.b16 %v901
        %v2469 = vunpack.c.l.b16 %v902
        %v2470 = vunpack.c.h.b16 %v902
        %v2471 = vunpack.c.l.b16 %v903
        %v2472 = vunpack.c.h.b16 %v903
        %v2473 = vunpack.c.l.b16 %v904
        %v2474 = vunpack.c.h.b16 %v904
        %v2475 = vunpack.c.l.b16 %v905
        %v2476 = vunpack.c.h.b16 %v905
        %v2477 = vunpack.c.l.b16 %v906
        %v2478 = vunpack.c.h.b16 %v906
        %v2479 = vunpack.c.l.b16 %v907
        %v2480 = vunpack.c.h.b16 %v907
        %v2481 = vunpack.c.l.b16 %v908
        %v2482 = vunpack.c.h.b16 %v908
        %v2483 = vunpack.c.l.b16 %v909
        %v2484 = vunpack.c.h.b16 %v909
        %v2485 = vunpack.c.l.b16 %v910
        %v2486 = vunpack.c.h.b16 %v910
        %v2487 = vunpack.c.l.b16 %v911
        %v2488 = vunpack.c.h.b16 %v911
        %v2489 = vunpack.c.l.b16 %v912
        %v2490 = vunpack.c.h.b16 %v912
        %v2491 = vunpack.c.l.b16 %v913
        %v2492 = vunpack.c.h.b16 %v913
        %v2493 = vunpack.c.l.b16 %v914
        %v2494 = vunpack.c.h.b16 %v914
        %v2495 = vunpack.c.l.b16 %v915
        %v2496 = vunpack.c.h.b16 %v915
        %v2497 = vunpack.c.l.b16 %v916
        %v2498 = vunpack.c.h.b16 %v916
        %v2499 = vunpack.c.l.b16 %v917
        %v2500 = vunpack.c.h.b16 %v917
        %v2501 = vunpack.c.l.b16 %v918
        %v2502 = vunpack.c.h.b16 %v918
        %v2503 = vunpack.c.l.b16 %v919
        %v2504 = vunpack.c.h.b16 %v919
        %v2505 = vunpack.c.l.b16 %v920
        %v2506 = vunpack.c.h.b16 %v920
        %v2507 = vunpack.c.l.b16 %v921
        %v2508 = vunpack.c.h.b16 %v921
        %v2509 = vunpack.c.l.b16 %v922
        %v2510 = vunpack.c.h.b16 %v922
        %v2511 = vunpack.c.l.b16 %v923
        %v2512 = vunpack.c.h.b16 %v923
        %v2513 = vunpack.c.l.b16 %v924
        %v2514 = vunpack.c.h.b16 %v924
        %v2515 = vunpack.c.l.b16 %v925
        %v2516 = vunpack.c.h.b16 %v925
        %v2517 = vunpack.c.l.b16 %v926
        %v2518 = vunpack.c.h.b16 %v926
        %v2519 = vunpack.c.l.b16 %v927
        %v2520 = vunpack.c.h.b16 %v927
        %v2521 = vunpack.c.l.b16 %v928
        %v2522 = vunpack.c.h.b16 %v928
        %v2523 = vunpack.c.l.b16 %v929
        %v2524 = vunpack.c.h.b16 %v929
        %v2525 = vunpack.c.l.b16 %v930
        %v2526 = vunpack.c.h.b16 %v930
        %v2527 = vunpack.c.l.b16 %v931
        %v2528 = vunpack.c.h.b16 %v931
        %v2529 = vunpack.c.l.b16 %v932
        %v2530 = vunpack.c.h.b16 %v932
        %v2531 = vunpack.c.l.b16 %v933
        %v2532 = vunpack.c.h.b16 %v933
        %v2533 = vunpack.c.l.b16 %v934
        %v2534 = vunpack.c.h.b16 %v934
        %v2535 = vunpack.c.l.b16 %v935
        %v2536 = vunpack.c.h.b16 %v935
        %v2537 = vunpack.c.l.b16 %v936
        %v2538 = vunpack.c.h.b16 %v936
        %v2539 = vunpack.c.l.b16 %v937
        %v2540 = vunpack.c.h.b16 %v937
        %v2541 = vunpack.c.l.b16 %v938
        %v2542 = vunpack.c.h.b16 %v938
        %v2543 = vpack.c.b16 %v2291, %v2287
        %v2544 = vpack.c.b16 %v2292, %v2288
        %v2545 = vpack.c.b16 %v2293, %v2289
        %v2546 = vpack.c.b16 %v2294, %v2290
        %v2547 = vpack.c.b16 %v2299, %v2295
        %v2548 = vpack.c.b16 %v2300, %v2296
        %v2549 = vpack.c.b16 %v2301, %v2297
        %v2550 = vpack.c.b16 %v2302, %v2298
        %v2551 = vpack.c.b16 %v2307, %v2303
        %v2552 = vpack.c.b16 %v2308, %v2304
        %v2553 = vpack.c.b16 %v2309, %v2305
        %v2554 = vpack.c.b16 %v2310, %v2306
        %v2555 = vpack.c.b16 %v2315, %v2311
        %v2556 = vpack.c.b16 %v2316, %v2312
        %v2557 = vpack.c.b16 %v2317, %v2313
        %v2558 = vpack.c.b16 %v2318, %v2314
        %v2559 = vpack.c.b16 %v2323, %v2319
        %v2560 = vpack.c.b16 %v2324, %v2320
        %v2561 = vpack.c.b16 %v2325, %v2321
        %v2562 = vpack.c.b16 %v2326, %v2322
        %v2563 = vpack.c.b16 %v2331, %v2327
        %v2564 = vpack.c.b16 %v2332, %v2328
        %v2565 = vpack.c.b16 %v2333, %v2329
        %v2566 = vpack.c.b16 %v2334, %v2330
        %v2567 = vpack.c.b16 %v2339, %v2335
        %v2568 = vpack.c.b16 %v2340, %v2336
        %v2569 = vpack.c.b16 %v2341, %v2337
        %v2570 = vpack.c.b16 %v2342, %v2338
        %v2571 = vpack.c.b16 %v2347, %v2343
        %v2572 = vpack.c.b16 %v2348, %v2344
        %v2573 = vpack.c.b16 %v2349, %v2345
        %v2574 = vpack.c.b16 %v2350, %v2346
        %v2575 = vpack.c.b16 %v2355, %v2351
        %v2576 = vpack.c.b16 %v2356, %v2352
        %v2577 = vpack.c.b16 %v2357, %v2353
        %v2578 = vpack.c.b16 %v2358, %v2354
        %v2579 = vpack.c.b16 %v2363, %v2359
        %v2580 = vpack.c.b16 %v2364, %v2360
        %v2581 = vpack.c.b16 %v2365, %v2361
        %v2582 = vpack.c.b16 %v2366, %v2362
        %v2583 = vpack.c.b16 %v2371, %v2367
        %v2584 = vpack.c.b16 %v2372, %v2368
        %v2585 = vpack.c.b16 %v2373, %v2369
        %v2586 = vpack.c.b16 %v2374, %v2370
        %v2587 = vpack.c.b16 %v2379, %v2375
        %v2588 = vpack.c.b16 %v2380, %v2376
        %v2589 = vpack.c.b16 %v2381, %v2377
        %v2590 = vpack.c.b16 %v2382, %v2378
        %v2591 = vpack.c.b16 %v2387, %v2383
        %v2592 = vpack.c.b16 %v2388, %v2384
        %v2593 = vpack.c.b16 %v2389, %v2385
        %v2594 = vpack.c.b16 %v2390, %v2386
        %v2595 = vpack.c.b16 %v2395, %v2391
        %v2596 = vpack.c.b16 %v2396, %v2392
        %v2597 = vpack.c.b16 %v2397, %v2393
        %v2598 = vpack.c.b16 %v2398, %v2394
        %v2599 = vpack.c.b16 %v2403, %v2399
        %v2600 = vpack.c.b16 %v2404, %v2400
        %v2601 = vpack.c.b16 %v2405, %v2401
        %v2602 = vpack.c.b16 %v2406, %v2402
        %v2603 = vpack.c.b16 %v2411, %v2407
        %v2604 = vpack.c.b16 %v2412, %v2408
        %v2605 = vpack.c.b16 %v2413, %v2409
        %v2606 = vpack.c.b16 %v2414, %v2410
        %v2607 = vpack.c.b16 %v2419, %v2415
        %v2608 = vpack.c.b16 %v2420, %v2416
        %v2609 = vpack.c.b16 %v2421, %v2417
        %v2610 = vpack.c.b16 %v2422, %v2418
        %v2611 = vpack.c.b16 %v2427, %v2423
        %v2612 = vpack.c.b16 %v2428, %v2424
        %v2613 = vpack.c.b16 %v2429, %v2425
        %v2614 = vpack.c.b16 %v2430, %v2426
        %v2615 = vpack.c.b16 %v2435, %v2431
        %v2616 = vpack.c.b16 %v2436, %v2432
        %v2617 = vpack.c.b16 %v2437, %v2433
        %v2618 = vpack.c.b16 %v2438, %v2434
        %v2619 = vpack.c.b16 %v2443, %v2439
        %v2620 = vpack.c.b16 %v2444, %v2440
        %v2621 = vpack.c.b16 %v2445, %v2441
        %v2622 = vpack.c.b16 %v2446, %v2442
        %v2623 = vpack.c.b16 %v2451, %v2447
        %v2624 = vpack.c.b16 %v2452, %v2448
        %v2625 = vpack.c.b16 %v2453, %v2449
        %v2626 = vpack.c.b16 %v2454, %v2450
        %v2627 = vpack.c.b16 %v2459, %v2455
        %v2628 = vpack.c.b16 %v2460, %v2456
        %v2629 = vpack.c.b16 %v2461, %v2457
        %v2630 = vpack.c.b16 %v2462, %v2458
        %v2631 = vpack.c.b16 %v2467, %v2463
        %v2632 = vpack.c.b16 %v2468, %v2464
        %v2633 = vpack.c.b16 %v2469, %v2465
        %v2634 = vpack.c.b16 %v2470, %v2466
        %v2635 = vpack.c.b16 %v2475, %v2471
        %v2636 = vpack.c.b16 %v2476, %v2472
        %v2637 = vpack.c.b16 %v2477, %v2473
        %v2638 = vpack.c.b16 %v2478, %v2474
        %v2639 = vpack.c.b16 %v2483, %v2479
        %v2640 = vpack.c.b16 %v2484, %v2480
        %v2641 = vpack.c.b16 %v2485, %v2481
        %v2642 = vpack.c.b16 %v2486, %v2482
        %v2643 = vpack.c.b16 %v2491, %v2487
        %v2644 = vpack.c.b16 %v2492, %v2488
        %v2645 = vpack.c.b16 %v2493, %v2489
        %v2646 = vpack.c.b16 %v2494, %v2490
        %v2647 = vpack.c.b16 %v2499, %v2495
        %v2648 = vpack.c.b16 %v2500, %v2496
        %v2649 = vpack.c.b16 %v2501, %v2497
        %v2650 = vpack.c.b16 %v2502, %v2498
        %v2651 = vpack.c.b16 %v2507, %v2503
        %v2652 = vpack.c.b16 %v2508, %v2504
        %v2653 = vpack.c.b16 %v2509, %v2505
        %v2654 = vpack.c.b16 %v2510, %v2506
        %v2655 = vpack.c.b16 %v2515, %v2511
        %v2656 = vpack.c.b16 %v2516, %v2512
        %v2657 = vpack.c.b16 %v2517, %v2513
        %v2658 = vpack.c.b16 %v2518, %v2514
        %v2659 = vpack.c.b16 %v2523, %v2519
        %v2660 = vpack.c.b16 %v2524, %v2520
        %v2661 = vpack.c.b16 %v2525, %v2521
        %v2662 = vpack.c.b16 %v2526, %v2522
        %v2663 = vpack.c.b16 %v2531, %v2527
        %v2664 = vpack.c.b16 %v2532, %v2528
        %v2665 = vpack.c.b16 %v2533, %v2529
        %v2666 = vpack.c.b16 %v2534, %v2530
        %v2667 = vpack.c.b16 %v2539, %v2535
        %v2668 = vpack.c.b16 %v2540, %v2536
        %v2669 = vpack.c.b16 %v2541, %v2537
        %v2670 = vpack.c.b16 %v2542, %v2538
        %2799 = vmatprep.subr.bf16.mxu0 %v2544
        %2800 = vmatpush1.bf16.msra.mxu0 %v2543
        %2801 = vmatprep.subr.bf16.mxu0 %v2548
        %2802 = vmatpush1.bf16.msra.mxu0 %v2547
        %2803 = vmatprep.subr.bf16.mxu0 %v2552
        %2804 = vmatpush1.bf16.msra.mxu0 %v2551
        %2805 = vmatprep.subr.bf16.mxu0 %v2556
        %2806 = vmatpush1.bf16.msra.mxu0 %v2555
        %2807 = vmatprep.subr.bf16.mxu0 %v2560
        %2808 = vmatpush1.bf16.msra.mxu0 %v2559
        %2809 = vmatprep.subr.bf16.mxu0 %v2564
        %2810 = vmatpush1.bf16.msra.mxu0 %v2563
        %2811 = vmatprep.subr.bf16.mxu0 %v2568
        %2812 = vmatpush1.bf16.msra.mxu0 %v2567
        %2813 = vmatprep.subr.bf16.mxu0 %v2572
        %2814 = vmatpush1.bf16.msra.mxu0 %v2571
        %2815 = vmatprep.subr.bf16.mxu0 %v2576
        %2816 = vmatpush1.bf16.msra.mxu0 %v2575
        %2817 = vmatprep.subr.bf16.mxu0 %v2580
        %2818 = vmatpush1.bf16.msra.mxu0 %v2579
        %2819 = vmatprep.subr.bf16.mxu0 %v2584
        %2820 = vmatpush1.bf16.msra.mxu0 %v2583
        %2821 = vmatprep.subr.bf16.mxu0 %v2588
        %2822 = vmatpush1.bf16.msra.mxu0 %v2587
        %2823 = vmatprep.subr.bf16.mxu0 %v2592
        %2824 = vmatpush1.bf16.msra.mxu0 %v2591
        %2825 = vmatprep.subr.bf16.mxu0 %v2596
        %2826 = vmatpush1.bf16.msra.mxu0 %v2595
        %2827 = vmatprep.subr.bf16.mxu0 %v2600
        %2828 = vmatpush1.bf16.msra.mxu0 %v2599
        %2829 = vmatprep.subr.bf16.mxu0 %v2604
        %2830 = vmatpush1.bf16.msra.mxu0 %v2603
        %2831 = vmatprep.mubr.bf16.mxu0 %v684
        %2832 = vmatmul.mubr.bf16.gmra.mrb[0].mxu0 %v683
        %v2833 = vpop.f32.mrb[0].mxu0
        %v2834 = vadd.f32 %v1855, %v2833
        %v2835 = vpop.f32.mrb[0].mxu0
        %v2836 = vadd.f32 %v1857, %v2835
        %v2837 = vpop.f32.mrb[0].mxu0
        %v2838 = vadd.f32 %v1859, %v2837
        %v2839 = vpop.f32.mrb[0].mxu0
        %v2840 = vadd.f32 %v1861, %v2839
        %2841 = vmatprep.mubr.bf16.mxu0 %v688
        %2842 = vmatmul.mubr.bf16.gmra.mrb[0].mxu0 %v687
        %v2843 = vpop.f32.mrb[0].mxu0
        %v2844 = vadd.f32 %v1865, %v2843
        %v2845 = vpop.f32.mrb[0].mxu0
        %v2846 = vadd.f32 %v1867, %v2845
        %v2847 = vpop.f32.mrb[0].mxu0
        %v2848 = vadd.f32 %v1869, %v2847
        %v2849 = vpop.f32.mrb[0].mxu0
        %v2850 = vadd.f32 %v1871, %v2849
        %2851 = vmatprep.mubr.bf16.mxu0 %v692
        %2852 = vmatmul.mubr.bf16.gmra.mrb[0].mxu0 %v691
        %v2853 = vpop.f32.mrb[0].mxu0
        %v2854 = vadd.f32 %v1875, %v2853
        %v2855 = vpop.f32.mrb[0].mxu0
        %v2856 = vadd.f32 %v1877, %v2855
        %v2857 = vpop.f32.mrb[0].mxu0
        %v2858 = vadd.f32 %v1879, %v2857
        %v2859 = vpop.f32.mrb[0].mxu0
        %v2860 = vadd.f32 %v1881, %v2859
        %2861 = vmatprep.mubr.bf16.mxu0 %v696
        %2862 = vmatmul.mubr.bf16.gmra.mrb[0].mxu0 %v695
        %v2863 = vpop.f32.mrb[0].mxu0
        %v2864 = vadd.f32 %v1885, %v2863
        %v2865 = vpop.f32.mrb[0].mxu0
        %v2866 = vadd.f32 %v1887, %v2865
        %v2867 = vpop.f32.mrb[0].mxu0
        %v2868 = vadd.f32 %v1889, %v2867
        %v2869 = vpop.f32.mrb[0].mxu0
        %v2870 = vadd.f32 %v1891, %v2869
        %2871 = vmatprep.mubr.bf16.mxu0 %v700
        %2872 = vmatmul.mubr.bf16.gmra.mrb[0].mxu0 %v699
        %v2873 = vpop.f32.mrb[0].mxu0
        %v2874 = vadd.f32 %v1895, %v2873
        %v2875 = vpop.f32.mrb[0].mxu0
        %v2876 = vadd.f32 %v1897, %v2875
        %v2877 = vpop.f32.mrb[0].mxu0
        %v2878 = vadd.f32 %v1899, %v2877
        %v2879 = vpop.f32.mrb[0].mxu0
        %v2880 = vadd.f32 %v1901, %v2879
        %2881 = vmatprep.mubr.bf16.mxu0 %v704
        %2882 = vmatmul.mubr.bf16.gmra.mrb[0].mxu0 %v703
        %v2883 = vpop.f32.mrb[0].mxu0
        %v2884 = vadd.f32 %v1905, %v2883
        %v2885 = vpop.f32.mrb[0].mxu0
        %v2886 = vadd.f32 %v1907, %v2885
        %v2887 = vpop.f32.mrb[0].mxu0
        %v2888 = vadd.f32 %v1909, %v2887
        %v2889 = vpop.f32.mrb[0].mxu0
        %v2890 = vadd.f32 %v1911, %v2889
        %2891 = vmatprep.mubr.bf16.mxu0 %v708
        %2892 = vmatmul.mubr.bf16.gmra.mrb[0].mxu0 %v707
        %v2893 = vpop.f32.mrb[0].mxu0
        %v2894 = vadd.f32 %v1915, %v2893
        %v2895 = vpop.f32.mrb[0].mxu0
        %v2896 = vadd.f32 %v1917, %v2895
        %v2897 = vpop.f32.mrb[0].mxu0
        %v2898 = vadd.f32 %v1919, %v2897
        %v2899 = vpop.f32.mrb[0].mxu0
        %v2900 = vadd.f32 %v1921, %v2899
        %2901 = vmatprep.mubr.bf16.mxu0 %v712
        %2902 = vmatmul.mubr.bf16.gmra.mrb[0].mxu0 %v711
        %v2903 = vpop.f32.mrb[0].mxu0
        %v2904 = vadd.f32 %v1925, %v2903
        %v2905 = vpop.f32.mrb[0].mxu0
        %v2906 = vadd.f32 %v1927, %v2905
        %v2907 = vpop.f32.mrb[0].mxu0
        %v2908 = vadd.f32 %v1929, %v2907
        %v2909 = vpop.f32.mrb[0].mxu0
        %v2910 = vadd.f32 %v1931, %v2909
        %2911 = vdwg.mxu0
        %2912 = vmatprep.subr.bf16.mxu0 %v2608
        %2913 = vmatpush1.bf16.msra.mxu0 %v2607
        %2914 = vmatprep.subr.bf16.mxu0 %v2612
        %2915 = vmatpush1.bf16.msra.mxu0 %v2611
        %2916 = vmatprep.subr.bf16.mxu0 %v2616
        %2917 = vmatpush1.bf16.msra.mxu0 %v2615
        %2918 = vmatprep.subr.bf16.mxu0 %v2620
        %2919 = vmatpush1.bf16.msra.mxu0 %v2619
        %2920 = vmatprep.subr.bf16.mxu0 %v2624
        %2921 = vmatpush1.bf16.msra.mxu0 %v2623
        %2922 = vmatprep.subr.bf16.mxu0 %v2628
        %2923 = vmatpush1.bf16.msra.mxu0 %v2627
        %2924 = vmatprep.subr.bf16.mxu0 %v2632
        %2925 = vmatpush1.bf16.msra.mxu0 %v2631
        %2926 = vmatprep.subr.bf16.mxu0 %v2636
        %2927 = vmatpush1.bf16.msra.mxu0 %v2635
        %2928 = vmatprep.subr.bf16.mxu0 %v2640
        %2929 = vmatpush1.bf16.msra.mxu0 %v2639
        %2930 = vmatprep.subr.bf16.mxu0 %v2644
        %2931 = vmatpush1.bf16.msra.mxu0 %v2643
        %2932 = vmatprep.subr.bf16.mxu0 %v2648
        %2933 = vmatpush1.bf16.msra.mxu0 %v2647
        %2934 = vmatprep.subr.bf16.mxu0 %v2652
        %2935 = vmatpush1.bf16.msra.mxu0 %v2651
        %2936 = vmatprep.subr.bf16.mxu0 %v2656
        %2937 = vmatpush1.bf16.msra.mxu0 %v2655
        %2938 = vmatprep.subr.bf16.mxu0 %v2660
        %2939 = vmatpush1.bf16.msra.mxu0 %v2659
        %2940 = vmatprep.subr.bf16.mxu0 %v2664
        %2941 = vmatpush1.bf16.msra.mxu0 %v2663
        %2942 = vmatprep.subr.bf16.mxu0 %v2668
        %2943 = vmatpush1.bf16.msra.mxu0 %v2667
        %2944 = vmatprep.mubr.bf16.mxu0 %v686
        %2945 = vmatmul.mubr.bf16.gmra.mrb[0].mxu0 %v685
        %v2946 = vpop.f32.mrb[0].mxu0
        %v2947 = vadd.f32 %v2834, %v2946
        %v2948 = vpop.f32.mrb[0].mxu0
        %v2949 = vadd.f32 %v2836, %v2948
        %v2950 = vpop.f32.mrb[0].mxu0
        %v2951 = vadd.f32 %v2838, %v2950
        %v2952 = vpop.f32.mrb[0].mxu0
        %v2953 = vadd.f32 %v2840, %v2952
        %2954 = vmatprep.mubr.bf16.mxu0 %v690
        %2955 = vmatmul.mubr.bf16.gmra.mrb[0].mxu0 %v689
        %v2956 = vpop.f32.mrb[0].mxu0
        %v2957 = vadd.f32 %v2844, %v2956
        %v2958 = vpop.f32.mrb[0].mxu0
        %v2959 = vadd.f32 %v2846, %v2958
        %v2960 = vpop.f32.mrb[0].mxu0
        %v2961 = vadd.f32 %v2848, %v2960
        %v2962 = vpop.f32.mrb[0].mxu0
        %v2963 = vadd.f32 %v2850, %v2962
        %2964 = vmatprep.mubr.bf16.mxu0 %v694
        %2965 = vmatmul.mubr.bf16.gmra.mrb[0].mxu0 %v693
        %v2966 = vpop.f32.mrb[0].mxu0
        %v2967 = vadd.f32 %v2854, %v2966
        %v2968 = vpop.f32.mrb[0].mxu0
        %v2969 = vadd.f32 %v2856, %v2968
        %v2970 = vpop.f32.mrb[0].mxu0
        %v2971 = vadd.f32 %v2858, %v2970
        %v2972 = vpop.f32.mrb[0].mxu0
        %v2973 = vadd.f32 %v2860, %v2972
        %2974 = vmatprep.mubr.bf16.mxu0 %v698
        %2975 = vmatmul.mubr.bf16.gmra.mrb[0].mxu0 %v697
        %v2976 = vpop.f32.mrb[0].mxu0
        %v2977 = vadd.f32 %v2864, %v2976
        %v2978 = vpop.f32.mrb[0].mxu0
        %v2979 = vadd.f32 %v2866, %v2978
        %v2980 = vpop.f32.mrb[0].mxu0
        %v2981 = vadd.f32 %v2868, %v2980
        %v2982 = vpop.f32.mrb[0].mxu0
        %v2983 = vadd.f32 %v2870, %v2982
        %2984 = vmatprep.mubr.bf16.mxu0 %v702
        %2985 = vmatmul.mubr.bf16.gmra.mrb[0].mxu0 %v701
        %v2986 = vpop.f32.mrb[0].mxu0
        %v2987 = vadd.f32 %v2874, %v2986
        %v2988 = vpop.f32.mrb[0].mxu0
        %v2989 = vadd.f32 %v2876, %v2988
        %v2990 = vpop.f32.mrb[0].mxu0
        %v2991 = vadd.f32 %v2878, %v2990
        %v2992 = vpop.f32.mrb[0].mxu0
        %v2993 = vadd.f32 %v2880, %v2992
        %2994 = vmatprep.mubr.bf16.mxu0 %v706
        %2995 = vmatmul.mubr.bf16.gmra.mrb[0].mxu0 %v705
        %v2996 = vpop.f32.mrb[0].mxu0
        %v2997 = vadd.f32 %v2884, %v2996
        %v2998 = vpop.f32.mrb[0].mxu0
        %v2999 = vadd.f32 %v2886, %v2998
        %v3000 = vpop.f32.mrb[0].mxu0
        %v3001 = vadd.f32 %v2888, %v3000
        %v3002 = vpop.f32.mrb[0].mxu0
        %v3003 = vadd.f32 %v2890, %v3002
        %3004 = vmatprep.mubr.bf16.mxu0 %v710
        %3005 = vmatmul.mubr.bf16.gmra.mrb[0].mxu0 %v709
        %v3006 = vpop.f32.mrb[0].mxu0
        %v3007 = vadd.f32 %v2894, %v3006
        %v3008 = vpop.f32.mrb[0].mxu0
        %v3009 = vadd.f32 %v2896, %v3008
        %v3010 = vpop.f32.mrb[0].mxu0
        %v3011 = vadd.f32 %v2898, %v3010
        %v3012 = vpop.f32.mrb[0].mxu0
        %v3013 = vadd.f32 %v2900, %v3012
        %3014 = vmatprep.mubr.bf16.mxu0 %v714
        %3015 = vmatmul.mubr.bf16.gmra.mrb[0].mxu0 %v713
        %v3016 = vpop.f32.mrb[0].mxu0
        %v3017 = vadd.f32 %v2904, %v3016
        %v3018 = vpop.f32.mrb[0].mxu0
        %v3019 = vadd.f32 %v2906, %v3018
        %v3020 = vpop.f32.mrb[0].mxu0
        %v3021 = vadd.f32 %v2908, %v3020
        %v3022 = vpop.f32.mrb[0].mxu0
        %v3023 = vadd.f32 %v2910, %v3022
        %3024 = vdwg.mxu0
        %3025 = vmatprep.subr.bf16.mxu0 %v2546
        %3026 = vmatpush1.bf16.msra.mxu0 %v2545
        %3027 = vmatprep.subr.bf16.mxu0 %v2550
        %3028 = vmatpush1.bf16.msra.mxu0 %v2549
        %3029 = vmatprep.subr.bf16.mxu0 %v2554
        %3030 = vmatpush1.bf16.msra.mxu0 %v2553
        %3031 = vmatprep.subr.bf16.mxu0 %v2558
        %3032 = vmatpush1.bf16.msra.mxu0 %v2557
        %3033 = vmatprep.subr.bf16.mxu0 %v2562
        %3034 = vmatpush1.bf16.msra.mxu0 %v2561
        %3035 = vmatprep.subr.bf16.mxu0 %v2566
        %3036 = vmatpush1.bf16.msra.mxu0 %v2565
        %3037 = vmatprep.subr.bf16.mxu0 %v2570
        %3038 = vmatpush1.bf16.msra.mxu0 %v2569
        %3039 = vmatprep.subr.bf16.mxu0 %v2574
        %3040 = vmatpush1.bf16.msra.mxu0 %v2573
        %3041 = vmatprep.subr.bf16.mxu0 %v2578
        %3042 = vmatpush1.bf16.msra.mxu0 %v2577
        %3043 = vmatprep.subr.bf16.mxu0 %v2582
        %3044 = vmatpush1.bf16.msra.mxu0 %v2581
        %3045 = vmatprep.subr.bf16.mxu0 %v2586
        %3046 = vmatpush1.bf16.msra.mxu0 %v2585
        %3047 = vmatprep.subr.bf16.mxu0 %v2590
        %3048 = vmatpush1.bf16.msra.mxu0 %v2589
        %3049 = vmatprep.subr.bf16.mxu0 %v2594
        %3050 = vmatpush1.bf16.msra.mxu0 %v2593
        %3051 = vmatprep.subr.bf16.mxu0 %v2598
        %3052 = vmatpush1.bf16.msra.mxu0 %v2597
        %3053 = vmatprep.subr.bf16.mxu0 %v2602
        %3054 = vmatpush1.bf16.msra.mxu0 %v2601
        %3055 = vmatprep.subr.bf16.mxu0 %v2606
        %3056 = vmatpush1.bf16.msra.mxu0 %v2605
        %3057 = vmatprep.mubr.bf16.mxu0 %v684
        %3058 = vmatmul.mubr.bf16.gmra.mrb[0].mxu0 %v683
        %v3059 = vpop.f32.mrb[0].mxu0
        %v3060 = vadd.f32 %v2081, %v3059
        %v3061 = vpop.f32.mrb[0].mxu0
        %v3062 = vadd.f32 %v2083, %v3061
        %v3063 = vpop.f32.mrb[0].mxu0
        %v3064 = vadd.f32 %v2085, %v3063
        %v3065 = vpop.f32.mrb[0].mxu0
        %v3066 = vadd.f32 %v2087, %v3065
        %3067 = vmatprep.mubr.bf16.mxu0 %v688
        %3068 = vmatmul.mubr.bf16.gmra.mrb[0].mxu0 %v687
        %v3069 = vpop.f32.mrb[0].mxu0
        %v3070 = vadd.f32 %v2091, %v3069
        %v3071 = vpop.f32.mrb[0].mxu0
        %v3072 = vadd.f32 %v2093, %v3071
        %v3073 = vpop.f32.mrb[0].mxu0
        %v3074 = vadd.f32 %v2095, %v3073
        %v3075 = vpop.f32.mrb[0].mxu0
        %v3076 = vadd.f32 %v2097, %v3075
        %3077 = vmatprep.mubr.bf16.mxu0 %v692
        %3078 = vmatmul.mubr.bf16.gmra.mrb[0].mxu0 %v691
        %v3079 = vpop.f32.mrb[0].mxu0
        %v3080 = vadd.f32 %v2101, %v3079
        %v3081 = vpop.f32.mrb[0].mxu0
        %v3082 = vadd.f32 %v2103, %v3081
        %v3083 = vpop.f32.mrb[0].mxu0
        %v3084 = vadd.f32 %v2105, %v3083
        %v3085 = vpop.f32.mrb[0].mxu0
        %v3086 = vadd.f32 %v2107, %v3085
        %3087 = vmatprep.mubr.bf16.mxu0 %v696
        %3088 = vmatmul.mubr.bf16.gmra.mrb[0].mxu0 %v695
        %v3089 = vpop.f32.mrb[0].mxu0
        %v3090 = vadd.f32 %v2111, %v3089
        %v3091 = vpop.f32.mrb[0].mxu0
        %v3092 = vadd.f32 %v2113, %v3091
        %v3093 = vpop.f32.mrb[0].mxu0
        %v3094 = vadd.f32 %v2115, %v3093
        %v3095 = vpop.f32.mrb[0].mxu0
        %v3096 = vadd.f32 %v2117, %v3095
        %3097 = vmatprep.mubr.bf16.mxu0 %v700
        %3098 = vmatmul.mubr.bf16.gmra.mrb[0].mxu0 %v699
        %v3099 = vpop.f32.mrb[0].mxu0
        %v3100 = vadd.f32 %v2121, %v3099
        %v3101 = vpop.f32.mrb[0].mxu0
        %v3102 = vadd.f32 %v2123, %v3101
        %v3103 = vpop.f32.mrb[0].mxu0
        %v3104 = vadd.f32 %v2125, %v3103
        %v3105 = vpop.f32.mrb[0].mxu0
        %v3106 = vadd.f32 %v2127, %v3105
        %3107 = vmatprep.mubr.bf16.mxu0 %v704
        %3108 = vmatmul.mubr.bf16.gmra.mrb[0].mxu0 %v703
        %v3109 = vpop.f32.mrb[0].mxu0
        %v3110 = vadd.f32 %v2131, %v3109
        %v3111 = vpop.f32.mrb[0].mxu0
        %v3112 = vadd.f32 %v2133, %v3111
        %v3113 = vpop.f32.mrb[0].mxu0
        %v3114 = vadd.f32 %v2135, %v3113
        %v3115 = vpop.f32.mrb[0].mxu0
        %v3116 = vadd.f32 %v2137, %v3115
        %3117 = vmatprep.mubr.bf16.mxu0 %v708
        %3118 = vmatmul.mubr.bf16.gmra.mrb[0].mxu0 %v707
        %v3119 = vpop.f32.mrb[0].mxu0
        %v3120 = vadd.f32 %v2141, %v3119
        %v3121 = vpop.f32.mrb[0].mxu0
        %v3122 = vadd.f32 %v2143, %v3121
        %v3123 = vpop.f32.mrb[0].mxu0
        %v3124 = vadd.f32 %v2145, %v3123
        %v3125 = vpop.f32.mrb[0].mxu0
        %v3126 = vadd.f32 %v2147, %v3125
        %3127 = vmatprep.mubr.bf16.mxu0 %v712
        %3128 = vmatmul.mubr.bf16.gmra.mrb[0].mxu0 %v711
        %v3129 = vpop.f32.mrb[0].mxu0
        %v3130 = vadd.f32 %v2151, %v3129
        %v3131 = vpop.f32.mrb[0].mxu0
        %v3132 = vadd.f32 %v2153, %v3131
        %v3133 = vpop.f32.mrb[0].mxu0
        %v3134 = vadd.f32 %v2155, %v3133
        %v3135 = vpop.f32.mrb[0].mxu0
        %v3136 = vadd.f32 %v2157, %v3135
        %3137 = vdwg.mxu0
        %3138 = vmatprep.subr.bf16.mxu0 %v2610
        %3139 = vmatpush1.bf16.msra.mxu0 %v2609
        %3140 = vmatprep.subr.bf16.mxu0 %v2614
        %3141 = vmatpush1.bf16.msra.mxu0 %v2613
        %3142 = vmatprep.subr.bf16.mxu0 %v2618
        %3143 = vmatpush1.bf16.msra.mxu0 %v2617
        %3144 = vmatprep.subr.bf16.mxu0 %v2622
        %3145 = vmatpush1.bf16.msra.mxu0 %v2621
        %3146 = vmatprep.subr.bf16.mxu0 %v2626
        %3147 = vmatpush1.bf16.msra.mxu0 %v2625
        %3148 = vmatprep.subr.bf16.mxu0 %v2630
        %3149 = vmatpush1.bf16.msra.mxu0 %v2629
        %3150 = vmatprep.subr.bf16.mxu0 %v2634
        %3151 = vmatpush1.bf16.msra.mxu0 %v2633
        %3152 = vmatprep.subr.bf16.mxu0 %v2638
        %3153 = vmatpush1.bf16.msra.mxu0 %v2637
        %3154 = vmatprep.subr.bf16.mxu0 %v2642
        %3155 = vmatpush1.bf16.msra.mxu0 %v2641
        %3156 = vmatprep.subr.bf16.mxu0 %v2646
        %3157 = vmatpush1.bf16.msra.mxu0 %v2645
        %3158 = vmatprep.subr.bf16.mxu0 %v2650
        %3159 = vmatpush1.bf16.msra.mxu0 %v2649
        %3160 = vmatprep.subr.bf16.mxu0 %v2654
        %3161 = vmatpush1.bf16.msra.mxu0 %v2653
        %3162 = vmatprep.subr.bf16.mxu0 %v2658
        %3163 = vmatpush1.bf16.msra.mxu0 %v2657
        %3164 = vmatprep.subr.bf16.mxu0 %v2662
        %3165 = vmatpush1.bf16.msra.mxu0 %v2661
        %3166 = vmatprep.subr.bf16.mxu0 %v2666
        %3167 = vmatpush1.bf16.msra.mxu0 %v2665
        %3168 = vmatprep.subr.bf16.mxu0 %v2670
        %3169 = vmatpush1.bf16.msra.mxu0 %v2669
        %3170 = vmatprep.mubr.bf16.mxu0 %v686
        %3171 = vmatmul.mubr.bf16.gmra.mrb[0].mxu0 %v685
        %v3172 = vpop.f32.mrb[0].mxu0
        %v3173 = vadd.f32 %v3060, %v3172
        %v3174 = vpop.f32.mrb[0].mxu0
        %v3175 = vadd.f32 %v3062, %v3174
        %v3176 = vpop.f32.mrb[0].mxu0
        %v3177 = vadd.f32 %v3064, %v3176
        %v3178 = vpop.f32.mrb[0].mxu0
        %v3179 = vadd.f32 %v3066, %v3178
        %3180 = vmatprep.mubr.bf16.mxu0 %v690
        %3181 = vmatmul.mubr.bf16.gmra.mrb[0].mxu0 %v689
        %v3182 = vpop.f32.mrb[0].mxu0
        %v3183 = vadd.f32 %v3070, %v3182
        %v3184 = vpop.f32.mrb[0].mxu0
        %v3185 = vadd.f32 %v3072, %v3184
        %v3186 = vpop.f32.mrb[0].mxu0
        %v3187 = vadd.f32 %v3074, %v3186
        %v3188 = vpop.f32.mrb[0].mxu0
        %v3189 = vadd.f32 %v3076, %v3188
        %3190 = vmatprep.mubr.bf16.mxu0 %v694
        %3191 = vmatmul.mubr.bf16.gmra.mrb[0].mxu0 %v693
        %v3192 = vpop.f32.mrb[0].mxu0
        %v3193 = vadd.f32 %v3080, %v3192
        %v3194 = vpop.f32.mrb[0].mxu0
        %v3195 = vadd.f32 %v3082, %v3194
        %v3196 = vpop.f32.mrb[0].mxu0
        %v3197 = vadd.f32 %v3084, %v3196
        %v3198 = vpop.f32.mrb[0].mxu0
        %v3199 = vadd.f32 %v3086, %v3198
        %3200 = vmatprep.mubr.bf16.mxu0 %v698
        %3201 = vmatmul.mubr.bf16.gmra.mrb[0].mxu0 %v697
        %v3202 = vpop.f32.mrb[0].mxu0
        %v3203 = vadd.f32 %v3090, %v3202
        %v3204 = vpop.f32.mrb[0].mxu0
        %v3205 = vadd.f32 %v3092, %v3204
        %v3206 = vpop.f32.mrb[0].mxu0
        %v3207 = vadd.f32 %v3094, %v3206
        %v3208 = vpop.f32.mrb[0].mxu0
        %v3209 = vadd.f32 %v3096, %v3208
        %3210 = vmatprep.mubr.bf16.mxu0 %v702
        %3211 = vmatmul.mubr.bf16.gmra.mrb[0].mxu0 %v701
        %v3212 = vpop.f32.mrb[0].mxu0
        %v3213 = vadd.f32 %v3100, %v3212
        %v3214 = vpop.f32.mrb[0].mxu0
        %v3215 = vadd.f32 %v3102, %v3214
        %v3216 = vpop.f32.mrb[0].mxu0
        %v3217 = vadd.f32 %v3104, %v3216
        %v3218 = vpop.f32.mrb[0].mxu0
        %v3219 = vadd.f32 %v3106, %v3218
        %3220 = vmatprep.mubr.bf16.mxu0 %v706
        %3221 = vmatmul.mubr.bf16.gmra.mrb[0].mxu0 %v705
        %v3222 = vpop.f32.mrb[0].mxu0
        %v3223 = vadd.f32 %v3110, %v3222
        %v3224 = vpop.f32.mrb[0].mxu0
        %v3225 = vadd.f32 %v3112, %v3224
        %v3226 = vpop.f32.mrb[0].mxu0
        %v3227 = vadd.f32 %v3114, %v3226
        %v3228 = vpop.f32.mrb[0].mxu0
        %v3229 = vadd.f32 %v3116, %v3228
        %3230 = vmatprep.mubr.bf16.mxu0 %v710
        %3231 = vmatmul.mubr.bf16.gmra.mrb[0].mxu0 %v709
        %v3232 = vpop.f32.mrb[0].mxu0
        %v3233 = vadd.f32 %v3120, %v3232
        %v3234 = vpop.f32.mrb[0].mxu0
        %v3235 = vadd.f32 %v3122, %v3234
        %v3236 = vpop.f32.mrb[0].mxu0
        %v3237 = vadd.f32 %v3124, %v3236
        %v3238 = vpop.f32.mrb[0].mxu0
        %v3239 = vadd.f32 %v3126, %v3238
        %3240 = vmatprep.mubr.bf16.mxu0 %v714
        %3241 = vmatmul.mubr.bf16.gmra.mrb[0].mxu0 %v713
        %v3242 = vpop.f32.mrb[0].mxu0
        %v3243 = vadd.f32 %v3130, %v3242
        %v3244 = vpop.f32.mrb[0].mxu0
        %v3245 = vadd.f32 %v3132, %v3244
        %v3246 = vpop.f32.mrb[0].mxu0
        %v3247 = vadd.f32 %v3134, %v3246
        %v3248 = vpop.f32.mrb[0].mxu0
        %v3249 = vadd.f32 %v3136, %v3248
        %3250 = vdwg.mxu0
        %v3251 = vld [vmem:[%s3] sm:$0xf]
        %v3253 = vlaneseq
        %v3254 = vshrl.u32 %v3253, 7
        %v3255 = vsub.s32 0, %v3254
        %v3256 = vrot.slane %v3251, %v3255
        %v3257 = vlaneseq
        %v3258 = vshrl.u32 %v3257, 7
        %v3259 = vsub.s32 1, %v3258
        %v3260 = vrot.slane %v3251, %v3259
        %v3261 = vlaneseq
        %v3262 = vshrl.u32 %v3261, 7
        %v3263 = vsub.s32 2, %v3262
        %v3264 = vrot.slane %v3251, %v3263
        %v3265 = vlaneseq
        %v3266 = vshrl.u32 %v3265, 7
        %v3267 = vsub.s32 3, %v3266
        %v3268 = vrot.slane %v3251, %v3267
        %v3273 = vadd.f32 %v2947, %v3256
        %v3274 = vadd.f32 %v2949, %v3260
        %v3275 = vadd.f32 %v3173, %v3264
        %v3276 = vadd.f32 %v3175, %v3268
        %v3277 = vadd.f32 %v2951, %v3256
        %v3278 = vadd.f32 %v2953, %v3260
        %v3279 = vadd.f32 %v3177, %v3264
        %v3280 = vadd.f32 %v3179, %v3268
        %v3281 = vadd.f32 %v2957, %v3256
        %v3282 = vadd.f32 %v2959, %v3260
        %v3283 = vadd.f32 %v3183, %v3264
        %v3284 = vadd.f32 %v3185, %v3268
        %v3285 = vadd.f32 %v2961, %v3256
        %v3286 = vadd.f32 %v2963, %v3260
        %v3287 = vadd.f32 %v3187, %v3264
        %v3288 = vadd.f32 %v3189, %v3268
        %v3289 = vadd.f32 %v2967, %v3256
        %v3290 = vadd.f32 %v2969, %v3260
        %v3291 = vadd.f32 %v3193, %v3264
        %v3292 = vadd.f32 %v3195, %v3268
        %v3293 = vadd.f32 %v2971, %v3256
        %v3294 = vadd.f32 %v2973, %v3260
        %v3295 = vadd.f32 %v3197, %v3264
        %v3296 = vadd.f32 %v3199, %v3268
        %v3297 = vadd.f32 %v2977, %v3256
        %v3298 = vadd.f32 %v2979, %v3260
        %v3299 = vadd.f32 %v3203, %v3264
        %v3300 = vadd.f32 %v3205, %v3268
        %v3301 = vadd.f32 %v2981, %v3256
        %v3302 = vadd.f32 %v2983, %v3260
        %v3303 = vadd.f32 %v3207, %v3264
        %v3304 = vadd.f32 %v3209, %v3268
        %v3305 = vadd.f32 %v2987, %v3256
        %v3306 = vadd.f32 %v2989, %v3260
        %v3307 = vadd.f32 %v3213, %v3264
        %v3308 = vadd.f32 %v3215, %v3268
        %v3309 = vadd.f32 %v2991, %v3256
        %v3310 = vadd.f32 %v2993, %v3260
        %v3311 = vadd.f32 %v3217, %v3264
        %v3312 = vadd.f32 %v3219, %v3268
        %v3313 = vadd.f32 %v2997, %v3256
        %v3314 = vadd.f32 %v2999, %v3260
        %v3315 = vadd.f32 %v3223, %v3264
        %v3316 = vadd.f32 %v3225, %v3268
        %v3317 = vadd.f32 %v3001, %v3256
        %v3318 = vadd.f32 %v3003, %v3260
        %v3319 = vadd.f32 %v3227, %v3264
        %v3320 = vadd.f32 %v3229, %v3268
        %v3321 = vadd.f32 %v3007, %v3256
        %v3322 = vadd.f32 %v3009, %v3260
        %v3323 = vadd.f32 %v3233, %v3264
        %v3324 = vadd.f32 %v3235, %v3268
        %v3325 = vadd.f32 %v3011, %v3256
        %v3326 = vadd.f32 %v3013, %v3260
        %v3327 = vadd.f32 %v3237, %v3264
        %v3328 = vadd.f32 %v3239, %v3268
        %v3329 = vadd.f32 %v3017, %v3256
        %v3330 = vadd.f32 %v3019, %v3260
        %v3331 = vadd.f32 %v3243, %v3264
        %v3332 = vadd.f32 %v3245, %v3268
        %v3333 = vadd.f32 %v3021, %v3256
        %v3334 = vadd.f32 %v3023, %v3260
        %v3335 = vadd.f32 %v3247, %v3264
        %v3336 = vadd.f32 %v3249, %v3268
        %vm3337 = vcmp.gt.f32.partialorder %v3273, 0.0
        %vm3338 = vcmp.gt.f32.partialorder %v3274, 0.0
        %vm3339 = vcmp.gt.f32.partialorder %v3275, 0.0
        %vm3340 = vcmp.gt.f32.partialorder %v3276, 0.0
        %vm3341 = vcmp.gt.f32.partialorder %v3277, 0.0
        %vm3342 = vcmp.gt.f32.partialorder %v3278, 0.0
        %vm3343 = vcmp.gt.f32.partialorder %v3279, 0.0
        %vm3344 = vcmp.gt.f32.partialorder %v3280, 0.0
        %vm3345 = vcmp.gt.f32.partialorder %v3281, 0.0
        %vm3346 = vcmp.gt.f32.partialorder %v3282, 0.0
        %vm3347 = vcmp.gt.f32.partialorder %v3283, 0.0
        %vm3348 = vcmp.gt.f32.partialorder %v3284, 0.0
        %vm3349 = vcmp.gt.f32.partialorder %v3285, 0.0
        %vm3350 = vcmp.gt.f32.partialorder %v3286, 0.0
        %vm3351 = vcmp.gt.f32.partialorder %v3287, 0.0
        %vm3352 = vcmp.gt.f32.partialorder %v3288, 0.0
        %vm3353 = vcmp.gt.f32.partialorder %v3289, 0.0
        %vm3354 = vcmp.gt.f32.partialorder %v3290, 0.0
        %vm3355 = vcmp.gt.f32.partialorder %v3291, 0.0
        %vm3356 = vcmp.gt.f32.partialorder %v3292, 0.0
        %vm3357 = vcmp.gt.f32.partialorder %v3293, 0.0
        %vm3358 = vcmp.gt.f32.partialorder %v3294, 0.0
        %vm3359 = vcmp.gt.f32.partialorder %v3295, 0.0
        %vm3360 = vcmp.gt.f32.partialorder %v3296, 0.0
        %vm3361 = vcmp.gt.f32.partialorder %v3297, 0.0
        %vm3362 = vcmp.gt.f32.partialorder %v3298, 0.0
        %vm3363 = vcmp.gt.f32.partialorder %v3299, 0.0
        %vm3364 = vcmp.gt.f32.partialorder %v3300, 0.0
        %vm3365 = vcmp.gt.f32.partialorder %v3301, 0.0
        %vm3366 = vcmp.gt.f32.partialorder %v3302, 0.0
        %vm3367 = vcmp.gt.f32.partialorder %v3303, 0.0
        %vm3368 = vcmp.gt.f32.partialorder %v3304, 0.0
        %vm3369 = vcmp.gt.f32.partialorder %v3305, 0.0
        %vm3370 = vcmp.gt.f32.partialorder %v3306, 0.0
        %vm3371 = vcmp.gt.f32.partialorder %v3307, 0.0
        %vm3372 = vcmp.gt.f32.partialorder %v3308, 0.0
        %vm3373 = vcmp.gt.f32.partialorder %v3309, 0.0
        %vm3374 = vcmp.gt.f32.partialorder %v3310, 0.0
        %vm3375 = vcmp.gt.f32.partialorder %v3311, 0.0
        %vm3376 = vcmp.gt.f32.partialorder %v3312, 0.0
        %vm3377 = vcmp.gt.f32.partialorder %v3313, 0.0
        %vm3378 = vcmp.gt.f32.partialorder %v3314, 0.0
        %vm3379 = vcmp.gt.f32.partialorder %v3315, 0.0
        %vm3380 = vcmp.gt.f32.partialorder %v3316, 0.0
        %vm3381 = vcmp.gt.f32.partialorder %v3317, 0.0
        %vm3382 = vcmp.gt.f32.partialorder %v3318, 0.0
        %vm3383 = vcmp.gt.f32.partialorder %v3319, 0.0
        %vm3384 = vcmp.gt.f32.partialorder %v3320, 0.0
        %vm3385 = vcmp.gt.f32.partialorder %v3321, 0.0
        %vm3386 = vcmp.gt.f32.partialorder %v3322, 0.0
        %vm3387 = vcmp.gt.f32.partialorder %v3323, 0.0
        %vm3388 = vcmp.gt.f32.partialorder %v3324, 0.0
        %vm3389 = vcmp.gt.f32.partialorder %v3325, 0.0
        %vm3390 = vcmp.gt.f32.partialorder %v3326, 0.0
        %vm3391 = vcmp.gt.f32.partialorder %v3327, 0.0
        %vm3392 = vcmp.gt.f32.partialorder %v3328, 0.0
        %vm3393 = vcmp.gt.f32.partialorder %v3329, 0.0
        %vm3394 = vcmp.gt.f32.partialorder %v3330, 0.0
        %vm3395 = vcmp.gt.f32.partialorder %v3331, 0.0
        %vm3396 = vcmp.gt.f32.partialorder %v3332, 0.0
        %vm3397 = vcmp.gt.f32.partialorder %v3333, 0.0
        %vm3398 = vcmp.gt.f32.partialorder %v3334, 0.0
        %vm3399 = vcmp.gt.f32.partialorder %v3335, 0.0
        %vm3400 = vcmp.gt.f32.partialorder %v3336, 0.0
        %v3401 = vmul.f32 %v3273, 1.442695
        %v3402 = vpow.pop %v3401
        %v3403 = vmul.f32 %v3274, 1.442695
        %v3404 = vpow.pop %v3403
        %v3405 = vmul.f32 %v3275, 1.442695
        %v3406 = vpow.pop %v3405
        %v3407 = vmul.f32 %v3276, 1.442695
        %v3408 = vpow.pop %v3407
        %v3409 = vmul.f32 %v3277, 1.442695
        %v3410 = vpow.pop %v3409
        %v3411 = vmul.f32 %v3278, 1.442695
        %v3412 = vpow.pop %v3411
        %v3413 = vmul.f32 %v3279, 1.442695
        %v3414 = vpow.pop %v3413
        %v3415 = vmul.f32 %v3280, 1.442695
        %v3416 = vpow.pop %v3415
        %v3417 = vmul.f32 %v3281, 1.442695
        %v3418 = vpow.pop %v3417
        %v3419 = vmul.f32 %v3282, 1.442695
        %v3420 = vpow.pop %v3419
        %v3421 = vmul.f32 %v3283, 1.442695
        %v3422 = vpow.pop %v3421
        %v3423 = vmul.f32 %v3284, 1.442695
        %v3424 = vpow.pop %v3423
        %v3425 = vmul.f32 %v3285, 1.442695
        %v3426 = vpow.pop %v3425
        %v3427 = vmul.f32 %v3286, 1.442695
        %v3428 = vpow.pop %v3427
        %v3429 = vmul.f32 %v3287, 1.442695
        %v3430 = vpow.pop %v3429
        %v3431 = vmul.f32 %v3288, 1.442695
        %v3432 = vpow.pop %v3431
        %v3433 = vmul.f32 %v3289, 1.442695
        %v3434 = vpow.pop %v3433
        %v3435 = vmul.f32 %v3290, 1.442695
        %v3436 = vpow.pop %v3435
        %v3437 = vmul.f32 %v3291, 1.442695
        %v3438 = vpow.pop %v3437
        %v3439 = vmul.f32 %v3292, 1.442695
        %v3440 = vpow.pop %v3439
        %v3441 = vmul.f32 %v3293, 1.442695
        %v3442 = vpow.pop %v3441
        %v3443 = vmul.f32 %v3294, 1.442695
        %v3444 = vpow.pop %v3443
        %v3445 = vmul.f32 %v3295, 1.442695
        %v3446 = vpow.pop %v3445
        %v3447 = vmul.f32 %v3296, 1.442695
        %v3448 = vpow.pop %v3447
        %v3449 = vmul.f32 %v3297, 1.442695
        %v3450 = vpow.pop %v3449
        %v3451 = vmul.f32 %v3298, 1.442695
        %v3452 = vpow.pop %v3451
        %v3453 = vmul.f32 %v3299, 1.442695
        %v3454 = vpow.pop %v3453
        %v3455 = vmul.f32 %v3300, 1.442695
        %v3456 = vpow.pop %v3455
        %v3457 = vmul.f32 %v3301, 1.442695
        %v3458 = vpow.pop %v3457
        %v3459 = vmul.f32 %v3302, 1.442695
        %v3460 = vpow.pop %v3459
        %v3461 = vmul.f32 %v3303, 1.442695
        %v3462 = vpow.pop %v3461
        %v3463 = vmul.f32 %v3304, 1.442695
        %v3464 = vpow.pop %v3463
        %v3465 = vmul.f32 %v3305, 1.442695
        %v3466 = vpow.pop %v3465
        %v3467 = vmul.f32 %v3306, 1.442695
        %v3468 = vpow.pop %v3467
        %v3469 = vmul.f32 %v3307, 1.442695
        %v3470 = vpow.pop %v3469
        %v3471 = vmul.f32 %v3308, 1.442695
        %v3472 = vpow.pop %v3471
        %v3473 = vmul.f32 %v3309, 1.442695
        %v3474 = vpow.pop %v3473
        %v3475 = vmul.f32 %v3310, 1.442695
        %v3476 = vpow.pop %v3475
        %v3477 = vmul.f32 %v3311, 1.442695
        %v3478 = vpow.pop %v3477
        %v3479 = vmul.f32 %v3312, 1.442695
        %v3480 = vpow.pop %v3479
        %v3481 = vmul.f32 %v3313, 1.442695
        %v3482 = vpow.pop %v3481
        %v3483 = vmul.f32 %v3314, 1.442695
        %v3484 = vpow.pop %v3483
        %v3485 = vmul.f32 %v3315, 1.442695
        %v3486 = vpow.pop %v3485
        %v3487 = vmul.f32 %v3316, 1.442695
        %v3488 = vpow.pop %v3487
        %v3489 = vmul.f32 %v3317, 1.442695
        %v3490 = vpow.pop %v3489
        %v3491 = vmul.f32 %v3318, 1.442695
        %v3492 = vpow.pop %v3491
        %v3493 = vmul.f32 %v3319, 1.442695
        %v3494 = vpow.pop %v3493
        %v3495 = vmul.f32 %v3320, 1.442695
        %v3496 = vpow.pop %v3495
        %v3497 = vmul.f32 %v3321, 1.442695
        %v3498 = vpow.pop %v3497
        %v3499 = vmul.f32 %v3322, 1.442695
        %v3500 = vpow.pop %v3499
        %v3501 = vmul.f32 %v3323, 1.442695
        %v3502 = vpow.pop %v3501
        %v3503 = vmul.f32 %v3324, 1.442695
        %v3504 = vpow.pop %v3503
        %v3505 = vmul.f32 %v3325, 1.442695
        %v3506 = vpow.pop %v3505
        %v3507 = vmul.f32 %v3326, 1.442695
        %v3508 = vpow.pop %v3507
        %v3509 = vmul.f32 %v3327, 1.442695
        %v3510 = vpow.pop %v3509
        %v3511 = vmul.f32 %v3328, 1.442695
        %v3512 = vpow.pop %v3511
        %v3513 = vmul.f32 %v3329, 1.442695
        %v3514 = vpow.pop %v3513
        %v3515 = vmul.f32 %v3330, 1.442695
        %v3516 = vpow.pop %v3515
        %v3517 = vmul.f32 %v3331, 1.442695
        %v3518 = vpow.pop %v3517
        %v3519 = vmul.f32 %v3332, 1.442695
        %v3520 = vpow.pop %v3519
        %v3521 = vmul.f32 %v3333, 1.442695
        %v3522 = vpow.pop %v3521
        %v3523 = vmul.f32 %v3334, 1.442695
        %v3524 = vpow.pop %v3523
        %v3525 = vmul.f32 %v3335, 1.442695
        %v3526 = vpow.pop %v3525
        %v3527 = vmul.f32 %v3336, 1.442695
        %v3528 = vpow.pop %v3527
        %v3529 = vsub.f32 %v3402, 1.0
        %v3530 = vsub.f32 %v3404, 1.0
        %v3531 = vsub.f32 %v3406, 1.0
        %v3532 = vsub.f32 %v3408, 1.0
        %v3533 = vsub.f32 %v3410, 1.0
        %v3534 = vsub.f32 %v3412, 1.0
        %v3535 = vsub.f32 %v3414, 1.0
        %v3536 = vsub.f32 %v3416, 1.0
        %v3537 = vsub.f32 %v3418, 1.0
        %v3538 = vsub.f32 %v3420, 1.0
        %v3539 = vsub.f32 %v3422, 1.0
        %v3540 = vsub.f32 %v3424, 1.0
        %v3541 = vsub.f32 %v3426, 1.0
        %v3542 = vsub.f32 %v3428, 1.0
        %v3543 = vsub.f32 %v3430, 1.0
        %v3544 = vsub.f32 %v3432, 1.0
        %v3545 = vsub.f32 %v3434, 1.0
        %v3546 = vsub.f32 %v3436, 1.0
        %v3547 = vsub.f32 %v3438, 1.0
        %v3548 = vsub.f32 %v3440, 1.0
        %v3549 = vsub.f32 %v3442, 1.0
        %v3550 = vsub.f32 %v3444, 1.0
        %v3551 = vsub.f32 %v3446, 1.0
        %v3552 = vsub.f32 %v3448, 1.0
        %v3553 = vsub.f32 %v3450, 1.0
        %v3554 = vsub.f32 %v3452, 1.0
        %v3555 = vsub.f32 %v3454, 1.0
        %v3556 = vsub.f32 %v3456, 1.0
        %v3557 = vsub.f32 %v3458, 1.0
        %v3558 = vsub.f32 %v3460, 1.0
        %v3559 = vsub.f32 %v3462, 1.0
        %v3560 = vsub.f32 %v3464, 1.0
        %v3561 = vsub.f32 %v3466, 1.0
        %v3562 = vsub.f32 %v3468, 1.0
        %v3563 = vsub.f32 %v3470, 1.0
        %v3564 = vsub.f32 %v3472, 1.0
        %v3565 = vsub.f32 %v3474, 1.0
        %v3566 = vsub.f32 %v3476, 1.0
        %v3567 = vsub.f32 %v3478, 1.0
        %v3568 = vsub.f32 %v3480, 1.0
        %v3569 = vsub.f32 %v3482, 1.0
        %v3570 = vsub.f32 %v3484, 1.0
        %v3571 = vsub.f32 %v3486, 1.0
        %v3572 = vsub.f32 %v3488, 1.0
        %v3573 = vsub.f32 %v3490, 1.0
        %v3574 = vsub.f32 %v3492, 1.0
        %v3575 = vsub.f32 %v3494, 1.0
        %v3576 = vsub.f32 %v3496, 1.0
        %v3577 = vsub.f32 %v3498, 1.0
        %v3578 = vsub.f32 %v3500, 1.0
        %v3579 = vsub.f32 %v3502, 1.0
        %v3580 = vsub.f32 %v3504, 1.0
        %v3581 = vsub.f32 %v3506, 1.0
        %v3582 = vsub.f32 %v3508, 1.0
        %v3583 = vsub.f32 %v3510, 1.0
        %v3584 = vsub.f32 %v3512, 1.0
        %v3585 = vsub.f32 %v3514, 1.0
        %v3586 = vsub.f32 %v3516, 1.0
        %v3587 = vsub.f32 %v3518, 1.0
        %v3588 = vsub.f32 %v3520, 1.0
        %v3589 = vsub.f32 %v3522, 1.0
        %v3590 = vsub.f32 %v3524, 1.0
        %v3591 = vsub.f32 %v3526, 1.0
        %v3592 = vsub.f32 %v3528, 1.0
        %v3593 = vsel %vm3337, %v3273, %v3529
        %v3594 = vsel %vm3338, %v3274, %v3530
        %v3595 = vsel %vm3339, %v3275, %v3531
        %v3596 = vsel %vm3340, %v3276, %v3532
        %v3597 = vsel %vm3341, %v3277, %v3533
        %v3598 = vsel %vm3342, %v3278, %v3534
        %v3599 = vsel %vm3343, %v3279, %v3535
        %v3600 = vsel %vm3344, %v3280, %v3536
        %v3601 = vsel %vm3345, %v3281, %v3537
        %v3602 = vsel %vm3346, %v3282, %v3538
        %v3603 = vsel %vm3347, %v3283, %v3539
        %v3604 = vsel %vm3348, %v3284, %v3540
        %v3605 = vsel %vm3349, %v3285, %v3541
        %v3606 = vsel %vm3350, %v3286, %v3542
        %v3607 = vsel %vm3351, %v3287, %v3543
        %v3608 = vsel %vm3352, %v3288, %v3544
        %v3609 = vsel %vm3353, %v3289, %v3545
        %v3610 = vsel %vm3354, %v3290, %v3546
        %v3611 = vsel %vm3355, %v3291, %v3547
        %v3612 = vsel %vm3356, %v3292, %v3548
        %v3613 = vsel %vm3357, %v3293, %v3549
        %v3614 = vsel %vm3358, %v3294, %v3550
        %v3615 = vsel %vm3359, %v3295, %v3551
        %v3616 = vsel %vm3360, %v3296, %v3552
        %v3617 = vsel %vm3361, %v3297, %v3553
        %v3618 = vsel %vm3362, %v3298, %v3554
        %v3619 = vsel %vm3363, %v3299, %v3555
        %v3620 = vsel %vm3364, %v3300, %v3556
        %v3621 = vsel %vm3365, %v3301, %v3557
        %v3622 = vsel %vm3366, %v3302, %v3558
        %v3623 = vsel %vm3367, %v3303, %v3559
        %v3624 = vsel %vm3368, %v3304, %v3560
        %v3625 = vsel %vm3369, %v3305, %v3561
        %v3626 = vsel %vm3370, %v3306, %v3562
        %v3627 = vsel %vm3371, %v3307, %v3563
        %v3628 = vsel %vm3372, %v3308, %v3564
        %v3629 = vsel %vm3373, %v3309, %v3565
        %v3630 = vsel %vm3374, %v3310, %v3566
        %v3631 = vsel %vm3375, %v3311, %v3567
        %v3632 = vsel %vm3376, %v3312, %v3568
        %v3633 = vsel %vm3377, %v3313, %v3569
        %v3634 = vsel %vm3378, %v3314, %v3570
        %v3635 = vsel %vm3379, %v3315, %v3571
        %v3636 = vsel %vm3380, %v3316, %v3572
        %v3637 = vsel %vm3381, %v3317, %v3573
        %v3638 = vsel %vm3382, %v3318, %v3574
        %v3639 = vsel %vm3383, %v3319, %v3575
        %v3640 = vsel %vm3384, %v3320, %v3576
        %v3641 = vsel %vm3385, %v3321, %v3577
        %v3642 = vsel %vm3386, %v3322, %v3578
        %v3643 = vsel %vm3387, %v3323, %v3579
        %v3644 = vsel %vm3388, %v3324, %v3580
        %v3645 = vsel %vm3389, %v3325, %v3581
        %v3646 = vsel %vm3390, %v3326, %v3582
        %v3647 = vsel %vm3391, %v3327, %v3583
        %v3648 = vsel %vm3392, %v3328, %v3584
        %v3649 = vsel %vm3393, %v3329, %v3585
        %v3650 = vsel %vm3394, %v3330, %v3586
        %v3651 = vsel %vm3395, %v3331, %v3587
        %v3652 = vsel %vm3396, %v3332, %v3588
        %v3653 = vsel %vm3397, %v3333, %v3589
        %v3654 = vsel %vm3398, %v3334, %v3590
        %v3655 = vsel %vm3399, %v3335, %v3591
        %v3656 = vsel %vm3400, %v3336, %v3592
        %v3657 = vpack.c.bf16 %v3597, %v3593
        %v3658 = vpack.c.bf16 %v3598, %v3594
        %v3659 = vpack.c.bf16 %v3599, %v3595
        %v3660 = vpack.c.bf16 %v3600, %v3596
        %v3661 = vpack.c.bf16 %v3605, %v3601
        %v3662 = vpack.c.bf16 %v3606, %v3602
        %v3663 = vpack.c.bf16 %v3607, %v3603
        %v3664 = vpack.c.bf16 %v3608, %v3604
        %v3665 = vpack.c.bf16 %v3613, %v3609
        %v3666 = vpack.c.bf16 %v3614, %v3610
        %v3667 = vpack.c.bf16 %v3615, %v3611
        %v3668 = vpack.c.bf16 %v3616, %v3612
        %v3669 = vpack.c.bf16 %v3621, %v3617
        %v3670 = vpack.c.bf16 %v3622, %v3618
        %v3671 = vpack.c.bf16 %v3623, %v3619
        %v3672 = vpack.c.bf16 %v3624, %v3620
        %v3673 = vpack.c.bf16 %v3629, %v3625
        %v3674 = vpack.c.bf16 %v3630, %v3626
        %v3675 = vpack.c.bf16 %v3631, %v3627
        %v3676 = vpack.c.bf16 %v3632, %v3628
        %v3677 = vpack.c.bf16 %v3637, %v3633
        %v3678 = vpack.c.bf16 %v3638, %v3634
        %v3679 = vpack.c.bf16 %v3639, %v3635
        %v3680 = vpack.c.bf16 %v3640, %v3636
        %v3681 = vpack.c.bf16 %v3645, %v3641
        %v3682 = vpack.c.bf16 %v3646, %v3642
        %v3683 = vpack.c.bf16 %v3647, %v3643
        %v3684 = vpack.c.bf16 %v3648, %v3644
        %v3685 = vpack.c.bf16 %v3653, %v3649
        %v3686 = vpack.c.bf16 %v3654, %v3650
        %v3687 = vpack.c.bf16 %v3655, %v3651
        %v3688 = vpack.c.bf16 %v3656, %v3652
        %v3689 = vld [vmem:[#allocation8] sm:$0xff]
        %v3690 = vld [vmem:[#allocation8 + $0x8] sm:$0xff]
        %v3691 = vld [vmem:[#allocation8 + $0x10] sm:$0xff]
        %v3692 = vld [vmem:[#allocation8 + $0x18] sm:$0xff]
        %v3693 = vld [vmem:[#allocation8 + $0x20] sm:$0xff]
        %v3694 = vld [vmem:[#allocation8 + $0x28] sm:$0xff]
        %v3695 = vld [vmem:[#allocation8 + $0x30] sm:$0xff]
        %v3696 = vld [vmem:[#allocation8 + $0x38] sm:$0xff]
        %v3697 = vld [vmem:[#allocation8 + $0x40] sm:$0xff]
        %v3698 = vld [vmem:[#allocation8 + $0x48] sm:$0xff]
        %v3699 = vld [vmem:[#allocation8 + $0x50] sm:$0xff]
        %v3700 = vld [vmem:[#allocation8 + $0x58] sm:$0xff]
        %v3701 = vld [vmem:[#allocation8 + $0x60] sm:$0xff]
        %v3702 = vld [vmem:[#allocation8 + $0x68] sm:$0xff]
        %v3703 = vld [vmem:[#allocation8 + $0x70] sm:$0xff]
        %v3704 = vld [vmem:[#allocation8 + $0x78] sm:$0xff]
        %v3705 = vld [vmem:[#allocation8 + $0x80] sm:$0xff]
        %v3706 = vld [vmem:[#allocation8 + $0x88] sm:$0xff]
        %v3707 = vld [vmem:[#allocation8 + $0x90] sm:$0xff]
        %v3708 = vld [vmem:[#allocation8 + $0x98] sm:$0xff]
        %v3709 = vld [vmem:[#allocation8 + $0xa0] sm:$0xff]
        %v3710 = vld [vmem:[#allocation8 + $0xa8] sm:$0xff]
        %v3711 = vld [vmem:[#allocation8 + $0xb0] sm:$0xff]
        %v3712 = vld [vmem:[#allocation8 + $0xb8] sm:$0xff]
        %v3713 = vld [vmem:[#allocation8 + $0xc0] sm:$0xff]
        %v3714 = vld [vmem:[#allocation8 + $0xc8] sm:$0xff]
        %v3715 = vld [vmem:[#allocation8 + $0xd0] sm:$0xff]
        %v3716 = vld [vmem:[#allocation8 + $0xd8] sm:$0xff]
        %v3717 = vld [vmem:[#allocation8 + $0xe0] sm:$0xff]
        %v3718 = vld [vmem:[#allocation8 + $0xe8] sm:$0xff]
        %v3719 = vld [vmem:[#allocation8 + $0xf0] sm:$0xff]
        %v3720 = vld [vmem:[#allocation8 + $0xf8] sm:$0xff]
        %v3721 = vld [vmem:[#allocation8 + $0x100] sm:$0xff]
        %v3722 = vld [vmem:[#allocation8 + $0x108] sm:$0xff]
        %v3723 = vld [vmem:[#allocation8 + $0x110] sm:$0xff]
        %v3724 = vld [vmem:[#allocation8 + $0x118] sm:$0xff]
        %v3725 = vld [vmem:[#allocation8 + $0x120] sm:$0xff]
        %v3726 = vld [vmem:[#allocation8 + $0x128] sm:$0xff]
        %v3727 = vld [vmem:[#allocation8 + $0x130] sm:$0xff]
        %v3728 = vld [vmem:[#allocation8 + $0x138] sm:$0xff]
        %v3729 = vld [vmem:[#allocation8 + $0x140] sm:$0xff]
        %v3730 = vld [vmem:[#allocation8 + $0x148] sm:$0xff]
        %v3731 = vld [vmem:[#allocation8 + $0x150] sm:$0xff]
        %v3732 = vld [vmem:[#allocation8 + $0x158] sm:$0xff]
        %v3733 = vld [vmem:[#allocation8 + $0x160] sm:$0xff]
        %v3734 = vld [vmem:[#allocation8 + $0x168] sm:$0xff]
        %v3735 = vld [vmem:[#allocation8 + $0x170] sm:$0xff]
        %v3736 = vld [vmem:[#allocation8 + $0x178] sm:$0xff]
        %v3737 = vld [vmem:[#allocation8 + $0x180] sm:$0xff]
        %v3738 = vld [vmem:[#allocation8 + $0x188] sm:$0xff]
        %v3739 = vld [vmem:[#allocation8 + $0x190] sm:$0xff]
        %v3740 = vld [vmem:[#allocation8 + $0x198] sm:$0xff]
        %v3741 = vld [vmem:[#allocation8 + $0x1a0] sm:$0xff]
        %v3742 = vld [vmem:[#allocation8 + $0x1a8] sm:$0xff]
        %v3743 = vld [vmem:[#allocation8 + $0x1b0] sm:$0xff]
        %v3744 = vld [vmem:[#allocation8 + $0x1b8] sm:$0xff]
        %v3745 = vld [vmem:[#allocation8 + $0x1c0] sm:$0xff]
        %v3746 = vld [vmem:[#allocation8 + $0x1c8] sm:$0xff]
        %v3747 = vld [vmem:[#allocation8 + $0x1d0] sm:$0xff]
        %v3748 = vld [vmem:[#allocation8 + $0x1d8] sm:$0xff]
        %v3749 = vld [vmem:[#allocation8 + $0x1e0] sm:$0xff]
        %v3750 = vld [vmem:[#allocation8 + $0x1e8] sm:$0xff]
        %v3751 = vld [vmem:[#allocation8 + $0x1f0] sm:$0xff]
        %v3752 = vld [vmem:[#allocation8 + $0x1f8] sm:$0xff]
        %v3753 = vld [vmem:[%s5] sm:$0x3]
        %v3755 = vlaneseq
        %v3756 = vshrl.u32 %v3755, 7
        %v3757 = vsub.s32 0, %v3756
        %v3758 = vrot.slane %v3753, %v3757
        %v3759 = vlaneseq
        %v3760 = vshrl.u32 %v3759, 7
        %v3761 = vsub.s32 1, %v3760
        %v3762 = vrot.slane %v3753, %v3761
        %v3829 = vunpack.c.l.b16 %v3689
        %v3830 = vunpack.c.h.b16 %v3689
        %v3831 = vunpack.c.l.b16 %v3690
        %v3832 = vunpack.c.h.b16 %v3690
        %v3833 = vunpack.c.l.b16 %v3691
        %v3834 = vunpack.c.h.b16 %v3691
        %v3835 = vunpack.c.l.b16 %v3692
        %v3836 = vunpack.c.h.b16 %v3692
        %v3837 = vunpack.c.l.b16 %v3693
        %v3838 = vunpack.c.h.b16 %v3693
        %v3839 = vunpack.c.l.b16 %v3694
        %v3840 = vunpack.c.h.b16 %v3694
        %v3841 = vunpack.c.l.b16 %v3695
        %v3842 = vunpack.c.h.b16 %v3695
        %v3843 = vunpack.c.l.b16 %v3696
        %v3844 = vunpack.c.h.b16 %v3696
        %v3845 = vunpack.c.l.b16 %v3697
        %v3846 = vunpack.c.h.b16 %v3697
        %v3847 = vunpack.c.l.b16 %v3698
        %v3848 = vunpack.c.h.b16 %v3698
        %v3849 = vunpack.c.l.b16 %v3699
        %v3850 = vunpack.c.h.b16 %v3699
        %v3851 = vunpack.c.l.b16 %v3700
        %v3852 = vunpack.c.h.b16 %v3700
        %v3853 = vunpack.c.l.b16 %v3701
        %v3854 = vunpack.c.h.b16 %v3701
        %v3855 = vunpack.c.l.b16 %v3702
        %v3856 = vunpack.c.h.b16 %v3702
        %v3857 = vunpack.c.l.b16 %v3703
        %v3858 = vunpack.c.h.b16 %v3703
        %v3859 = vunpack.c.l.b16 %v3704
        %v3860 = vunpack.c.h.b16 %v3704
        %v3861 = vunpack.c.l.b16 %v3705
        %v3862 = vunpack.c.h.b16 %v3705
        %v3863 = vunpack.c.l.b16 %v3706
        %v3864 = vunpack.c.h.b16 %v3706
        %v3865 = vunpack.c.l.b16 %v3707
        %v3866 = vunpack.c.h.b16 %v3707
        %v3867 = vunpack.c.l.b16 %v3708
        %v3868 = vunpack.c.h.b16 %v3708
        %v3869 = vunpack.c.l.b16 %v3709
        %v3870 = vunpack.c.h.b16 %v3709
        %v3871 = vunpack.c.l.b16 %v3710
        %v3872 = vunpack.c.h.b16 %v3710
        %v3873 = vunpack.c.l.b16 %v3711
        %v3874 = vunpack.c.h.b16 %v3711
        %v3875 = vunpack.c.l.b16 %v3712
        %v3876 = vunpack.c.h.b16 %v3712
        %v3877 = vunpack.c.l.b16 %v3713
        %v3878 = vunpack.c.h.b16 %v3713
        %v3879 = vunpack.c.l.b16 %v3714
        %v3880 = vunpack.c.h.b16 %v3714
        %v3881 = vunpack.c.l.b16 %v3715
        %v3882 = vunpack.c.h.b16 %v3715
        %v3883 = vunpack.c.l.b16 %v3716
        %v3884 = vunpack.c.h.b16 %v3716
        %v3885 = vunpack.c.l.b16 %v3717
        %v3886 = vunpack.c.h.b16 %v3717
        %v3887 = vunpack.c.l.b16 %v3718
        %v3888 = vunpack.c.h.b16 %v3718
        %v3889 = vunpack.c.l.b16 %v3719
        %v3890 = vunpack.c.h.b16 %v3719
        %v3891 = vunpack.c.l.b16 %v3720
        %v3892 = vunpack.c.h.b16 %v3720
        %v3893 = vunpack.c.l.b16 %v3721
        %v3894 = vunpack.c.h.b16 %v3721
        %v3895 = vunpack.c.l.b16 %v3722
        %v3896 = vunpack.c.h.b16 %v3722
        %v3897 = vunpack.c.l.b16 %v3723
        %v3898 = vunpack.c.h.b16 %v3723
        %v3899 = vunpack.c.l.b16 %v3724
        %v3900 = vunpack.c.h.b16 %v3724
        %v3901 = vunpack.c.l.b16 %v3725
        %v3902 = vunpack.c.h.b16 %v3725
        %v3903 = vunpack.c.l.b16 %v3726
        %v3904 = vunpack.c.h.b16 %v3726
        %v3905 = vunpack.c.l.b16 %v3727
        %v3906 = vunpack.c.h.b16 %v3727
        %v3907 = vunpack.c.l.b16 %v3728
        %v3908 = vunpack.c.h.b16 %v3728
        %v3909 = vunpack.c.l.b16 %v3729
        %v3910 = vunpack.c.h.b16 %v3729
        %v3911 = vunpack.c.l.b16 %v3730
        %v3912 = vunpack.c.h.b16 %v3730
        %v3913 = vunpack.c.l.b16 %v3731
        %v3914 = vunpack.c.h.b16 %v3731
        %v3915 = vunpack.c.l.b16 %v3732
        %v3916 = vunpack.c.h.b16 %v3732
        %v3917 = vunpack.c.l.b16 %v3733
        %v3918 = vunpack.c.h.b16 %v3733
        %v3919 = vunpack.c.l.b16 %v3734
        %v3920 = vunpack.c.h.b16 %v3734
        %v3921 = vunpack.c.l.b16 %v3735
        %v3922 = vunpack.c.h.b16 %v3735
        %v3923 = vunpack.c.l.b16 %v3736
        %v3924 = vunpack.c.h.b16 %v3736
        %v3925 = vunpack.c.l.b16 %v3737
        %v3926 = vunpack.c.h.b16 %v3737
        %v3927 = vunpack.c.l.b16 %v3738
        %v3928 = vunpack.c.h.b16 %v3738
        %v3929 = vunpack.c.l.b16 %v3739
        %v3930 = vunpack.c.h.b16 %v3739
        %v3931 = vunpack.c.l.b16 %v3740
        %v3932 = vunpack.c.h.b16 %v3740
        %v3933 = vunpack.c.l.b16 %v3741
        %v3934 = vunpack.c.h.b16 %v3741
        %v3935 = vunpack.c.l.b16 %v3742
        %v3936 = vunpack.c.h.b16 %v3742
        %v3937 = vunpack.c.l.b16 %v3743
        %v3938 = vunpack.c.h.b16 %v3743
        %v3939 = vunpack.c.l.b16 %v3744
        %v3940 = vunpack.c.h.b16 %v3744
        %v3941 = vunpack.c.l.b16 %v3745
        %v3942 = vunpack.c.h.b16 %v3745
        %v3943 = vunpack.c.l.b16 %v3746
        %v3944 = vunpack.c.h.b16 %v3746
        %v3945 = vunpack.c.l.b16 %v3747
        %v3946 = vunpack.c.h.b16 %v3747
        %v3947 = vunpack.c.l.b16 %v3748
        %v3948 = vunpack.c.h.b16 %v3748
        %v3949 = vunpack.c.l.b16 %v3749
        %v3950 = vunpack.c.h.b16 %v3749
        %v3951 = vunpack.c.l.b16 %v3750
        %v3952 = vunpack.c.h.b16 %v3750
        %v3953 = vunpack.c.l.b16 %v3751
        %v3954 = vunpack.c.h.b16 %v3751
        %v3955 = vunpack.c.l.b16 %v3752
        %v3956 = vunpack.c.h.b16 %v3752
        %v3957 = vpack.c.b16 %v3831, %v3829
        %v3958 = vpack.c.b16 %v3832, %v3830
        %v3959 = vpack.c.b16 %v3835, %v3833
        %v3960 = vpack.c.b16 %v3836, %v3834
        %v3961 = vpack.c.b16 %v3839, %v3837
        %v3962 = vpack.c.b16 %v3840, %v3838
        %v3963 = vpack.c.b16 %v3843, %v3841
        %v3964 = vpack.c.b16 %v3844, %v3842
        %v3965 = vpack.c.b16 %v3847, %v3845
        %v3966 = vpack.c.b16 %v3848, %v3846
        %v3967 = vpack.c.b16 %v3851, %v3849
        %v3968 = vpack.c.b16 %v3852, %v3850
        %v3969 = vpack.c.b16 %v3855, %v3853
        %v3970 = vpack.c.b16 %v3856, %v3854
        %v3971 = vpack.c.b16 %v3859, %v3857
        %v3972 = vpack.c.b16 %v3860, %v3858
        %v3973 = vpack.c.b16 %v3863, %v3861
        %v3974 = vpack.c.b16 %v3864, %v3862
        %v3975 = vpack.c.b16 %v3867, %v3865
        %v3976 = vpack.c.b16 %v3868, %v3866
        %v3977 = vpack.c.b16 %v3871, %v3869
        %v3978 = vpack.c.b16 %v3872, %v3870
        %v3979 = vpack.c.b16 %v3875, %v3873
        %v3980 = vpack.c.b16 %v3876, %v3874
        %v3981 = vpack.c.b16 %v3879, %v3877
        %v3982 = vpack.c.b16 %v3880, %v3878
        %v3983 = vpack.c.b16 %v3883, %v3881
        %v3984 = vpack.c.b16 %v3884, %v3882
        %v3985 = vpack.c.b16 %v3887, %v3885
        %v3986 = vpack.c.b16 %v3888, %v3886
        %v3987 = vpack.c.b16 %v3891, %v3889
        %v3988 = vpack.c.b16 %v3892, %v3890
        %v3989 = vpack.c.b16 %v3895, %v3893
        %v3990 = vpack.c.b16 %v3896, %v3894
        %v3991 = vpack.c.b16 %v3899, %v3897
        %v3992 = vpack.c.b16 %v3900, %v3898
        %v3993 = vpack.c.b16 %v3903, %v3901
        %v3994 = vpack.c.b16 %v3904, %v3902
        %v3995 = vpack.c.b16 %v3907, %v3905
        %v3996 = vpack.c.b16 %v3908, %v3906
        %v3997 = vpack.c.b16 %v3911, %v3909
        %v3998 = vpack.c.b16 %v3912, %v3910
        %v3999 = vpack.c.b16 %v3915, %v3913
        %v4000 = vpack.c.b16 %v3916, %v3914
        %v4001 = vpack.c.b16 %v3919, %v3917
        %v4002 = vpack.c.b16 %v3920, %v3918
        %v4003 = vpack.c.b16 %v3923, %v3921
        %v4004 = vpack.c.b16 %v3924, %v3922
        %v4005 = vpack.c.b16 %v3927, %v3925
        %v4006 = vpack.c.b16 %v3928, %v3926
        %v4007 = vpack.c.b16 %v3931, %v3929
        %v4008 = vpack.c.b16 %v3932, %v3930
        %v4009 = vpack.c.b16 %v3935, %v3933
        %v4010 = vpack.c.b16 %v3936, %v3934
        %v4011 = vpack.c.b16 %v3939, %v3937
        %v4012 = vpack.c.b16 %v3940, %v3938
        %v4013 = vpack.c.b16 %v3943, %v3941
        %v4014 = vpack.c.b16 %v3944, %v3942
        %v4015 = vpack.c.b16 %v3947, %v3945
        %v4016 = vpack.c.b16 %v3948, %v3946
        %v4017 = vpack.c.b16 %v3951, %v3949
        %v4018 = vpack.c.b16 %v3952, %v3950
        %v4019 = vpack.c.b16 %v3955, %v3953
        %v4020 = vpack.c.b16 %v3956, %v3954
        %4085 = vmatprep.subr.bf16.mxu0 %v3958
        %4086 = vmatpush1.bf16.msra.mxu0 %v3957
        %4087 = vmatprep.subr.bf16.mxu0 %v3960
        %4088 = vmatpush1.bf16.msra.mxu0 %v3959
        %4089 = vmatprep.subr.bf16.mxu0 %v3962
        %4090 = vmatpush1.bf16.msra.mxu0 %v3961
        %4091 = vmatprep.subr.bf16.mxu0 %v3964
        %4092 = vmatpush1.bf16.msra.mxu0 %v3963
        %4093 = vmatprep.subr.bf16.mxu0 %v3966
        %4094 = vmatpush1.bf16.msra.mxu0 %v3965
        %4095 = vmatprep.subr.bf16.mxu0 %v3968
        %4096 = vmatpush1.bf16.msra.mxu0 %v3967
        %4097 = vmatprep.subr.bf16.mxu0 %v3970
        %4098 = vmatpush1.bf16.msra.mxu0 %v3969
        %4099 = vmatprep.subr.bf16.mxu0 %v3972
        %4100 = vmatpush1.bf16.msra.mxu0 %v3971
        %4101 = vmatprep.subr.bf16.mxu0 %v3974
        %4102 = vmatpush1.bf16.msra.mxu0 %v3973
        %4103 = vmatprep.subr.bf16.mxu0 %v3976
        %4104 = vmatpush1.bf16.msra.mxu0 %v3975
        %4105 = vmatprep.subr.bf16.mxu0 %v3978
        %4106 = vmatpush1.bf16.msra.mxu0 %v3977
        %4107 = vmatprep.subr.bf16.mxu0 %v3980
        %4108 = vmatpush1.bf16.msra.mxu0 %v3979
        %4109 = vmatprep.subr.bf16.mxu0 %v3982
        %4110 = vmatpush1.bf16.msra.mxu0 %v3981
        %4111 = vmatprep.subr.bf16.mxu0 %v3984
        %4112 = vmatpush1.bf16.msra.mxu0 %v3983
        %4113 = vmatprep.subr.bf16.mxu0 %v3986
        %4114 = vmatpush1.bf16.msra.mxu0 %v3985
        %4115 = vmatprep.subr.bf16.mxu0 %v3988
        %4116 = vmatpush1.bf16.msra.mxu0 %v3987
        %4117 = vmatprep.mubr.bf16.mxu0 %v3658
        %4118 = vmatmul.mubr.bf16.gmra.mrb[0].mxu0 %v3657
        %v4119 = vpop.f32.mrb[0].mxu0
        %v4120 = vadd.f32 %v3758, %v4119
        %v4121 = vpop.f32.mrb[0].mxu0
        %v4122 = vadd.f32 %v3762, %v4121
        %v4123 = vpop.f32.mrb[0].mxu0
        %v4124 = vadd.f32 %v3758, %v4123
        %v4125 = vpop.f32.mrb[0].mxu0
        %v4126 = vadd.f32 %v3762, %v4125
        %4127 = vmatprep.mubr.bf16.mxu0 %v3662
        %4128 = vmatmul.mubr.bf16.gmra.mrb[0].mxu0 %v3661
        %v4129 = vpop.f32.mrb[0].mxu0
        %v4130 = vadd.f32 %v3758, %v4129
        %v4131 = vpop.f32.mrb[0].mxu0
        %v4132 = vadd.f32 %v3762, %v4131
        %v4133 = vpop.f32.mrb[0].mxu0
        %v4134 = vadd.f32 %v3758, %v4133
        %v4135 = vpop.f32.mrb[0].mxu0
        %v4136 = vadd.f32 %v3762, %v4135
        %4137 = vmatprep.mubr.bf16.mxu0 %v3666
        %4138 = vmatmul.mubr.bf16.gmra.mrb[0].mxu0 %v3665
        %v4139 = vpop.f32.mrb[0].mxu0
        %v4140 = vadd.f32 %v3758, %v4139
        %v4141 = vpop.f32.mrb[0].mxu0
        %v4142 = vadd.f32 %v3762, %v4141
        %v4143 = vpop.f32.mrb[0].mxu0
        %v4144 = vadd.f32 %v3758, %v4143
        %v4145 = vpop.f32.mrb[0].mxu0
        %v4146 = vadd.f32 %v3762, %v4145
        %4147 = vmatprep.mubr.bf16.mxu0 %v3670
        %4148 = vmatmul.mubr.bf16.gmra.mrb[0].mxu0 %v3669
        %v4149 = vpop.f32.mrb[0].mxu0
        %v4150 = vadd.f32 %v3758, %v4149
        %v4151 = vpop.f32.mrb[0].mxu0
        %v4152 = vadd.f32 %v3762, %v4151
        %v4153 = vpop.f32.mrb[0].mxu0
        %v4154 = vadd.f32 %v3758, %v4153
        %v4155 = vpop.f32.mrb[0].mxu0
        %v4156 = vadd.f32 %v3762, %v4155
        %4157 = vmatprep.mubr.bf16.mxu0 %v3674
        %4158 = vmatmul.mubr.bf16.gmra.mrb[0].mxu0 %v3673
        %v4159 = vpop.f32.mrb[0].mxu0
        %v4160 = vadd.f32 %v3758, %v4159
        %v4161 = vpop.f32.mrb[0].mxu0
        %v4162 = vadd.f32 %v3762, %v4161
        %v4163 = vpop.f32.mrb[0].mxu0
        %v4164 = vadd.f32 %v3758, %v4163
        %v4165 = vpop.f32.mrb[0].mxu0
        %v4166 = vadd.f32 %v3762, %v4165
        %4167 = vmatprep.mubr.bf16.mxu0 %v3678
        %4168 = vmatmul.mubr.bf16.gmra.mrb[0].mxu0 %v3677
        %v4169 = vpop.f32.mrb[0].mxu0
        %v4170 = vadd.f32 %v3758, %v4169
        %v4171 = vpop.f32.mrb[0].mxu0
        %v4172 = vadd.f32 %v3762, %v4171
        %v4173 = vpop.f32.mrb[0].mxu0
        %v4174 = vadd.f32 %v3758, %v4173
        %v4175 = vpop.f32.mrb[0].mxu0
        %v4176 = vadd.f32 %v3762, %v4175
        %4177 = vmatprep.mubr.bf16.mxu0 %v3682
        %4178 = vmatmul.mubr.bf16.gmra.mrb[0].mxu0 %v3681
        %v4179 = vpop.f32.mrb[0].mxu0
        %v4180 = vadd.f32 %v3758, %v4179
        %v4181 = vpop.f32.mrb[0].mxu0
        %v4182 = vadd.f32 %v3762, %v4181
        %v4183 = vpop.f32.mrb[0].mxu0
        %v4184 = vadd.f32 %v3758, %v4183
        %v4185 = vpop.f32.mrb[0].mxu0
        %v4186 = vadd.f32 %v3762, %v4185
        %4187 = vmatprep.mubr.bf16.mxu0 %v3686
        %4188 = vmatmul.mubr.bf16.gmra.mrb[0].mxu0 %v3685
        %v4189 = vpop.f32.mrb[0].mxu0
        %v4190 = vadd.f32 %v3758, %v4189
        %v4191 = vpop.f32.mrb[0].mxu0
        %v4192 = vadd.f32 %v3762, %v4191
        %v4193 = vpop.f32.mrb[0].mxu0
        %v4194 = vadd.f32 %v3758, %v4193
        %v4195 = vpop.f32.mrb[0].mxu0
        %v4196 = vadd.f32 %v3762, %v4195
        %4197 = vdwg.mxu0
        %4198 = vmatprep.subr.bf16.mxu0 %v3990
        %4199 = vmatpush1.bf16.msra.mxu0 %v3989
        %4200 = vmatprep.subr.bf16.mxu0 %v3992
        %4201 = vmatpush1.bf16.msra.mxu0 %v3991
        %4202 = vmatprep.subr.bf16.mxu0 %v3994
        %4203 = vmatpush1.bf16.msra.mxu0 %v3993
        %4204 = vmatprep.subr.bf16.mxu0 %v3996
        %4205 = vmatpush1.bf16.msra.mxu0 %v3995
        %4206 = vmatprep.subr.bf16.mxu0 %v3998
        %4207 = vmatpush1.bf16.msra.mxu0 %v3997
        %4208 = vmatprep.subr.bf16.mxu0 %v4000
        %4209 = vmatpush1.bf16.msra.mxu0 %v3999
        %4210 = vmatprep.subr.bf16.mxu0 %v4002
        %4211 = vmatpush1.bf16.msra.mxu0 %v4001
        %4212 = vmatprep.subr.bf16.mxu0 %v4004
        %4213 = vmatpush1.bf16.msra.mxu0 %v4003
        %4214 = vmatprep.subr.bf16.mxu0 %v4006
        %4215 = vmatpush1.bf16.msra.mxu0 %v4005
        %4216 = vmatprep.subr.bf16.mxu0 %v4008
        %4217 = vmatpush1.bf16.msra.mxu0 %v4007
        %4218 = vmatprep.subr.bf16.mxu0 %v4010
        %4219 = vmatpush1.bf16.msra.mxu0 %v4009
        %4220 = vmatprep.subr.bf16.mxu0 %v4012
        %4221 = vmatpush1.bf16.msra.mxu0 %v4011
        %4222 = vmatprep.subr.bf16.mxu0 %v4014
        %4223 = vmatpush1.bf16.msra.mxu0 %v4013
        %4224 = vmatprep.subr.bf16.mxu0 %v4016
        %4225 = vmatpush1.bf16.msra.mxu0 %v4015
        %4226 = vmatprep.subr.bf16.mxu0 %v4018
        %4227 = vmatpush1.bf16.msra.mxu0 %v4017
        %4228 = vmatprep.subr.bf16.mxu0 %v4020
        %4229 = vmatpush1.bf16.msra.mxu0 %v4019
        %4230 = vmatprep.mubr.bf16.mxu0 %v3660
        %4231 = vmatmul.mubr.bf16.gmra.mrb[0].mxu0 %v3659
        %v4232 = vpop.f32.mrb[0].mxu0
        %v4233 = vadd.f32 %v4120, %v4232
        %v4234 = vpop.f32.mrb[0].mxu0
        %v4235 = vadd.f32 %v4122, %v4234
        %v4236 = vpop.f32.mrb[0].mxu0
        %v4237 = vadd.f32 %v4124, %v4236
        %v4238 = vpop.f32.mrb[0].mxu0
        %v4239 = vadd.f32 %v4126, %v4238
        %4240 = vmatprep.mubr.bf16.mxu0 %v3664
        %4241 = vmatmul.mubr.bf16.gmra.mrb[0].mxu0 %v3663
        %v4242 = vpop.f32.mrb[0].mxu0
        %v4243 = vadd.f32 %v4130, %v4242
        %v4244 = vpop.f32.mrb[0].mxu0
        %v4245 = vadd.f32 %v4132, %v4244
        %v4246 = vpop.f32.mrb[0].mxu0
        %v4247 = vadd.f32 %v4134, %v4246
        %v4248 = vpop.f32.mrb[0].mxu0
        %v4249 = vadd.f32 %v4136, %v4248
        %4250 = vmatprep.mubr.bf16.mxu0 %v3668
        %4251 = vmatmul.mubr.bf16.gmra.mrb[0].mxu0 %v3667
        %v4252 = vpop.f32.mrb[0].mxu0
        %v4253 = vadd.f32 %v4140, %v4252
        %v4254 = vpop.f32.mrb[0].mxu0
        %v4255 = vadd.f32 %v4142, %v4254
        %v4256 = vpop.f32.mrb[0].mxu0
        %v4257 = vadd.f32 %v4144, %v4256
        %v4258 = vpop.f32.mrb[0].mxu0
        %v4259 = vadd.f32 %v4146, %v4258
        %4260 = vmatprep.mubr.bf16.mxu0 %v3672
        %4261 = vmatmul.mubr.bf16.gmra.mrb[0].mxu0 %v3671
        %v4262 = vpop.f32.mrb[0].mxu0
        %v4263 = vadd.f32 %v4150, %v4262
        %v4264 = vpop.f32.mrb[0].mxu0
        %v4265 = vadd.f32 %v4152, %v4264
        %v4266 = vpop.f32.mrb[0].mxu0
        %v4267 = vadd.f32 %v4154, %v4266
        %v4268 = vpop.f32.mrb[0].mxu0
        %v4269 = vadd.f32 %v4156, %v4268
        %4270 = vmatprep.mubr.bf16.mxu0 %v3676
        %4271 = vmatmul.mubr.bf16.gmra.mrb[0].mxu0 %v3675
        %v4272 = vpop.f32.mrb[0].mxu0
        %v4273 = vadd.f32 %v4160, %v4272
        %v4274 = vpop.f32.mrb[0].mxu0
        %v4275 = vadd.f32 %v4162, %v4274
        %v4276 = vpop.f32.mrb[0].mxu0
        %v4277 = vadd.f32 %v4164, %v4276
        %v4278 = vpop.f32.mrb[0].mxu0
        %v4279 = vadd.f32 %v4166, %v4278
        %4280 = vmatprep.mubr.bf16.mxu0 %v3680
        %4281 = vmatmul.mubr.bf16.gmra.mrb[0].mxu0 %v3679
        %v4282 = vpop.f32.mrb[0].mxu0
        %v4283 = vadd.f32 %v4170, %v4282
        %v4284 = vpop.f32.mrb[0].mxu0
        %v4285 = vadd.f32 %v4172, %v4284
        %v4286 = vpop.f32.mrb[0].mxu0
        %v4287 = vadd.f32 %v4174, %v4286
        %v4288 = vpop.f32.mrb[0].mxu0
        %v4289 = vadd.f32 %v4176, %v4288
        %4290 = vmatprep.mubr.bf16.mxu0 %v3684
        %4291 = vmatmul.mubr.bf16.gmra.mrb[0].mxu0 %v3683
        %v4292 = vpop.f32.mrb[0].mxu0
        %v4293 = vadd.f32 %v4180, %v4292
        %v4294 = vpop.f32.mrb[0].mxu0
        %v4295 = vadd.f32 %v4182, %v4294
        %v4296 = vpop.f32.mrb[0].mxu0
        %v4297 = vadd.f32 %v4184, %v4296
        %v4298 = vpop.f32.mrb[0].mxu0
        %v4299 = vadd.f32 %v4186, %v4298
        %4300 = vmatprep.mubr.bf16.mxu0 %v3688
        %4301 = vmatmul.mubr.bf16.gmra.mrb[0].mxu0 %v3687
        %v4302 = vpop.f32.mrb[0].mxu0
        %v4303 = vadd.f32 %v4190, %v4302
        %v4304 = vpop.f32.mrb[0].mxu0
        %v4305 = vadd.f32 %v4192, %v4304
        %v4306 = vpop.f32.mrb[0].mxu0
        %v4307 = vadd.f32 %v4194, %v4306
        %v4308 = vpop.f32.mrb[0].mxu0
        %v4309 = vadd.f32 %v4196, %v4308
        %4310 = vdwg.mxu0
        %vm4311 = vcmp.gt.f32.partialorder %v4233, 0.0
        %vm4312 = vcmp.gt.f32.partialorder %v4235, 0.0
        %vm4313 = vcmp.gt.f32.partialorder %v4237, 0.0
        %vm4314 = vcmp.gt.f32.partialorder %v4239, 0.0
        %vm4315 = vcmp.gt.f32.partialorder %v4243, 0.0
        %vm4316 = vcmp.gt.f32.partialorder %v4245, 0.0
        %vm4317 = vcmp.gt.f32.partialorder %v4247, 0.0
        %vm4318 = vcmp.gt.f32.partialorder %v4249, 0.0
        %vm4319 = vcmp.gt.f32.partialorder %v4253, 0.0
        %vm4320 = vcmp.gt.f32.partialorder %v4255, 0.0
        %vm4321 = vcmp.gt.f32.partialorder %v4257, 0.0
        %vm4322 = vcmp.gt.f32.partialorder %v4259, 0.0
        %vm4323 = vcmp.gt.f32.partialorder %v4263, 0.0
        %vm4324 = vcmp.gt.f32.partialorder %v4265, 0.0
        %vm4325 = vcmp.gt.f32.partialorder %v4267, 0.0
        %vm4326 = vcmp.gt.f32.partialorder %v4269, 0.0
        %vm4327 = vcmp.gt.f32.partialorder %v4273, 0.0
        %vm4328 = vcmp.gt.f32.partialorder %v4275, 0.0
        %vm4329 = vcmp.gt.f32.partialorder %v4277, 0.0
        %vm4330 = vcmp.gt.f32.partialorder %v4279, 0.0
        %vm4331 = vcmp.gt.f32.partialorder %v4283, 0.0
        %vm4332 = vcmp.gt.f32.partialorder %v4285, 0.0
        %vm4333 = vcmp.gt.f32.partialorder %v4287, 0.0
        %vm4334 = vcmp.gt.f32.partialorder %v4289, 0.0
        %vm4335 = vcmp.gt.f32.partialorder %v4293, 0.0
        %vm4336 = vcmp.gt.f32.partialorder %v4295, 0.0
        %vm4337 = vcmp.gt.f32.partialorder %v4297, 0.0
        %vm4338 = vcmp.gt.f32.partialorder %v4299, 0.0
        %vm4339 = vcmp.gt.f32.partialorder %v4303, 0.0
        %vm4340 = vcmp.gt.f32.partialorder %v4305, 0.0
        %vm4341 = vcmp.gt.f32.partialorder %v4307, 0.0
        %vm4342 = vcmp.gt.f32.partialorder %v4309, 0.0
        %v4343 = vmul.f32 %v4233, 1.442695
        %v4344 = vpow.pop %v4343
        %v4345 = vmul.f32 %v4235, 1.442695
        %v4346 = vpow.pop %v4345
        %v4347 = vmul.f32 %v4237, 1.442695
        %v4348 = vpow.pop %v4347
        %v4349 = vmul.f32 %v4239, 1.442695
        %v4350 = vpow.pop %v4349
        %v4351 = vmul.f32 %v4243, 1.442695
        %v4352 = vpow.pop %v4351
        %v4353 = vmul.f32 %v4245, 1.442695
        %v4354 = vpow.pop %v4353
        %v4355 = vmul.f32 %v4247, 1.442695
        %v4356 = vpow.pop %v4355
        %v4357 = vmul.f32 %v4249, 1.442695
        %v4358 = vpow.pop %v4357
        %v4359 = vmul.f32 %v4253, 1.442695
        %v4360 = vpow.pop %v4359
        %v4361 = vmul.f32 %v4255, 1.442695
        %v4362 = vpow.pop %v4361
        %v4363 = vmul.f32 %v4257, 1.442695
        %v4364 = vpow.pop %v4363
        %v4365 = vmul.f32 %v4259, 1.442695
        %v4366 = vpow.pop %v4365
        %v4367 = vmul.f32 %v4263, 1.442695
        %v4368 = vpow.pop %v4367
        %v4369 = vmul.f32 %v4265, 1.442695
        %v4370 = vpow.pop %v4369
        %v4371 = vmul.f32 %v4267, 1.442695
        %v4372 = vpow.pop %v4371
        %v4373 = vmul.f32 %v4269, 1.442695
        %v4374 = vpow.pop %v4373
        %v4375 = vmul.f32 %v4273, 1.442695
        %v4376 = vpow.pop %v4375
        %v4377 = vmul.f32 %v4275, 1.442695
        %v4378 = vpow.pop %v4377
        %v4379 = vmul.f32 %v4277, 1.442695
        %v4380 = vpow.pop %v4379
        %v4381 = vmul.f32 %v4279, 1.442695
        %v4382 = vpow.pop %v4381
        %v4383 = vmul.f32 %v4283, 1.442695
        %v4384 = vpow.pop %v4383
        %v4385 = vmul.f32 %v4285, 1.442695
        %v4386 = vpow.pop %v4385
        %v4387 = vmul.f32 %v4287, 1.442695
        %v4388 = vpow.pop %v4387
        %v4389 = vmul.f32 %v4289, 1.442695
        %v4390 = vpow.pop %v4389
        %v4391 = vmul.f32 %v4293, 1.442695
        %v4392 = vpow.pop %v4391
        %v4393 = vmul.f32 %v4295, 1.442695
        %v4394 = vpow.pop %v4393
        %v4395 = vmul.f32 %v4297, 1.442695
        %v4396 = vpow.pop %v4395
        %v4397 = vmul.f32 %v4299, 1.442695
        %v4398 = vpow.pop %v4397
        %v4399 = vmul.f32 %v4303, 1.442695
        %v4400 = vpow.pop %v4399
        %v4401 = vmul.f32 %v4305, 1.442695
        %v4402 = vpow.pop %v4401
        %v4403 = vmul.f32 %v4307, 1.442695
        %v4404 = vpow.pop %v4403
        %v4405 = vmul.f32 %v4309, 1.442695
        %v4406 = vpow.pop %v4405
        %v4407 = vsub.f32 %v4344, 1.0
        %v4408 = vsub.f32 %v4346, 1.0
        %v4409 = vsub.f32 %v4348, 1.0
        %v4410 = vsub.f32 %v4350, 1.0
        %v4411 = vsub.f32 %v4352, 1.0
        %v4412 = vsub.f32 %v4354, 1.0
        %v4413 = vsub.f32 %v4356, 1.0
        %v4414 = vsub.f32 %v4358, 1.0
        %v4415 = vsub.f32 %v4360, 1.0
        %v4416 = vsub.f32 %v4362, 1.0
        %v4417 = vsub.f32 %v4364, 1.0
        %v4418 = vsub.f32 %v4366, 1.0
        %v4419 = vsub.f32 %v4368, 1.0
        %v4420 = vsub.f32 %v4370, 1.0
        %v4421 = vsub.f32 %v4372, 1.0
        %v4422 = vsub.f32 %v4374, 1.0
        %v4423 = vsub.f32 %v4376, 1.0
        %v4424 = vsub.f32 %v4378, 1.0
        %v4425 = vsub.f32 %v4380, 1.0
        %v4426 = vsub.f32 %v4382, 1.0
        %v4427 = vsub.f32 %v4384, 1.0
        %v4428 = vsub.f32 %v4386, 1.0
        %v4429 = vsub.f32 %v4388, 1.0
        %v4430 = vsub.f32 %v4390, 1.0
        %v4431 = vsub.f32 %v4392, 1.0
        %v4432 = vsub.f32 %v4394, 1.0
        %v4433 = vsub.f32 %v4396, 1.0
        %v4434 = vsub.f32 %v4398, 1.0
        %v4435 = vsub.f32 %v4400, 1.0
        %v4436 = vsub.f32 %v4402, 1.0
        %v4437 = vsub.f32 %v4404, 1.0
        %v4438 = vsub.f32 %v4406, 1.0
        %v4439 = vsel %vm4311, %v4233, %v4407
        %v4440 = vsel %vm4312, %v4235, %v4408
        %v4441 = vsel %vm4313, %v4237, %v4409
        %v4442 = vsel %vm4314, %v4239, %v4410
        %v4443 = vsel %vm4315, %v4243, %v4411
        %v4444 = vsel %vm4316, %v4245, %v4412
        %v4445 = vsel %vm4317, %v4247, %v4413
        %v4446 = vsel %vm4318, %v4249, %v4414
        %v4447 = vsel %vm4319, %v4253, %v4415
        %v4448 = vsel %vm4320, %v4255, %v4416
        %v4449 = vsel %vm4321, %v4257, %v4417
        %v4450 = vsel %vm4322, %v4259, %v4418
        %v4451 = vsel %vm4323, %v4263, %v4419
        %v4452 = vsel %vm4324, %v4265, %v4420
        %v4453 = vsel %vm4325, %v4267, %v4421
        %v4454 = vsel %vm4326, %v4269, %v4422
        %v4455 = vsel %vm4327, %v4273, %v4423
        %v4456 = vsel %vm4328, %v4275, %v4424
        %v4457 = vsel %vm4329, %v4277, %v4425
        %v4458 = vsel %vm4330, %v4279, %v4426
        %v4459 = vsel %vm4331, %v4283, %v4427
        %v4460 = vsel %vm4332, %v4285, %v4428
        %v4461 = vsel %vm4333, %v4287, %v4429
        %v4462 = vsel %vm4334, %v4289, %v4430
        %v4463 = vsel %vm4335, %v4293, %v4431
        %v4464 = vsel %vm4336, %v4295, %v4432
        %v4465 = vsel %vm4337, %v4297, %v4433
        %v4466 = vsel %vm4338, %v4299, %v4434
        %v4467 = vsel %vm4339, %v4303, %v4435
        %v4468 = vsel %vm4340, %v4305, %v4436
        %v4469 = vsel %vm4341, %v4307, %v4437
        %v4470 = vsel %vm4342, %v4309, %v4438
        %v4471 = vpack.c.bf16 %v4441, %v4439
        %v4472 = vpack.c.bf16 %v4442, %v4440
        %v4473 = vpack.c.bf16 %v4445, %v4443
        %v4474 = vpack.c.bf16 %v4446, %v4444
        %v4475 = vpack.c.bf16 %v4449, %v4447
        %v4476 = vpack.c.bf16 %v4450, %v4448
        %v4477 = vpack.c.bf16 %v4453, %v4451
        %v4478 = vpack.c.bf16 %v4454, %v4452
        %v4479 = vpack.c.bf16 %v4457, %v4455
        %v4480 = vpack.c.bf16 %v4458, %v4456
        %v4481 = vpack.c.bf16 %v4461, %v4459
        %v4482 = vpack.c.bf16 %v4462, %v4460
        %v4483 = vpack.c.bf16 %v4465, %v4463
        %v4484 = vpack.c.bf16 %v4466, %v4464
        %v4485 = vpack.c.bf16 %v4469, %v4467
        %v4486 = vpack.c.bf16 %v4470, %v4468
        %v4487 = vld [vmem:[#allocation10] sm:$0xf]
        %v4488 = vld [vmem:[#allocation10 + $0x4] sm:$0xf]
        %v4489 = vld [vmem:[#allocation10 + $0x8] sm:$0xf]
        %v4490 = vld [vmem:[#allocation10 + $0xc] sm:$0xf]
        %v4491 = vld [vmem:[#allocation10 + $0x10] sm:$0xf]
        %v4492 = vld [vmem:[#allocation10 + $0x14] sm:$0xf]
        %v4493 = vld [vmem:[#allocation10 + $0x18] sm:$0xf]
        %v4494 = vld [vmem:[#allocation10 + $0x1c] sm:$0xf]
        %v4495 = vld [vmem:[#allocation10 + $0x20] sm:$0xf]
        %v4496 = vld [vmem:[#allocation10 + $0x24] sm:$0xf]
        %v4497 = vld [vmem:[#allocation10 + $0x28] sm:$0xf]
        %v4498 = vld [vmem:[#allocation10 + $0x2c] sm:$0xf]
        %v4499 = vld [vmem:[#allocation10 + $0x30] sm:$0xf]
        %v4500 = vld [vmem:[#allocation10 + $0x34] sm:$0xf]
        %v4501 = vld [vmem:[#allocation10 + $0x38] sm:$0xf]
        %v4502 = vld [vmem:[#allocation10 + $0x3c] sm:$0xf]
        %v4503 = vld [vmem:[#allocation10 + $0x40] sm:$0xf]
        %v4504 = vld [vmem:[#allocation10 + $0x44] sm:$0xf]
        %v4505 = vld [vmem:[#allocation10 + $0x48] sm:$0xf]
        %v4506 = vld [vmem:[#allocation10 + $0x4c] sm:$0xf]
        %v4507 = vld [vmem:[#allocation10 + $0x50] sm:$0xf]
        %v4508 = vld [vmem:[#allocation10 + $0x54] sm:$0xf]
        %v4509 = vld [vmem:[#allocation10 + $0x58] sm:$0xf]
        %v4510 = vld [vmem:[#allocation10 + $0x5c] sm:$0xf]
        %v4511 = vld [vmem:[#allocation10 + $0x60] sm:$0xf]
        %v4512 = vld [vmem:[#allocation10 + $0x64] sm:$0xf]
        %v4513 = vld [vmem:[#allocation10 + $0x68] sm:$0xf]
        %v4514 = vld [vmem:[#allocation10 + $0x6c] sm:$0xf]
        %v4515 = vld [vmem:[#allocation10 + $0x70] sm:$0xf]
        %v4516 = vld [vmem:[#allocation10 + $0x74] sm:$0xf]
        %v4517 = vld [vmem:[#allocation10 + $0x78] sm:$0xf]
        %v4518 = vld [vmem:[#allocation10 + $0x7c] sm:$0xf]
        %v4519 = vld [vmem:[%s7] sm:$0x1]
        %v4521 = vlaneseq
        %v4522 = vshrl.u32 %v4521, 7
        %v4523 = vsub.s32 0, %v4522
        %v4524 = vrot.slane %v4519, %v4523
        %v4558 = vunpack.c.l.b16 %v4487
        %v4559 = vunpack.c.l.b16 %v4488
        %v4560 = vunpack.c.l.b16 %v4489
        %v4561 = vunpack.c.l.b16 %v4490
        %v4562 = vunpack.c.l.b16 %v4491
        %v4563 = vunpack.c.l.b16 %v4492
        %v4564 = vunpack.c.l.b16 %v4493
        %v4565 = vunpack.c.l.b16 %v4494
        %v4566 = vunpack.c.l.b16 %v4495
        %v4567 = vunpack.c.l.b16 %v4496
        %v4568 = vunpack.c.l.b16 %v4497
        %v4569 = vunpack.c.l.b16 %v4498
        %v4570 = vunpack.c.l.b16 %v4499
        %v4571 = vunpack.c.l.b16 %v4500
        %v4572 = vunpack.c.l.b16 %v4501
        %v4573 = vunpack.c.l.b16 %v4502
        %v4574 = vunpack.c.l.b16 %v4503
        %v4575 = vunpack.c.l.b16 %v4504
        %v4576 = vunpack.c.l.b16 %v4505
        %v4577 = vunpack.c.l.b16 %v4506
        %v4578 = vunpack.c.l.b16 %v4507
        %v4579 = vunpack.c.l.b16 %v4508
        %v4580 = vunpack.c.l.b16 %v4509
        %v4581 = vunpack.c.l.b16 %v4510
        %v4582 = vunpack.c.l.b16 %v4511
        %v4583 = vunpack.c.l.b16 %v4512
        %v4584 = vunpack.c.l.b16 %v4513
        %v4585 = vunpack.c.l.b16 %v4514
        %v4586 = vunpack.c.l.b16 %v4515
        %v4587 = vunpack.c.l.b16 %v4516
        %v4588 = vunpack.c.l.b16 %v4517
        %v4589 = vunpack.c.l.b16 %v4518
        %v4590 = vpack.c.b16 %v4559, %v4558
        %v4591 = vpack.c.b16 %v4561, %v4560
        %v4592 = vpack.c.b16 %v4563, %v4562
        %v4593 = vpack.c.b16 %v4565, %v4564
        %v4594 = vpack.c.b16 %v4567, %v4566
        %v4595 = vpack.c.b16 %v4569, %v4568
        %v4596 = vpack.c.b16 %v4571, %v4570
        %v4597 = vpack.c.b16 %v4573, %v4572
        %v4598 = vpack.c.b16 %v4575, %v4574
        %v4599 = vpack.c.b16 %v4577, %v4576
        %v4600 = vpack.c.b16 %v4579, %v4578
        %v4601 = vpack.c.b16 %v4581, %v4580
        %v4602 = vpack.c.b16 %v4583, %v4582
        %v4603 = vpack.c.b16 %v4585, %v4584
        %v4604 = vpack.c.b16 %v4587, %v4586
        %v4605 = vpack.c.b16 %v4589, %v4588
        %4622 = vmatprep.subr.bf16.mxu0 0
        %4623 = vmatpush1.bf16.msra.mxu0 %v4590
        %4624 = vmatprep.subr.bf16.mxu0 0
        %4625 = vmatpush1.bf16.msra.mxu0 %v4591
        %4626 = vmatprep.subr.bf16.mxu0 0
        %4627 = vmatpush1.bf16.msra.mxu0 %v4592
        %4628 = vmatprep.subr.bf16.mxu0 0
        %4629 = vmatpush1.bf16.msra.mxu0 %v4593
        %4630 = vmatprep.subr.bf16.mxu0 0
        %4631 = vmatpush1.bf16.msra.mxu0 %v4594
        %4632 = vmatprep.subr.bf16.mxu0 0
        %4633 = vmatpush1.bf16.msra.mxu0 %v4595
        %4634 = vmatprep.subr.bf16.mxu0 0
        %4635 = vmatpush1.bf16.msra.mxu0 %v4596
        %4636 = vmatprep.subr.bf16.mxu0 0
        %4637 = vmatpush1.bf16.msra.mxu0 %v4597
        %4638 = vmatprep.subr.bf16.mxu0 0
        %4639 = vmatpush1.bf16.msra.mxu0 %v4598
        %4640 = vmatprep.subr.bf16.mxu0 0
        %4641 = vmatpush1.bf16.msra.mxu0 %v4599
        %4642 = vmatprep.subr.bf16.mxu0 0
        %4643 = vmatpush1.bf16.msra.mxu0 %v4600
        %4644 = vmatprep.subr.bf16.mxu0 0
        %4645 = vmatpush1.bf16.msra.mxu0 %v4601
        %4646 = vmatprep.subr.bf16.mxu0 0
        %4647 = vmatpush1.bf16.msra.mxu0 %v4602
        %4648 = vmatprep.subr.bf16.mxu0 0
        %4649 = vmatpush1.bf16.msra.mxu0 %v4603
        %4650 = vmatprep.subr.bf16.mxu0 0
        %4651 = vmatpush1.bf16.msra.mxu0 %v4604
        %4652 = vmatprep.subr.bf16.mxu0 0
        %4653 = vmatpush1.bf16.msra.mxu0 %v4605
        %4654 = vmatprep.mubr.bf16.mxu0 %v4472
        %4655 = vmatmul.mubr.bf16.gmra.mrb[0].mxu0 %v4471
        %v4656 = vpop.f32.mrb[0].mxu0
        %v4657 = vadd.f32 %v4524, %v4656
        %v4658 = vpop.f32.mrb[0].mxu0
        %v4659 = vpop.f32.mrb[0].mxu0
        %v4660 = vadd.f32 %v4524, %v4659
        %v4661 = vpop.f32.mrb[0].mxu0
        %4662 = vmatprep.mubr.bf16.mxu0 %v4474
        %4663 = vmatmul.mubr.bf16.gmra.mrb[0].mxu0 %v4473
        %v4664 = vpop.f32.mrb[0].mxu0
        %v4665 = vadd.f32 %v4524, %v4664
        %v4666 = vpop.f32.mrb[0].mxu0
        %v4667 = vpop.f32.mrb[0].mxu0
        %v4668 = vadd.f32 %v4524, %v4667
        %v4669 = vpop.f32.mrb[0].mxu0
        %4670 = vmatprep.mubr.bf16.mxu0 %v4476
        %4671 = vmatmul.mubr.bf16.gmra.mrb[0].mxu0 %v4475
        %v4672 = vpop.f32.mrb[0].mxu0
        %v4673 = vadd.f32 %v4524, %v4672
        %v4674 = vpop.f32.mrb[0].mxu0
        %v4675 = vpop.f32.mrb[0].mxu0
        %v4676 = vadd.f32 %v4524, %v4675
        %v4677 = vpop.f32.mrb[0].mxu0
        %4678 = vmatprep.mubr.bf16.mxu0 %v4478
        %4679 = vmatmul.mubr.bf16.gmra.mrb[0].mxu0 %v4477
        %v4680 = vpop.f32.mrb[0].mxu0
        %v4681 = vadd.f32 %v4524, %v4680
        %v4682 = vpop.f32.mrb[0].mxu0
        %v4683 = vpop.f32.mrb[0].mxu0
        %v4684 = vadd.f32 %v4524, %v4683
        %v4685 = vpop.f32.mrb[0].mxu0
        %4686 = vmatprep.mubr.bf16.mxu0 %v4480
        %4687 = vmatmul.mubr.bf16.gmra.mrb[0].mxu0 %v4479
        %v4688 = vpop.f32.mrb[0].mxu0
        %v4689 = vadd.f32 %v4524, %v4688
        %v4690 = vpop.f32.mrb[0].mxu0
        %v4691 = vpop.f32.mrb[0].mxu0
        %v4692 = vadd.f32 %v4524, %v4691
        %v4693 = vpop.f32.mrb[0].mxu0
        %4694 = vmatprep.mubr.bf16.mxu0 %v4482
        %4695 = vmatmul.mubr.bf16.gmra.mrb[0].mxu0 %v4481
        %v4696 = vpop.f32.mrb[0].mxu0
        %v4697 = vadd.f32 %v4524, %v4696
        %v4698 = vpop.f32.mrb[0].mxu0
        %v4699 = vpop.f32.mrb[0].mxu0
        %v4700 = vadd.f32 %v4524, %v4699
        %v4701 = vpop.f32.mrb[0].mxu0
        %4702 = vmatprep.mubr.bf16.mxu0 %v4484
        %4703 = vmatmul.mubr.bf16.gmra.mrb[0].mxu0 %v4483
        %v4704 = vpop.f32.mrb[0].mxu0
        %v4705 = vadd.f32 %v4524, %v4704
        %v4706 = vpop.f32.mrb[0].mxu0
        %v4707 = vpop.f32.mrb[0].mxu0
        %v4708 = vadd.f32 %v4524, %v4707
        %v4709 = vpop.f32.mrb[0].mxu0
        %4710 = vmatprep.mubr.bf16.mxu0 %v4486
        %4711 = vmatmul.mubr.bf16.gmra.mrb[0].mxu0 %v4485
        %v4712 = vpop.f32.mrb[0].mxu0
        %v4713 = vadd.f32 %v4524, %v4712
        %v4714 = vpop.f32.mrb[0].mxu0
        %v4715 = vpop.f32.mrb[0].mxu0
        %v4716 = vadd.f32 %v4524, %v4715
        %v4717 = vpop.f32.mrb[0].mxu0
        %4718 = vdwg.mxu0
        %vm4719 = vcmp.gt.f32.partialorder %v4657, 0.0
        %vm4720 = vcmp.gt.f32.partialorder %v4660, 0.0
        %vm4721 = vcmp.gt.f32.partialorder %v4665, 0.0
        %vm4722 = vcmp.gt.f32.partialorder %v4668, 0.0
        %vm4723 = vcmp.gt.f32.partialorder %v4673, 0.0
        %vm4724 = vcmp.gt.f32.partialorder %v4676, 0.0
        %vm4725 = vcmp.gt.f32.partialorder %v4681, 0.0
        %vm4726 = vcmp.gt.f32.partialorder %v4684, 0.0
        %vm4727 = vcmp.gt.f32.partialorder %v4689, 0.0
        %vm4728 = vcmp.gt.f32.partialorder %v4692, 0.0
        %vm4729 = vcmp.gt.f32.partialorder %v4697, 0.0
        %vm4730 = vcmp.gt.f32.partialorder %v4700, 0.0
        %vm4731 = vcmp.gt.f32.partialorder %v4705, 0.0
        %vm4732 = vcmp.gt.f32.partialorder %v4708, 0.0
        %vm4733 = vcmp.gt.f32.partialorder %v4713, 0.0
        %vm4734 = vcmp.gt.f32.partialorder %v4716, 0.0
        %v4735 = vmul.f32 %v4657, 1.442695
        %v4736 = vpow.pop %v4735
        %v4737 = vmul.f32 %v4660, 1.442695
        %v4738 = vpow.pop %v4737
        %v4739 = vmul.f32 %v4665, 1.442695
        %v4740 = vpow.pop %v4739
        %v4741 = vmul.f32 %v4668, 1.442695
        %v4742 = vpow.pop %v4741
        %v4743 = vmul.f32 %v4673, 1.442695
        %v4744 = vpow.pop %v4743
        %v4745 = vmul.f32 %v4676, 1.442695
        %v4746 = vpow.pop %v4745
        %v4747 = vmul.f32 %v4681, 1.442695
        %v4748 = vpow.pop %v4747
        %v4749 = vmul.f32 %v4684, 1.442695
        %v4750 = vpow.pop %v4749
        %v4751 = vmul.f32 %v4689, 1.442695
        %v4752 = vpow.pop %v4751
        %v4753 = vmul.f32 %v4692, 1.442695
        %v4754 = vpow.pop %v4753
        %v4755 = vmul.f32 %v4697, 1.442695
        %v4756 = vpow.pop %v4755
        %v4757 = vmul.f32 %v4700, 1.442695
        %v4758 = vpow.pop %v4757
        %v4759 = vmul.f32 %v4705, 1.442695
        %v4760 = vpow.pop %v4759
        %v4761 = vmul.f32 %v4708, 1.442695
        %v4762 = vpow.pop %v4761
        %v4763 = vmul.f32 %v4713, 1.442695
        %v4764 = vpow.pop %v4763
        %v4765 = vmul.f32 %v4716, 1.442695
        %v4766 = vpow.pop %v4765
        %v4767 = vsub.f32 %v4736, 1.0
        %v4768 = vsub.f32 %v4738, 1.0
        %v4769 = vsub.f32 %v4740, 1.0
        %v4770 = vsub.f32 %v4742, 1.0
        %v4771 = vsub.f32 %v4744, 1.0
        %v4772 = vsub.f32 %v4746, 1.0
        %v4773 = vsub.f32 %v4748, 1.0
        %v4774 = vsub.f32 %v4750, 1.0
        %v4775 = vsub.f32 %v4752, 1.0
        %v4776 = vsub.f32 %v4754, 1.0
        %v4777 = vsub.f32 %v4756, 1.0
        %v4778 = vsub.f32 %v4758, 1.0
        %v4779 = vsub.f32 %v4760, 1.0
        %v4780 = vsub.f32 %v4762, 1.0
        %v4781 = vsub.f32 %v4764, 1.0
        %v4782 = vsub.f32 %v4766, 1.0
        %v4783 = vsel %vm4719, %v4657, %v4767
        %v4784 = vsel %vm4720, %v4660, %v4768
        %v4785 = vsel %vm4721, %v4665, %v4769
        %v4786 = vsel %vm4722, %v4668, %v4770
        %v4787 = vsel %vm4723, %v4673, %v4771
        %v4788 = vsel %vm4724, %v4676, %v4772
        %v4789 = vsel %vm4725, %v4681, %v4773
        %v4790 = vsel %vm4726, %v4684, %v4774
        %v4791 = vsel %vm4727, %v4689, %v4775
        %v4792 = vsel %vm4728, %v4692, %v4776
        %v4793 = vsel %vm4729, %v4697, %v4777
        %v4794 = vsel %vm4730, %v4700, %v4778
        %v4795 = vsel %vm4731, %v4705, %v4779
        %v4796 = vsel %vm4732, %v4708, %v4780
        %v4797 = vsel %vm4733, %v4713, %v4781
        %v4798 = vsel %vm4734, %v4716, %v4782
        %v4799 = vpack.c.bf16 %v4784, %v4783
        %v4800 = vpack.c.bf16 %v4786, %v4785
        %v4801 = vpack.c.bf16 %v4788, %v4787
        %v4802 = vpack.c.bf16 %v4790, %v4789
        %v4803 = vpack.c.bf16 %v4792, %v4791
        %v4804 = vpack.c.bf16 %v4794, %v4793
        %v4805 = vpack.c.bf16 %v4796, %v4795
        %v4806 = vpack.c.bf16 %v4798, %v4797
        %v4807 = vld [vmem:[#allocation11] sm:$0xff]
        %v4808 = vld [vmem:[#allocation11 + $0x8] sm:$0xff]
        %v4809 = vld [vmem:[#allocation11 + $0x10] sm:$0xff]
        %v4810 = vld [vmem:[#allocation11 + $0x18] sm:$0xff]
        %v4811 = vld [vmem:[#allocation11 + $0x20] sm:$0xff]
        %v4812 = vld [vmem:[#allocation11 + $0x28] sm:$0xff]
        %v4813 = vld [vmem:[#allocation11 + $0x30] sm:$0xff]
        %v4814 = vld [vmem:[#allocation11 + $0x38] sm:$0xff]
        %v4815 = vld [vmem:[#allocation11 + $0x40] sm:$0xff]
        %v4816 = vld [vmem:[#allocation11 + $0x48] sm:$0xff]
        %v4817 = vld [vmem:[#allocation11 + $0x50] sm:$0xff]
        %v4818 = vld [vmem:[#allocation11 + $0x58] sm:$0xff]
        %v4819 = vld [vmem:[#allocation11 + $0x60] sm:$0xff]
        %v4820 = vld [vmem:[#allocation11 + $0x68] sm:$0xff]
        %v4821 = vld [vmem:[#allocation11 + $0x70] sm:$0xff]
        %v4822 = vld [vmem:[#allocation11 + $0x78] sm:$0xff]
        %v4823 = vld [vmem:[%s9] sm:$0x3]
        %v4825 = vlaneseq
        %v4826 = vshrl.u32 %v4825, 7
        %v4827 = vsub.s32 0, %v4826
        %v4828 = vrot.slane %v4823, %v4827
        %v4829 = vlaneseq
        %v4830 = vshrl.u32 %v4829, 7
        %v4831 = vsub.s32 1, %v4830
        %v4832 = vrot.slane %v4823, %v4831
        %v4851 = vunpack.c.l.b16 %v4807
        %v4852 = vunpack.c.h.b16 %v4807
        %v4853 = vunpack.c.l.b16 %v4808
        %v4854 = vunpack.c.h.b16 %v4808
        %v4855 = vunpack.c.l.b16 %v4809
        %v4856 = vunpack.c.h.b16 %v4809
        %v4857 = vunpack.c.l.b16 %v4810
        %v4858 = vunpack.c.h.b16 %v4810
        %v4859 = vunpack.c.l.b16 %v4811
        %v4860 = vunpack.c.h.b16 %v4811
        %v4861 = vunpack.c.l.b16 %v4812
        %v4862 = vunpack.c.h.b16 %v4812
        %v4863 = vunpack.c.l.b16 %v4813
        %v4864 = vunpack.c.h.b16 %v4813
        %v4865 = vunpack.c.l.b16 %v4814
        %v4866 = vunpack.c.h.b16 %v4814
        %v4867 = vunpack.c.l.b16 %v4815
        %v4868 = vunpack.c.h.b16 %v4815
        %v4869 = vunpack.c.l.b16 %v4816
        %v4870 = vunpack.c.h.b16 %v4816
        %v4871 = vunpack.c.l.b16 %v4817
        %v4872 = vunpack.c.h.b16 %v4817
        %v4873 = vunpack.c.l.b16 %v4818
        %v4874 = vunpack.c.h.b16 %v4818
        %v4875 = vunpack.c.l.b16 %v4819
        %v4876 = vunpack.c.h.b16 %v4819
        %v4877 = vunpack.c.l.b16 %v4820
        %v4878 = vunpack.c.h.b16 %v4820
        %v4879 = vunpack.c.l.b16 %v4821
        %v4880 = vunpack.c.h.b16 %v4821
        %v4881 = vunpack.c.l.b16 %v4822
        %v4882 = vunpack.c.h.b16 %v4822
        %v4883 = vpack.c.b16 %v4853, %v4851
        %v4884 = vpack.c.b16 %v4854, %v4852
        %v4885 = vpack.c.b16 %v4857, %v4855
        %v4886 = vpack.c.b16 %v4858, %v4856
        %v4887 = vpack.c.b16 %v4861, %v4859
        %v4888 = vpack.c.b16 %v4862, %v4860
        %v4889 = vpack.c.b16 %v4865, %v4863
        %v4890 = vpack.c.b16 %v4866, %v4864
        %v4891 = vpack.c.b16 %v4869, %v4867
        %v4892 = vpack.c.b16 %v4870, %v4868
        %v4893 = vpack.c.b16 %v4873, %v4871
        %v4894 = vpack.c.b16 %v4874, %v4872
        %v4895 = vpack.c.b16 %v4877, %v4875
        %v4896 = vpack.c.b16 %v4878, %v4876
        %v4897 = vpack.c.b16 %v4881, %v4879
        %v4898 = vpack.c.b16 %v4882, %v4880
        %4915 = vmatprep.subr.bf16.mxu0 %v4884
        %4916 = vmatpush1.bf16.msra.mxu0 %v4883
        %4917 = vmatprep.subr.bf16.mxu0 %v4886
        %4918 = vmatpush1.bf16.msra.mxu0 %v4885
        %4919 = vmatprep.subr.bf16.mxu0 %v4888
        %4920 = vmatpush1.bf16.msra.mxu0 %v4887
        %4921 = vmatprep.subr.bf16.mxu0 %v4890
        %4922 = vmatpush1.bf16.msra.mxu0 %v4889
        %4923 = vmatprep.subr.bf16.mxu0 %v4892
        %4924 = vmatpush1.bf16.msra.mxu0 %v4891
        %4925 = vmatprep.subr.bf16.mxu0 %v4894
        %4926 = vmatpush1.bf16.msra.mxu0 %v4893
        %4927 = vmatprep.subr.bf16.mxu0 %v4896
        %4928 = vmatpush1.bf16.msra.mxu0 %v4895
        %4929 = vmatprep.subr.bf16.mxu0 %v4898
        %4930 = vmatpush1.bf16.msra.mxu0 %v4897
        %4931 = vmatprep.subr.bf16.mxu0 0
        %4932 = vmatpush1.bf16.msra.mxu0 0
        %4933 = vmatprep.subr.bf16.mxu0 0
        %4934 = vmatpush1.bf16.msra.mxu0 0
        %4935 = vmatprep.subr.bf16.mxu0 0
        %4936 = vmatpush1.bf16.msra.mxu0 0
        %4937 = vmatprep.subr.bf16.mxu0 0
        %4938 = vmatpush1.bf16.msra.mxu0 0
        %4939 = vmatprep.subr.bf16.mxu0 0
        %4940 = vmatpush1.bf16.msra.mxu0 0
        %4941 = vmatprep.subr.bf16.mxu0 0
        %4942 = vmatpush1.bf16.msra.mxu0 0
        %4943 = vmatprep.subr.bf16.mxu0 0
        %4944 = vmatpush1.bf16.msra.mxu0 0
        %4945 = vmatprep.subr.bf16.mxu0 0
        %4946 = vmatpush1.bf16.msra.mxu0 0
        %4947 = vmatprep.mubr.bf16.mxu0 0
        %4948 = vmatmul.mubr.bf16.gmra.mrb[0].mxu0 %v4799
        %v4949 = vpop.f32.mrb[0].mxu0
        %v4950 = vadd.f32 %v4828, %v4949
        %v4951 = vpop.f32.mrb[0].mxu0
        %v4952 = vadd.f32 %v4832, %v4951
        %v4953 = vpop.f32.mrb[0].mxu0
        %v4954 = vadd.f32 %v4828, %v4953
        %v4955 = vpop.f32.mrb[0].mxu0
        %v4956 = vadd.f32 %v4832, %v4955
        %4957 = vmatprep.mubr.bf16.mxu0 0
        %4958 = vmatmul.mubr.bf16.gmra.mrb[0].mxu0 %v4800
        %v4959 = vpop.f32.mrb[0].mxu0
        %v4960 = vadd.f32 %v4828, %v4959
        %v4961 = vpop.f32.mrb[0].mxu0
        %v4962 = vadd.f32 %v4832, %v4961
        %v4963 = vpop.f32.mrb[0].mxu0
        %v4964 = vadd.f32 %v4828, %v4963
        %v4965 = vpop.f32.mrb[0].mxu0
        %v4966 = vadd.f32 %v4832, %v4965
        %4967 = vmatprep.mubr.bf16.mxu0 0
        %4968 = vmatmul.mubr.bf16.gmra.mrb[0].mxu0 %v4801
        %v4969 = vpop.f32.mrb[0].mxu0
        %v4970 = vadd.f32 %v4828, %v4969
        %v4971 = vpop.f32.mrb[0].mxu0
        %v4972 = vadd.f32 %v4832, %v4971
        %v4973 = vpop.f32.mrb[0].mxu0
        %v4974 = vadd.f32 %v4828, %v4973
        %v4975 = vpop.f32.mrb[0].mxu0
        %v4976 = vadd.f32 %v4832, %v4975
        %4977 = vmatprep.mubr.bf16.mxu0 0
        %4978 = vmatmul.mubr.bf16.gmra.mrb[0].mxu0 %v4802
        %v4979 = vpop.f32.mrb[0].mxu0
        %v4980 = vadd.f32 %v4828, %v4979
        %v4981 = vpop.f32.mrb[0].mxu0
        %v4982 = vadd.f32 %v4832, %v4981
        %v4983 = vpop.f32.mrb[0].mxu0
        %v4984 = vadd.f32 %v4828, %v4983
        %v4985 = vpop.f32.mrb[0].mxu0
        %v4986 = vadd.f32 %v4832, %v4985
        %4987 = vmatprep.mubr.bf16.mxu0 0
        %4988 = vmatmul.mubr.bf16.gmra.mrb[0].mxu0 %v4803
        %v4989 = vpop.f32.mrb[0].mxu0
        %v4990 = vadd.f32 %v4828, %v4989
        %v4991 = vpop.f32.mrb[0].mxu0
        %v4992 = vadd.f32 %v4832, %v4991
        %v4993 = vpop.f32.mrb[0].mxu0
        %v4994 = vadd.f32 %v4828, %v4993
        %v4995 = vpop.f32.mrb[0].mxu0
        %v4996 = vadd.f32 %v4832, %v4995
        %4997 = vmatprep.mubr.bf16.mxu0 0
        %4998 = vmatmul.mubr.bf16.gmra.mrb[0].mxu0 %v4804
        %v4999 = vpop.f32.mrb[0].mxu0
        %v5000 = vadd.f32 %v4828, %v4999
        %v5001 = vpop.f32.mrb[0].mxu0
        %v5002 = vadd.f32 %v4832, %v5001
        %v5003 = vpop.f32.mrb[0].mxu0
        %v5004 = vadd.f32 %v4828, %v5003
        %v5005 = vpop.f32.mrb[0].mxu0
        %v5006 = vadd.f32 %v4832, %v5005
        %5007 = vmatprep.mubr.bf16.mxu0 0
        %5008 = vmatmul.mubr.bf16.gmra.mrb[0].mxu0 %v4805
        %v5009 = vpop.f32.mrb[0].mxu0
        %v5010 = vadd.f32 %v4828, %v5009
        %v5011 = vpop.f32.mrb[0].mxu0
        %v5012 = vadd.f32 %v4832, %v5011
        %v5013 = vpop.f32.mrb[0].mxu0
        %v5014 = vadd.f32 %v4828, %v5013
        %v5015 = vpop.f32.mrb[0].mxu0
        %v5016 = vadd.f32 %v4832, %v5015
        %5017 = vmatprep.mubr.bf16.mxu0 0
        %5018 = vmatmul.mubr.bf16.gmra.mrb[0].mxu0 %v4806
        %v5019 = vpop.f32.mrb[0].mxu0
        %v5020 = vadd.f32 %v4828, %v5019
        %v5021 = vpop.f32.mrb[0].mxu0
        %v5022 = vadd.f32 %v4832, %v5021
        %v5023 = vpop.f32.mrb[0].mxu0
        %v5024 = vadd.f32 %v4828, %v5023
        %v5025 = vpop.f32.mrb[0].mxu0
        %v5026 = vadd.f32 %v4832, %v5025
        %5027 = vdwg.mxu0
        %vm5028 = vcmp.gt.f32.partialorder %v4950, 0.0
        %vm5029 = vcmp.gt.f32.partialorder %v4952, 0.0
        %vm5030 = vcmp.gt.f32.partialorder %v4954, 0.0
        %vm5031 = vcmp.gt.f32.partialorder %v4956, 0.0
        %vm5032 = vcmp.gt.f32.partialorder %v4960, 0.0
        %vm5033 = vcmp.gt.f32.partialorder %v4962, 0.0
        %vm5034 = vcmp.gt.f32.partialorder %v4964, 0.0
        %vm5035 = vcmp.gt.f32.partialorder %v4966, 0.0
        %vm5036 = vcmp.gt.f32.partialorder %v4970, 0.0
        %vm5037 = vcmp.gt.f32.partialorder %v4972, 0.0
        %vm5038 = vcmp.gt.f32.partialorder %v4974, 0.0
        %vm5039 = vcmp.gt.f32.partialorder %v4976, 0.0
        %vm5040 = vcmp.gt.f32.partialorder %v4980, 0.0
        %vm5041 = vcmp.gt.f32.partialorder %v4982, 0.0
        %vm5042 = vcmp.gt.f32.partialorder %v4984, 0.0
        %vm5043 = vcmp.gt.f32.partialorder %v4986, 0.0
        %vm5044 = vcmp.gt.f32.partialorder %v4990, 0.0
        %vm5045 = vcmp.gt.f32.partialorder %v4992, 0.0
        %vm5046 = vcmp.gt.f32.partialorder %v4994, 0.0
        %vm5047 = vcmp.gt.f32.partialorder %v4996, 0.0
        %vm5048 = vcmp.gt.f32.partialorder %v5000, 0.0
        %vm5049 = vcmp.gt.f32.partialorder %v5002, 0.0
        %vm5050 = vcmp.gt.f32.partialorder %v5004, 0.0
        %vm5051 = vcmp.gt.f32.partialorder %v5006, 0.0
        %vm5052 = vcmp.gt.f32.partialorder %v5010, 0.0
        %vm5053 = vcmp.gt.f32.partialorder %v5012, 0.0
        %vm5054 = vcmp.gt.f32.partialorder %v5014, 0.0
        %vm5055 = vcmp.gt.f32.partialorder %v5016, 0.0
        %vm5056 = vcmp.gt.f32.partialorder %v5020, 0.0
        %vm5057 = vcmp.gt.f32.partialorder %v5022, 0.0
        %vm5058 = vcmp.gt.f32.partialorder %v5024, 0.0
        %vm5059 = vcmp.gt.f32.partialorder %v5026, 0.0
        %v5060 = vmul.f32 %v4950, 1.442695
        %v5061 = vpow.pop %v5060
        %v5062 = vmul.f32 %v4952, 1.442695
        %v5063 = vpow.pop %v5062
        %v5064 = vmul.f32 %v4954, 1.442695
        %v5065 = vpow.pop %v5064
        %v5066 = vmul.f32 %v4956, 1.442695
        %v5067 = vpow.pop %v5066
        %v5068 = vmul.f32 %v4960, 1.442695
        %v5069 = vpow.pop %v5068
        %v5070 = vmul.f32 %v4962, 1.442695
        %v5071 = vpow.pop %v5070
        %v5072 = vmul.f32 %v4964, 1.442695
        %v5073 = vpow.pop %v5072
        %v5074 = vmul.f32 %v4966, 1.442695
        %v5075 = vpow.pop %v5074
        %v5076 = vmul.f32 %v4970, 1.442695
        %v5077 = vpow.pop %v5076
        %v5078 = vmul.f32 %v4972, 1.442695
        %v5079 = vpow.pop %v5078
        %v5080 = vmul.f32 %v4974, 1.442695
        %v5081 = vpow.pop %v5080
        %v5082 = vmul.f32 %v4976, 1.442695
        %v5083 = vpow.pop %v5082
        %v5084 = vmul.f32 %v4980, 1.442695
        %v5085 = vpow.pop %v5084
        %v5086 = vmul.f32 %v4982, 1.442695
        %v5087 = vpow.pop %v5086
        %v5088 = vmul.f32 %v4984, 1.442695
        %v5089 = vpow.pop %v5088
        %v5090 = vmul.f32 %v4986, 1.442695
        %v5091 = vpow.pop %v5090
        %v5092 = vmul.f32 %v4990, 1.442695
        %v5093 = vpow.pop %v5092
        %v5094 = vmul.f32 %v4992, 1.442695
        %v5095 = vpow.pop %v5094
        %v5096 = vmul.f32 %v4994, 1.442695
        %v5097 = vpow.pop %v5096
        %v5098 = vmul.f32 %v4996, 1.442695
        %v5099 = vpow.pop %v5098
        %v5100 = vmul.f32 %v5000, 1.442695
        %v5101 = vpow.pop %v5100
        %v5102 = vmul.f32 %v5002, 1.442695
        %v5103 = vpow.pop %v5102
        %v5104 = vmul.f32 %v5004, 1.442695
        %v5105 = vpow.pop %v5104
        %v5106 = vmul.f32 %v5006, 1.442695
        %v5107 = vpow.pop %v5106
        %v5108 = vmul.f32 %v5010, 1.442695
        %v5109 = vpow.pop %v5108
        %v5110 = vmul.f32 %v5012, 1.442695
        %v5111 = vpow.pop %v5110
        %v5112 = vmul.f32 %v5014, 1.442695
        %v5113 = vpow.pop %v5112
        %v5114 = vmul.f32 %v5016, 1.442695
        %v5115 = vpow.pop %v5114
        %v5116 = vmul.f32 %v5020, 1.442695
        %v5117 = vpow.pop %v5116
        %v5118 = vmul.f32 %v5022, 1.442695
        %v5119 = vpow.pop %v5118
        %v5120 = vmul.f32 %v5024, 1.442695
        %v5121 = vpow.pop %v5120
        %v5122 = vmul.f32 %v5026, 1.442695
        %v5123 = vpow.pop %v5122
        %v5124 = vsub.f32 %v5061, 1.0
        %v5125 = vsub.f32 %v5063, 1.0
        %v5126 = vsub.f32 %v5065, 1.0
        %v5127 = vsub.f32 %v5067, 1.0
        %v5128 = vsub.f32 %v5069, 1.0
        %v5129 = vsub.f32 %v5071, 1.0
        %v5130 = vsub.f32 %v5073, 1.0
        %v5131 = vsub.f32 %v5075, 1.0
        %v5132 = vsub.f32 %v5077, 1.0
        %v5133 = vsub.f32 %v5079, 1.0
        %v5134 = vsub.f32 %v5081, 1.0
        %v5135 = vsub.f32 %v5083, 1.0
        %v5136 = vsub.f32 %v5085, 1.0
        %v5137 = vsub.f32 %v5087, 1.0
        %v5138 = vsub.f32 %v5089, 1.0
        %v5139 = vsub.f32 %v5091, 1.0
        %v5140 = vsub.f32 %v5093, 1.0
        %v5141 = vsub.f32 %v5095, 1.0
        %v5142 = vsub.f32 %v5097, 1.0
        %v5143 = vsub.f32 %v5099, 1.0
        %v5144 = vsub.f32 %v5101, 1.0
        %v5145 = vsub.f32 %v5103, 1.0
        %v5146 = vsub.f32 %v5105, 1.0
        %v5147 = vsub.f32 %v5107, 1.0
        %v5148 = vsub.f32 %v5109, 1.0
        %v5149 = vsub.f32 %v5111, 1.0
        %v5150 = vsub.f32 %v5113, 1.0
        %v5151 = vsub.f32 %v5115, 1.0
        %v5152 = vsub.f32 %v5117, 1.0
        %v5153 = vsub.f32 %v5119, 1.0
        %v5154 = vsub.f32 %v5121, 1.0
        %v5155 = vsub.f32 %v5123, 1.0
        %v5156 = vsel %vm5028, %v4950, %v5124
        %v5157 = vsel %vm5029, %v4952, %v5125
        %v5158 = vsel %vm5030, %v4954, %v5126
        %v5159 = vsel %vm5031, %v4956, %v5127
        %v5160 = vsel %vm5032, %v4960, %v5128
        %v5161 = vsel %vm5033, %v4962, %v5129
        %v5162 = vsel %vm5034, %v4964, %v5130
        %v5163 = vsel %vm5035, %v4966, %v5131
        %v5164 = vsel %vm5036, %v4970, %v5132
        %v5165 = vsel %vm5037, %v4972, %v5133
        %v5166 = vsel %vm5038, %v4974, %v5134
        %v5167 = vsel %vm5039, %v4976, %v5135
        %v5168 = vsel %vm5040, %v4980, %v5136
        %v5169 = vsel %vm5041, %v4982, %v5137
        %v5170 = vsel %vm5042, %v4984, %v5138
        %v5171 = vsel %vm5043, %v4986, %v5139
        %v5172 = vsel %vm5044, %v4990, %v5140
        %v5173 = vsel %vm5045, %v4992, %v5141
        %v5174 = vsel %vm5046, %v4994, %v5142
        %v5175 = vsel %vm5047, %v4996, %v5143
        %v5176 = vsel %vm5048, %v5000, %v5144
        %v5177 = vsel %vm5049, %v5002, %v5145
        %v5178 = vsel %vm5050, %v5004, %v5146
        %v5179 = vsel %vm5051, %v5006, %v5147
        %v5180 = vsel %vm5052, %v5010, %v5148
        %v5181 = vsel %vm5053, %v5012, %v5149
        %v5182 = vsel %vm5054, %v5014, %v5150
        %v5183 = vsel %vm5055, %v5016, %v5151
        %v5184 = vsel %vm5056, %v5020, %v5152
        %v5185 = vsel %vm5057, %v5022, %v5153
        %v5186 = vsel %vm5058, %v5024, %v5154
        %v5187 = vsel %vm5059, %v5026, %v5155
        %v5188 = vpack.c.bf16 %v5158, %v5156
        %v5189 = vpack.c.bf16 %v5159, %v5157
        %v5190 = vpack.c.bf16 %v5162, %v5160
        %v5191 = vpack.c.bf16 %v5163, %v5161
        %v5192 = vpack.c.bf16 %v5166, %v5164
        %v5193 = vpack.c.bf16 %v5167, %v5165
        %v5194 = vpack.c.bf16 %v5170, %v5168
        %v5195 = vpack.c.bf16 %v5171, %v5169
        %v5196 = vpack.c.bf16 %v5174, %v5172
        %v5197 = vpack.c.bf16 %v5175, %v5173
        %v5198 = vpack.c.bf16 %v5178, %v5176
        %v5199 = vpack.c.bf16 %v5179, %v5177
        %v5200 = vpack.c.bf16 %v5182, %v5180
        %v5201 = vpack.c.bf16 %v5183, %v5181
        %v5202 = vpack.c.bf16 %v5186, %v5184
        %v5203 = vpack.c.bf16 %v5187, %v5185
        %v5204 = vld [vmem:[#allocation13] sm:$0xff]
        %v5205 = vld [vmem:[#allocation13 + $0x8] sm:$0xff]
        %v5206 = vld [vmem:[#allocation13 + $0x10] sm:$0xff]
        %v5207 = vld [vmem:[#allocation13 + $0x18] sm:$0xff]
        %v5208 = vld [vmem:[#allocation13 + $0x20] sm:$0xff]
        %v5209 = vld [vmem:[#allocation13 + $0x28] sm:$0xff]
        %v5210 = vld [vmem:[#allocation13 + $0x30] sm:$0xff]
        %v5211 = vld [vmem:[#allocation13 + $0x38] sm:$0xff]
        %v5212 = vld [vmem:[#allocation13 + $0x40] sm:$0xff]
        %v5213 = vld [vmem:[#allocation13 + $0x48] sm:$0xff]
        %v5214 = vld [vmem:[#allocation13 + $0x50] sm:$0xff]
        %v5215 = vld [vmem:[#allocation13 + $0x58] sm:$0xff]
        %v5216 = vld [vmem:[#allocation13 + $0x60] sm:$0xff]
        %v5217 = vld [vmem:[#allocation13 + $0x68] sm:$0xff]
        %v5218 = vld [vmem:[#allocation13 + $0x70] sm:$0xff]
        %v5219 = vld [vmem:[#allocation13 + $0x78] sm:$0xff]
        %v5220 = vld [vmem:[#allocation13 + $0x80] sm:$0xff]
        %v5221 = vld [vmem:[#allocation13 + $0x88] sm:$0xff]
        %v5222 = vld [vmem:[#allocation13 + $0x90] sm:$0xff]
        %v5223 = vld [vmem:[#allocation13 + $0x98] sm:$0xff]
        %v5224 = vld [vmem:[#allocation13 + $0xa0] sm:$0xff]
        %v5225 = vld [vmem:[#allocation13 + $0xa8] sm:$0xff]
        %v5226 = vld [vmem:[#allocation13 + $0xb0] sm:$0xff]
        %v5227 = vld [vmem:[#allocation13 + $0xb8] sm:$0xff]
        %v5228 = vld [vmem:[#allocation13 + $0xc0] sm:$0xff]
        %v5229 = vld [vmem:[#allocation13 + $0xc8] sm:$0xff]
        %v5230 = vld [vmem:[#allocation13 + $0xd0] sm:$0xff]
        %v5231 = vld [vmem:[#allocation13 + $0xd8] sm:$0xff]
        %v5232 = vld [vmem:[#allocation13 + $0xe0] sm:$0xff]
        %v5233 = vld [vmem:[#allocation13 + $0xe8] sm:$0xff]
        %v5234 = vld [vmem:[#allocation13 + $0xf0] sm:$0xff]
        %v5235 = vld [vmem:[#allocation13 + $0xf8] sm:$0xff]
        %v5236 = vld [vmem:[%s11] sm:$0x3]
        %v5238 = vlaneseq
        %v5239 = vshrl.u32 %v5238, 7
        %v5240 = vsub.s32 0, %v5239
        %v5241 = vrot.slane %v5236, %v5240
        %v5242 = vlaneseq
        %v5243 = vshrl.u32 %v5242, 7
        %v5244 = vsub.s32 1, %v5243
        %v5245 = vrot.slane %v5236, %v5244
        %v5280 = vunpack.c.l.b16 %v5204
        %v5281 = vunpack.c.h.b16 %v5204
        %v5282 = vunpack.c.l.b16 %v5205
        %v5283 = vunpack.c.h.b16 %v5205
        %v5284 = vunpack.c.l.b16 %v5206
        %v5285 = vunpack.c.h.b16 %v5206
        %v5286 = vunpack.c.l.b16 %v5207
        %v5287 = vunpack.c.h.b16 %v5207
        %v5288 = vunpack.c.l.b16 %v5208
        %v5289 = vunpack.c.h.b16 %v5208
        %v5290 = vunpack.c.l.b16 %v5209
        %v5291 = vunpack.c.h.b16 %v5209
        %v5292 = vunpack.c.l.b16 %v5210
        %v5293 = vunpack.c.h.b16 %v5210
        %v5294 = vunpack.c.l.b16 %v5211
        %v5295 = vunpack.c.h.b16 %v5211
        %v5296 = vunpack.c.l.b16 %v5212
        %v5297 = vunpack.c.h.b16 %v5212
        %v5298 = vunpack.c.l.b16 %v5213
        %v5299 = vunpack.c.h.b16 %v5213
        %v5300 = vunpack.c.l.b16 %v5214
        %v5301 = vunpack.c.h.b16 %v5214
        %v5302 = vunpack.c.l.b16 %v5215
        %v5303 = vunpack.c.h.b16 %v5215
        %v5304 = vunpack.c.l.b16 %v5216
        %v5305 = vunpack.c.h.b16 %v5216
        %v5306 = vunpack.c.l.b16 %v5217
        %v5307 = vunpack.c.h.b16 %v5217
        %v5308 = vunpack.c.l.b16 %v5218
        %v5309 = vunpack.c.h.b16 %v5218
        %v5310 = vunpack.c.l.b16 %v5219
        %v5311 = vunpack.c.h.b16 %v5219
        %v5312 = vunpack.c.l.b16 %v5220
        %v5313 = vunpack.c.h.b16 %v5220
        %v5314 = vunpack.c.l.b16 %v5221
        %v5315 = vunpack.c.h.b16 %v5221
        %v5316 = vunpack.c.l.b16 %v5222
        %v5317 = vunpack.c.h.b16 %v5222
        %v5318 = vunpack.c.l.b16 %v5223
        %v5319 = vunpack.c.h.b16 %v5223
        %v5320 = vunpack.c.l.b16 %v5224
        %v5321 = vunpack.c.h.b16 %v5224
        %v5322 = vunpack.c.l.b16 %v5225
        %v5323 = vunpack.c.h.b16 %v5225
        %v5324 = vunpack.c.l.b16 %v5226
        %v5325 = vunpack.c.h.b16 %v5226
        %v5326 = vunpack.c.l.b16 %v5227
        %v5327 = vunpack.c.h.b16 %v5227
        %v5328 = vunpack.c.l.b16 %v5228
        %v5329 = vunpack.c.h.b16 %v5228
        %v5330 = vunpack.c.l.b16 %v5229
        %v5331 = vunpack.c.h.b16 %v5229
        %v5332 = vunpack.c.l.b16 %v5230
        %v5333 = vunpack.c.h.b16 %v5230
        %v5334 = vunpack.c.l.b16 %v5231
        %v5335 = vunpack.c.h.b16 %v5231
        %v5336 = vunpack.c.l.b16 %v5232
        %v5337 = vunpack.c.h.b16 %v5232
        %v5338 = vunpack.c.l.b16 %v5233
        %v5339 = vunpack.c.h.b16 %v5233
        %v5340 = vunpack.c.l.b16 %v5234
        %v5341 = vunpack.c.h.b16 %v5234
        %v5342 = vunpack.c.l.b16 %v5235
        %v5343 = vunpack.c.h.b16 %v5235
        %v5344 = vpack.c.b16 %v5282, %v5280
        %v5345 = vpack.c.b16 %v5283, %v5281
        %v5346 = vpack.c.b16 %v5286, %v5284
        %v5347 = vpack.c.b16 %v5287, %v5285
        %v5348 = vpack.c.b16 %v5290, %v5288
        %v5349 = vpack.c.b16 %v5291, %v5289
        %v5350 = vpack.c.b16 %v5294, %v5292
        %v5351 = vpack.c.b16 %v5295, %v5293
        %v5352 = vpack.c.b16 %v5298, %v5296
        %v5353 = vpack.c.b16 %v5299, %v5297
        %v5354 = vpack.c.b16 %v5302, %v5300
        %v5355 = vpack.c.b16 %v5303, %v5301
        %v5356 = vpack.c.b16 %v5306, %v5304
        %v5357 = vpack.c.b16 %v5307, %v5305
        %v5358 = vpack.c.b16 %v5310, %v5308
        %v5359 = vpack.c.b16 %v5311, %v5309
        %v5360 = vpack.c.b16 %v5314, %v5312
        %v5361 = vpack.c.b16 %v5315, %v5313
        %v5362 = vpack.c.b16 %v5318, %v5316
        %v5363 = vpack.c.b16 %v5319, %v5317
        %v5364 = vpack.c.b16 %v5322, %v5320
        %v5365 = vpack.c.b16 %v5323, %v5321
        %v5366 = vpack.c.b16 %v5326, %v5324
        %v5367 = vpack.c.b16 %v5327, %v5325
        %v5368 = vpack.c.b16 %v5330, %v5328
        %v5369 = vpack.c.b16 %v5331, %v5329
        %v5370 = vpack.c.b16 %v5334, %v5332
        %v5371 = vpack.c.b16 %v5335, %v5333
        %v5372 = vpack.c.b16 %v5338, %v5336
        %v5373 = vpack.c.b16 %v5339, %v5337
        %v5374 = vpack.c.b16 %v5342, %v5340
        %v5375 = vpack.c.b16 %v5343, %v5341
        %5408 = vmatprep.subr.bf16.mxu0 %v5345
        %5409 = vmatpush1.bf16.msra.mxu0 %v5344
        %5410 = vmatprep.subr.bf16.mxu0 %v5347
        %5411 = vmatpush1.bf16.msra.mxu0 %v5346
        %5412 = vmatprep.subr.bf16.mxu0 %v5349
        %5413 = vmatpush1.bf16.msra.mxu0 %v5348
        %5414 = vmatprep.subr.bf16.mxu0 %v5351
        %5415 = vmatpush1.bf16.msra.mxu0 %v5350
        %5416 = vmatprep.subr.bf16.mxu0 %v5353
        %5417 = vmatpush1.bf16.msra.mxu0 %v5352
        %5418 = vmatprep.subr.bf16.mxu0 %v5355
        %5419 = vmatpush1.bf16.msra.mxu0 %v5354
        %5420 = vmatprep.subr.bf16.mxu0 %v5357
        %5421 = vmatpush1.bf16.msra.mxu0 %v5356
        %5422 = vmatprep.subr.bf16.mxu0 %v5359
        %5423 = vmatpush1.bf16.msra.mxu0 %v5358
        %5424 = vmatprep.subr.bf16.mxu0 %v5361
        %5425 = vmatpush1.bf16.msra.mxu0 %v5360
        %5426 = vmatprep.subr.bf16.mxu0 %v5363
        %5427 = vmatpush1.bf16.msra.mxu0 %v5362
        %5428 = vmatprep.subr.bf16.mxu0 %v5365
        %5429 = vmatpush1.bf16.msra.mxu0 %v5364
        %5430 = vmatprep.subr.bf16.mxu0 %v5367
        %5431 = vmatpush1.bf16.msra.mxu0 %v5366
        %5432 = vmatprep.subr.bf16.mxu0 %v5369
        %5433 = vmatpush1.bf16.msra.mxu0 %v5368
        %5434 = vmatprep.subr.bf16.mxu0 %v5371
        %5435 = vmatpush1.bf16.msra.mxu0 %v5370
        %5436 = vmatprep.subr.bf16.mxu0 %v5373
        %5437 = vmatpush1.bf16.msra.mxu0 %v5372
        %5438 = vmatprep.subr.bf16.mxu0 %v5375
        %5439 = vmatpush1.bf16.msra.mxu0 %v5374
        %5440 = vmatprep.mubr.bf16.mxu0 %v5189
        %5441 = vmatmul.mubr.bf16.gmra.mrb[0].mxu0 %v5188
        %v5442 = vpop.f32.mrb[0].mxu0
        %v5443 = vadd.f32 %v5241, %v5442
        %v5444 = vpop.f32.mrb[0].mxu0
        %v5445 = vadd.f32 %v5245, %v5444
        %v5446 = vpop.f32.mrb[0].mxu0
        %v5447 = vadd.f32 %v5241, %v5446
        %v5448 = vpop.f32.mrb[0].mxu0
        %v5449 = vadd.f32 %v5245, %v5448
        %5450 = vmatprep.mubr.bf16.mxu0 %v5191
        %5451 = vmatmul.mubr.bf16.gmra.mrb[0].mxu0 %v5190
        %v5452 = vpop.f32.mrb[0].mxu0
        %v5453 = vadd.f32 %v5241, %v5452
        %v5454 = vpop.f32.mrb[0].mxu0
        %v5455 = vadd.f32 %v5245, %v5454
        %v5456 = vpop.f32.mrb[0].mxu0
        %v5457 = vadd.f32 %v5241, %v5456
        %v5458 = vpop.f32.mrb[0].mxu0
        %v5459 = vadd.f32 %v5245, %v5458
        %5460 = vmatprep.mubr.bf16.mxu0 %v5193
        %5461 = vmatmul.mubr.bf16.gmra.mrb[0].mxu0 %v5192
        %v5462 = vpop.f32.mrb[0].mxu0
        %v5463 = vadd.f32 %v5241, %v5462
        %v5464 = vpop.f32.mrb[0].mxu0
        %v5465 = vadd.f32 %v5245, %v5464
        %v5466 = vpop.f32.mrb[0].mxu0
        %v5467 = vadd.f32 %v5241, %v5466
        %v5468 = vpop.f32.mrb[0].mxu0
        %v5469 = vadd.f32 %v5245, %v5468
        %5470 = vmatprep.mubr.bf16.mxu0 %v5195
        %5471 = vmatmul.mubr.bf16.gmra.mrb[0].mxu0 %v5194
        %v5472 = vpop.f32.mrb[0].mxu0
        %v5473 = vadd.f32 %v5241, %v5472
        %v5474 = vpop.f32.mrb[0].mxu0
        %v5475 = vadd.f32 %v5245, %v5474
        %v5476 = vpop.f32.mrb[0].mxu0
        %v5477 = vadd.f32 %v5241, %v5476
        %v5478 = vpop.f32.mrb[0].mxu0
        %v5479 = vadd.f32 %v5245, %v5478
        %5480 = vmatprep.mubr.bf16.mxu0 %v5197
        %5481 = vmatmul.mubr.bf16.gmra.mrb[0].mxu0 %v5196
        %v5482 = vpop.f32.mrb[0].mxu0
        %v5483 = vadd.f32 %v5241, %v5482
        %v5484 = vpop.f32.mrb[0].mxu0
        %v5485 = vadd.f32 %v5245, %v5484
        %v5486 = vpop.f32.mrb[0].mxu0
        %v5487 = vadd.f32 %v5241, %v5486
        %v5488 = vpop.f32.mrb[0].mxu0
        %v5489 = vadd.f32 %v5245, %v5488
        %5490 = vmatprep.mubr.bf16.mxu0 %v5199
        %5491 = vmatmul.mubr.bf16.gmra.mrb[0].mxu0 %v5198
        %v5492 = vpop.f32.mrb[0].mxu0
        %v5493 = vadd.f32 %v5241, %v5492
        %v5494 = vpop.f32.mrb[0].mxu0
        %v5495 = vadd.f32 %v5245, %v5494
        %v5496 = vpop.f32.mrb[0].mxu0
        %v5497 = vadd.f32 %v5241, %v5496
        %v5498 = vpop.f32.mrb[0].mxu0
        %v5499 = vadd.f32 %v5245, %v5498
        %5500 = vmatprep.mubr.bf16.mxu0 %v5201
        %5501 = vmatmul.mubr.bf16.gmra.mrb[0].mxu0 %v5200
        %v5502 = vpop.f32.mrb[0].mxu0
        %v5503 = vadd.f32 %v5241, %v5502
        %v5504 = vpop.f32.mrb[0].mxu0
        %v5505 = vadd.f32 %v5245, %v5504
        %v5506 = vpop.f32.mrb[0].mxu0
        %v5507 = vadd.f32 %v5241, %v5506
        %v5508 = vpop.f32.mrb[0].mxu0
        %v5509 = vadd.f32 %v5245, %v5508
        %5510 = vmatprep.mubr.bf16.mxu0 %v5203
        %5511 = vmatmul.mubr.bf16.gmra.mrb[0].mxu0 %v5202
        %v5512 = vpop.f32.mrb[0].mxu0
        %v5513 = vadd.f32 %v5241, %v5512
        %v5514 = vpop.f32.mrb[0].mxu0
        %v5515 = vadd.f32 %v5245, %v5514
        %v5516 = vpop.f32.mrb[0].mxu0
        %v5517 = vadd.f32 %v5241, %v5516
        %v5518 = vpop.f32.mrb[0].mxu0
        %v5519 = vadd.f32 %v5245, %v5518
        %5520 = vdwg.mxu0
        %vm5521 = vcmp.gt.f32.partialorder %v5443, 0.0
        %vm5522 = vcmp.gt.f32.partialorder %v5445, 0.0
        %vm5523 = vcmp.gt.f32.partialorder %v5447, 0.0
        %vm5524 = vcmp.gt.f32.partialorder %v5449, 0.0
        %vm5525 = vcmp.gt.f32.partialorder %v5453, 0.0
        %vm5526 = vcmp.gt.f32.partialorder %v5455, 0.0
        %vm5527 = vcmp.gt.f32.partialorder %v5457, 0.0
        %vm5528 = vcmp.gt.f32.partialorder %v5459, 0.0
        %vm5529 = vcmp.gt.f32.partialorder %v5463, 0.0
        %vm5530 = vcmp.gt.f32.partialorder %v5465, 0.0
        %vm5531 = vcmp.gt.f32.partialorder %v5467, 0.0
        %vm5532 = vcmp.gt.f32.partialorder %v5469, 0.0
        %vm5533 = vcmp.gt.f32.partialorder %v5473, 0.0
        %vm5534 = vcmp.gt.f32.partialorder %v5475, 0.0
        %vm5535 = vcmp.gt.f32.partialorder %v5477, 0.0
        %vm5536 = vcmp.gt.f32.partialorder %v5479, 0.0
        %vm5537 = vcmp.gt.f32.partialorder %v5483, 0.0
        %vm5538 = vcmp.gt.f32.partialorder %v5485, 0.0
        %vm5539 = vcmp.gt.f32.partialorder %v5487, 0.0
        %vm5540 = vcmp.gt.f32.partialorder %v5489, 0.0
        %vm5541 = vcmp.gt.f32.partialorder %v5493, 0.0
        %vm5542 = vcmp.gt.f32.partialorder %v5495, 0.0
        %vm5543 = vcmp.gt.f32.partialorder %v5497, 0.0
        %vm5544 = vcmp.gt.f32.partialorder %v5499, 0.0
        %vm5545 = vcmp.gt.f32.partialorder %v5503, 0.0
        %vm5546 = vcmp.gt.f32.partialorder %v5505, 0.0
        %vm5547 = vcmp.gt.f32.partialorder %v5507, 0.0
        %vm5548 = vcmp.gt.f32.partialorder %v5509, 0.0
        %vm5549 = vcmp.gt.f32.partialorder %v5513, 0.0
        %vm5550 = vcmp.gt.f32.partialorder %v5515, 0.0
        %vm5551 = vcmp.gt.f32.partialorder %v5517, 0.0
        %vm5552 = vcmp.gt.f32.partialorder %v5519, 0.0
        %v5553 = vmul.f32 %v5443, 1.442695
        %v5554 = vpow.pop %v5553
        %v5555 = vmul.f32 %v5445, 1.442695
        %v5556 = vpow.pop %v5555
        %v5557 = vmul.f32 %v5447, 1.442695
        %v5558 = vpow.pop %v5557
        %v5559 = vmul.f32 %v5449, 1.442695
        %v5560 = vpow.pop %v5559
        %v5561 = vmul.f32 %v5453, 1.442695
        %v5562 = vpow.pop %v5561
        %v5563 = vmul.f32 %v5455, 1.442695
        %v5564 = vpow.pop %v5563
        %v5565 = vmul.f32 %v5457, 1.442695
        %v5566 = vpow.pop %v5565
        %v5567 = vmul.f32 %v5459, 1.442695
        %v5568 = vpow.pop %v5567
        %v5569 = vmul.f32 %v5463, 1.442695
        %v5570 = vpow.pop %v5569
        %v5571 = vmul.f32 %v5465, 1.442695
        %v5572 = vpow.pop %v5571
        %v5573 = vmul.f32 %v5467, 1.442695
        %v5574 = vpow.pop %v5573
        %v5575 = vmul.f32 %v5469, 1.442695
        %v5576 = vpow.pop %v5575
        %v5577 = vmul.f32 %v5473, 1.442695
        %v5578 = vpow.pop %v5577
        %v5579 = vmul.f32 %v5475, 1.442695
        %v5580 = vpow.pop %v5579
        %v5581 = vmul.f32 %v5477, 1.442695
        %v5582 = vpow.pop %v5581
        %v5583 = vmul.f32 %v5479, 1.442695
        %v5584 = vpow.pop %v5583
        %v5585 = vmul.f32 %v5483, 1.442695
        %v5586 = vpow.pop %v5585
        %v5587 = vmul.f32 %v5485, 1.442695
        %v5588 = vpow.pop %v5587
        %v5589 = vmul.f32 %v5487, 1.442695
        %v5590 = vpow.pop %v5589
        %v5591 = vmul.f32 %v5489, 1.442695
        %v5592 = vpow.pop %v5591
        %v5593 = vmul.f32 %v5493, 1.442695
        %v5594 = vpow.pop %v5593
        %v5595 = vmul.f32 %v5495, 1.442695
        %v5596 = vpow.pop %v5595
        %v5597 = vmul.f32 %v5497, 1.442695
        %v5598 = vpow.pop %v5597
        %v5599 = vmul.f32 %v5499, 1.442695
        %v5600 = vpow.pop %v5599
        %v5601 = vmul.f32 %v5503, 1.442695
        %v5602 = vpow.pop %v5601
        %v5603 = vmul.f32 %v5505, 1.442695
        %v5604 = vpow.pop %v5603
        %v5605 = vmul.f32 %v5507, 1.442695
        %v5606 = vpow.pop %v5605
        %v5607 = vmul.f32 %v5509, 1.442695
        %v5608 = vpow.pop %v5607
        %v5609 = vmul.f32 %v5513, 1.442695
        %v5610 = vpow.pop %v5609
        %v5611 = vmul.f32 %v5515, 1.442695
        %v5612 = vpow.pop %v5611
        %v5613 = vmul.f32 %v5517, 1.442695
        %v5614 = vpow.pop %v5613
        %v5615 = vmul.f32 %v5519, 1.442695
        %v5616 = vpow.pop %v5615
        %v5617 = vsub.f32 %v5554, 1.0
        %v5618 = vsub.f32 %v5556, 1.0
        %v5619 = vsub.f32 %v5558, 1.0
        %v5620 = vsub.f32 %v5560, 1.0
        %v5621 = vsub.f32 %v5562, 1.0
        %v5622 = vsub.f32 %v5564, 1.0
        %v5623 = vsub.f32 %v5566, 1.0
        %v5624 = vsub.f32 %v5568, 1.0
        %v5625 = vsub.f32 %v5570, 1.0
        %v5626 = vsub.f32 %v5572, 1.0
        %v5627 = vsub.f32 %v5574, 1.0
        %v5628 = vsub.f32 %v5576, 1.0
        %v5629 = vsub.f32 %v5578, 1.0
        %v5630 = vsub.f32 %v5580, 1.0
        %v5631 = vsub.f32 %v5582, 1.0
        %v5632 = vsub.f32 %v5584, 1.0
        %v5633 = vsub.f32 %v5586, 1.0
        %v5634 = vsub.f32 %v5588, 1.0
        %v5635 = vsub.f32 %v5590, 1.0
        %v5636 = vsub.f32 %v5592, 1.0
        %v5637 = vsub.f32 %v5594, 1.0
        %v5638 = vsub.f32 %v5596, 1.0
        %v5639 = vsub.f32 %v5598, 1.0
        %v5640 = vsub.f32 %v5600, 1.0
        %v5641 = vsub.f32 %v5602, 1.0
        %v5642 = vsub.f32 %v5604, 1.0
        %v5643 = vsub.f32 %v5606, 1.0
        %v5644 = vsub.f32 %v5608, 1.0
        %v5645 = vsub.f32 %v5610, 1.0
        %v5646 = vsub.f32 %v5612, 1.0
        %v5647 = vsub.f32 %v5614, 1.0
        %v5648 = vsub.f32 %v5616, 1.0
        %v5649 = vsel %vm5521, %v5443, %v5617
        %v5650 = vsel %vm5522, %v5445, %v5618
        %v5651 = vsel %vm5523, %v5447, %v5619
        %v5652 = vsel %vm5524, %v5449, %v5620
        %v5653 = vsel %vm5525, %v5453, %v5621
        %v5654 = vsel %vm5526, %v5455, %v5622
        %v5655 = vsel %vm5527, %v5457, %v5623
        %v5656 = vsel %vm5528, %v5459, %v5624
        %v5657 = vsel %vm5529, %v5463, %v5625
        %v5658 = vsel %vm5530, %v5465, %v5626
        %v5659 = vsel %vm5531, %v5467, %v5627
        %v5660 = vsel %vm5532, %v5469, %v5628
        %v5661 = vsel %vm5533, %v5473, %v5629
        %v5662 = vsel %vm5534, %v5475, %v5630
        %v5663 = vsel %vm5535, %v5477, %v5631
        %v5664 = vsel %vm5536, %v5479, %v5632
        %v5665 = vsel %vm5537, %v5483, %v5633
        %v5666 = vsel %vm5538, %v5485, %v5634
        %v5667 = vsel %vm5539, %v5487, %v5635
        %v5668 = vsel %vm5540, %v5489, %v5636
        %v5669 = vsel %vm5541, %v5493, %v5637
        %v5670 = vsel %vm5542, %v5495, %v5638
        %v5671 = vsel %vm5543, %v5497, %v5639
        %v5672 = vsel %vm5544, %v5499, %v5640
        %v5673 = vsel %vm5545, %v5503, %v5641
        %v5674 = vsel %vm5546, %v5505, %v5642
        %v5675 = vsel %vm5547, %v5507, %v5643
        %v5676 = vsel %vm5548, %v5509, %v5644
        %v5677 = vsel %vm5549, %v5513, %v5645
        %v5678 = vsel %vm5550, %v5515, %v5646
        %v5679 = vsel %vm5551, %v5517, %v5647
        %v5680 = vsel %vm5552, %v5519, %v5648
        %v5681 = vpack.c.bf16 %v5651, %v5649
        %v5682 = vpack.c.bf16 %v5652, %v5650
        %v5683 = vpack.c.bf16 %v5655, %v5653
        %v5684 = vpack.c.bf16 %v5656, %v5654
        %v5685 = vpack.c.bf16 %v5659, %v5657
        %v5686 = vpack.c.bf16 %v5660, %v5658
        %v5687 = vpack.c.bf16 %v5663, %v5661
        %v5688 = vpack.c.bf16 %v5664, %v5662
        %v5689 = vpack.c.bf16 %v5667, %v5665
        %v5690 = vpack.c.bf16 %v5668, %v5666
        %v5691 = vpack.c.bf16 %v5671, %v5669
        %v5692 = vpack.c.bf16 %v5672, %v5670
        %v5693 = vpack.c.bf16 %v5675, %v5673
        %v5694 = vpack.c.bf16 %v5676, %v5674
        %v5695 = vpack.c.bf16 %v5679, %v5677
        %v5696 = vpack.c.bf16 %v5680, %v5678
        %v5697 = vld [vmem:[#allocation14] sm:$0xff]
        %v5698 = vld [vmem:[#allocation14 + $0x8] sm:$0xff]
        %v5699 = vld [vmem:[#allocation14 + $0x10] sm:$0xff]
        %v5700 = vld [vmem:[#allocation14 + $0x18] sm:$0xff]
        %v5701 = vld [vmem:[#allocation14 + $0x20] sm:$0xff]
        %v5702 = vld [vmem:[#allocation14 + $0x28] sm:$0xff]
        %v5703 = vld [vmem:[#allocation14 + $0x30] sm:$0xff]
        %v5704 = vld [vmem:[#allocation14 + $0x38] sm:$0xff]
        %v5705 = vld [vmem:[#allocation14 + $0x40] sm:$0xff]
        %v5706 = vld [vmem:[#allocation14 + $0x48] sm:$0xff]
        %v5707 = vld [vmem:[#allocation14 + $0x50] sm:$0xff]
        %v5708 = vld [vmem:[#allocation14 + $0x58] sm:$0xff]
        %v5709 = vld [vmem:[#allocation14 + $0x60] sm:$0xff]
        %v5710 = vld [vmem:[#allocation14 + $0x68] sm:$0xff]
        %v5711 = vld [vmem:[#allocation14 + $0x70] sm:$0xff]
        %v5712 = vld [vmem:[#allocation14 + $0x78] sm:$0xff]
        %v5713 = vld [vmem:[#allocation14 + $0x80] sm:$0xff]
        %v5714 = vld [vmem:[#allocation14 + $0x88] sm:$0xff]
        %v5715 = vld [vmem:[#allocation14 + $0x90] sm:$0xff]
        %v5716 = vld [vmem:[#allocation14 + $0x98] sm:$0xff]
        %v5717 = vld [vmem:[#allocation14 + $0xa0] sm:$0xff]
        %v5718 = vld [vmem:[#allocation14 + $0xa8] sm:$0xff]
        %v5719 = vld [vmem:[#allocation14 + $0xb0] sm:$0xff]
        %v5720 = vld [vmem:[#allocation14 + $0xb8] sm:$0xff]
        %v5721 = vld [vmem:[#allocation14 + $0xc0] sm:$0xff]
        %v5722 = vld [vmem:[#allocation14 + $0xc8] sm:$0xff]
        %v5723 = vld [vmem:[#allocation14 + $0xd0] sm:$0xff]
        %v5724 = vld [vmem:[#allocation14 + $0xd8] sm:$0xff]
        %v5725 = vld [vmem:[#allocation14 + $0xe0] sm:$0xff]
        %v5726 = vld [vmem:[#allocation14 + $0xe8] sm:$0xff]
        %v5727 = vld [vmem:[#allocation14 + $0xf0] sm:$0xff]
        %v5728 = vld [vmem:[#allocation14 + $0xf8] sm:$0xff]
        %v5729 = vld [vmem:[#allocation14 + $0x100] sm:$0xff]
        %v5730 = vld [vmem:[#allocation14 + $0x108] sm:$0xff]
        %v5731 = vld [vmem:[#allocation14 + $0x110] sm:$0xff]
        %v5732 = vld [vmem:[#allocation14 + $0x118] sm:$0xff]
        %v5733 = vld [vmem:[#allocation14 + $0x120] sm:$0xff]
        %v5734 = vld [vmem:[#allocation14 + $0x128] sm:$0xff]
        %v5735 = vld [vmem:[#allocation14 + $0x130] sm:$0xff]
        %v5736 = vld [vmem:[#allocation14 + $0x138] sm:$0xff]
        %v5737 = vld [vmem:[#allocation14 + $0x140] sm:$0xff]
        %v5738 = vld [vmem:[#allocation14 + $0x148] sm:$0xff]
        %v5739 = vld [vmem:[#allocation14 + $0x150] sm:$0xff]
        %v5740 = vld [vmem:[#allocation14 + $0x158] sm:$0xff]
        %v5741 = vld [vmem:[#allocation14 + $0x160] sm:$0xff]
        %v5742 = vld [vmem:[#allocation14 + $0x168] sm:$0xff]
        %v5743 = vld [vmem:[#allocation14 + $0x170] sm:$0xff]
        %v5744 = vld [vmem:[#allocation14 + $0x178] sm:$0xff]
        %v5745 = vld [vmem:[#allocation14 + $0x180] sm:$0xff]
        %v5746 = vld [vmem:[#allocation14 + $0x188] sm:$0xff]
        %v5747 = vld [vmem:[#allocation14 + $0x190] sm:$0xff]
        %v5748 = vld [vmem:[#allocation14 + $0x198] sm:$0xff]
        %v5749 = vld [vmem:[#allocation14 + $0x1a0] sm:$0xff]
        %v5750 = vld [vmem:[#allocation14 + $0x1a8] sm:$0xff]
        %v5751 = vld [vmem:[#allocation14 + $0x1b0] sm:$0xff]
        %v5752 = vld [vmem:[#allocation14 + $0x1b8] sm:$0xff]
        %v5753 = vld [vmem:[#allocation14 + $0x1c0] sm:$0xff]
        %v5754 = vld [vmem:[#allocation14 + $0x1c8] sm:$0xff]
        %v5755 = vld [vmem:[#allocation14 + $0x1d0] sm:$0xff]
        %v5756 = vld [vmem:[#allocation14 + $0x1d8] sm:$0xff]
        %v5757 = vld [vmem:[#allocation14 + $0x1e0] sm:$0xff]
        %v5758 = vld [vmem:[#allocation14 + $0x1e8] sm:$0xff]
        %v5759 = vld [vmem:[#allocation14 + $0x1f0] sm:$0xff]
        %v5760 = vld [vmem:[#allocation14 + $0x1f8] sm:$0xff]
        %v5761 = vld [vmem:[%s13] sm:$0xf]
        %v5763 = vlaneseq
        %v5764 = vshrl.u32 %v5763, 7
        %v5765 = vsub.s32 0, %v5764
        %v5766 = vrot.slane %v5761, %v5765
        %v5767 = vlaneseq
        %v5768 = vshrl.u32 %v5767, 7
        %v5769 = vsub.s32 1, %v5768
        %v5770 = vrot.slane %v5761, %v5769
        %v5771 = vlaneseq
        %v5772 = vshrl.u32 %v5771, 7
        %v5773 = vsub.s32 2, %v5772
        %v5774 = vrot.slane %v5761, %v5773
        %v5775 = vlaneseq
        %v5776 = vshrl.u32 %v5775, 7
        %v5777 = vsub.s32 3, %v5776
        %v5778 = vrot.slane %v5761, %v5777
        %v5847 = vunpack.c.l.b16 %v5697
        %v5848 = vunpack.c.h.b16 %v5697
        %v5849 = vunpack.c.l.b16 %v5698
        %v5850 = vunpack.c.h.b16 %v5698
        %v5851 = vunpack.c.l.b16 %v5699
        %v5852 = vunpack.c.h.b16 %v5699
        %v5853 = vunpack.c.l.b16 %v5700
        %v5854 = vunpack.c.h.b16 %v5700
        %v5855 = vunpack.c.l.b16 %v5701
        %v5856 = vunpack.c.h.b16 %v5701
        %v5857 = vunpack.c.l.b16 %v5702
        %v5858 = vunpack.c.h.b16 %v5702
        %v5859 = vunpack.c.l.b16 %v5703
        %v5860 = vunpack.c.h.b16 %v5703
        %v5861 = vunpack.c.l.b16 %v5704
        %v5862 = vunpack.c.h.b16 %v5704
        %v5863 = vunpack.c.l.b16 %v5705
        %v5864 = vunpack.c.h.b16 %v5705
        %v5865 = vunpack.c.l.b16 %v5706
        %v5866 = vunpack.c.h.b16 %v5706
        %v5867 = vunpack.c.l.b16 %v5707
        %v5868 = vunpack.c.h.b16 %v5707
        %v5869 = vunpack.c.l.b16 %v5708
        %v5870 = vunpack.c.h.b16 %v5708
        %v5871 = vunpack.c.l.b16 %v5709
        %v5872 = vunpack.c.h.b16 %v5709
        %v5873 = vunpack.c.l.b16 %v5710
        %v5874 = vunpack.c.h.b16 %v5710
        %v5875 = vunpack.c.l.b16 %v5711
        %v5876 = vunpack.c.h.b16 %v5711
        %v5877 = vunpack.c.l.b16 %v5712
        %v5878 = vunpack.c.h.b16 %v5712
        %v5879 = vunpack.c.l.b16 %v5713
        %v5880 = vunpack.c.h.b16 %v5713
        %v5881 = vunpack.c.l.b16 %v5714
        %v5882 = vunpack.c.h.b16 %v5714
        %v5883 = vunpack.c.l.b16 %v5715
        %v5884 = vunpack.c.h.b16 %v5715
        %v5885 = vunpack.c.l.b16 %v5716
        %v5886 = vunpack.c.h.b16 %v5716
        %v5887 = vunpack.c.l.b16 %v5717
        %v5888 = vunpack.c.h.b16 %v5717
        %v5889 = vunpack.c.l.b16 %v5718
        %v5890 = vunpack.c.h.b16 %v5718
        %v5891 = vunpack.c.l.b16 %v5719
        %v5892 = vunpack.c.h.b16 %v5719
        %v5893 = vunpack.c.l.b16 %v5720
        %v5894 = vunpack.c.h.b16 %v5720
        %v5895 = vunpack.c.l.b16 %v5721
        %v5896 = vunpack.c.h.b16 %v5721
        %v5897 = vunpack.c.l.b16 %v5722
        %v5898 = vunpack.c.h.b16 %v5722
        %v5899 = vunpack.c.l.b16 %v5723
        %v5900 = vunpack.c.h.b16 %v5723
        %v5901 = vunpack.c.l.b16 %v5724
        %v5902 = vunpack.c.h.b16 %v5724
        %v5903 = vunpack.c.l.b16 %v5725
        %v5904 = vunpack.c.h.b16 %v5725
        %v5905 = vunpack.c.l.b16 %v5726
        %v5906 = vunpack.c.h.b16 %v5726
        %v5907 = vunpack.c.l.b16 %v5727
        %v5908 = vunpack.c.h.b16 %v5727
        %v5909 = vunpack.c.l.b16 %v5728
        %v5910 = vunpack.c.h.b16 %v5728
        %v5911 = vunpack.c.l.b16 %v5729
        %v5912 = vunpack.c.h.b16 %v5729
        %v5913 = vunpack.c.l.b16 %v5730
        %v5914 = vunpack.c.h.b16 %v5730
        %v5915 = vunpack.c.l.b16 %v5731
        %v5916 = vunpack.c.h.b16 %v5731
        %v5917 = vunpack.c.l.b16 %v5732
        %v5918 = vunpack.c.h.b16 %v5732
        %v5919 = vunpack.c.l.b16 %v5733
        %v5920 = vunpack.c.h.b16 %v5733
        %v5921 = vunpack.c.l.b16 %v5734
        %v5922 = vunpack.c.h.b16 %v5734
        %v5923 = vunpack.c.l.b16 %v5735
        %v5924 = vunpack.c.h.b16 %v5735
        %v5925 = vunpack.c.l.b16 %v5736
        %v5926 = vunpack.c.h.b16 %v5736
        %v5927 = vunpack.c.l.b16 %v5737
        %v5928 = vunpack.c.h.b16 %v5737
        %v5929 = vunpack.c.l.b16 %v5738
        %v5930 = vunpack.c.h.b16 %v5738
        %v5931 = vunpack.c.l.b16 %v5739
        %v5932 = vunpack.c.h.b16 %v5739
        %v5933 = vunpack.c.l.b16 %v5740
        %v5934 = vunpack.c.h.b16 %v5740
        %v5935 = vunpack.c.l.b16 %v5741
        %v5936 = vunpack.c.h.b16 %v5741
        %v5937 = vunpack.c.l.b16 %v5742
        %v5938 = vunpack.c.h.b16 %v5742
        %v5939 = vunpack.c.l.b16 %v5743
        %v5940 = vunpack.c.h.b16 %v5743
        %v5941 = vunpack.c.l.b16 %v5744
        %v5942 = vunpack.c.h.b16 %v5744
        %v5943 = vunpack.c.l.b16 %v5745
        %v5944 = vunpack.c.h.b16 %v5745
        %v5945 = vunpack.c.l.b16 %v5746
        %v5946 = vunpack.c.h.b16 %v5746
        %v5947 = vunpack.c.l.b16 %v5747
        %v5948 = vunpack.c.h.b16 %v5747
        %v5949 = vunpack.c.l.b16 %v5748
        %v5950 = vunpack.c.h.b16 %v5748
        %v5951 = vunpack.c.l.b16 %v5749
        %v5952 = vunpack.c.h.b16 %v5749
        %v5953 = vunpack.c.l.b16 %v5750
        %v5954 = vunpack.c.h.b16 %v5750
        %v5955 = vunpack.c.l.b16 %v5751
        %v5956 = vunpack.c.h.b16 %v5751
        %v5957 = vunpack.c.l.b16 %v5752
        %v5958 = vunpack.c.h.b16 %v5752
        %v5959 = vunpack.c.l.b16 %v5753
        %v5960 = vunpack.c.h.b16 %v5753
        %v5961 = vunpack.c.l.b16 %v5754
        %v5962 = vunpack.c.h.b16 %v5754
        %v5963 = vunpack.c.l.b16 %v5755
        %v5964 = vunpack.c.h.b16 %v5755
        %v5965 = vunpack.c.l.b16 %v5756
        %v5966 = vunpack.c.h.b16 %v5756
        %v5967 = vunpack.c.l.b16 %v5757
        %v5968 = vunpack.c.h.b16 %v5757
        %v5969 = vunpack.c.l.b16 %v5758
        %v5970 = vunpack.c.h.b16 %v5758
        %v5971 = vunpack.c.l.b16 %v5759
        %v5972 = vunpack.c.h.b16 %v5759
        %v5973 = vunpack.c.l.b16 %v5760
        %v5974 = vunpack.c.h.b16 %v5760
        %v5975 = vpack.c.b16 %v5851, %v5847
        %v5976 = vpack.c.b16 %v5852, %v5848
        %v5977 = vpack.c.b16 %v5853, %v5849
        %v5978 = vpack.c.b16 %v5854, %v5850
        %v5979 = vpack.c.b16 %v5859, %v5855
        %v5980 = vpack.c.b16 %v5860, %v5856
        %v5981 = vpack.c.b16 %v5861, %v5857
        %v5982 = vpack.c.b16 %v5862, %v5858
        %v5983 = vpack.c.b16 %v5867, %v5863
        %v5984 = vpack.c.b16 %v5868, %v5864
        %v5985 = vpack.c.b16 %v5869, %v5865
        %v5986 = vpack.c.b16 %v5870, %v5866
        %v5987 = vpack.c.b16 %v5875, %v5871
        %v5988 = vpack.c.b16 %v5876, %v5872
        %v5989 = vpack.c.b16 %v5877, %v5873
        %v5990 = vpack.c.b16 %v5878, %v5874
        %v5991 = vpack.c.b16 %v5883, %v5879
        %v5992 = vpack.c.b16 %v5884, %v5880
        %v5993 = vpack.c.b16 %v5885, %v5881
        %v5994 = vpack.c.b16 %v5886, %v5882
        %v5995 = vpack.c.b16 %v5891, %v5887
        %v5996 = vpack.c.b16 %v5892, %v5888
        %v5997 = vpack.c.b16 %v5893, %v5889
        %v5998 = vpack.c.b16 %v5894, %v5890
        %v5999 = vpack.c.b16 %v5899, %v5895
        %v6000 = vpack.c.b16 %v5900, %v5896
        %v6001 = vpack.c.b16 %v5901, %v5897
        %v6002 = vpack.c.b16 %v5902, %v5898
        %v6003 = vpack.c.b16 %v5907, %v5903
        %v6004 = vpack.c.b16 %v5908, %v5904
        %v6005 = vpack.c.b16 %v5909, %v5905
        %v6006 = vpack.c.b16 %v5910, %v5906
        %v6007 = vpack.c.b16 %v5915, %v5911
        %v6008 = vpack.c.b16 %v5916, %v5912
        %v6009 = vpack.c.b16 %v5917, %v5913
        %v6010 = vpack.c.b16 %v5918, %v5914
        %v6011 = vpack.c.b16 %v5923, %v5919
        %v6012 = vpack.c.b16 %v5924, %v5920
        %v6013 = vpack.c.b16 %v5925, %v5921
        %v6014 = vpack.c.b16 %v5926, %v5922
        %v6015 = vpack.c.b16 %v5931, %v5927
        %v6016 = vpack.c.b16 %v5932, %v5928
        %v6017 = vpack.c.b16 %v5933, %v5929
        %v6018 = vpack.c.b16 %v5934, %v5930
        %v6019 = vpack.c.b16 %v5939, %v5935
        %v6020 = vpack.c.b16 %v5940, %v5936
        %v6021 = vpack.c.b16 %v5941, %v5937
        %v6022 = vpack.c.b16 %v5942, %v5938
        %v6023 = vpack.c.b16 %v5947, %v5943
        %v6024 = vpack.c.b16 %v5948, %v5944
        %v6025 = vpack.c.b16 %v5949, %v5945
        %v6026 = vpack.c.b16 %v5950, %v5946
        %v6027 = vpack.c.b16 %v5955, %v5951
        %v6028 = vpack.c.b16 %v5956, %v5952
        %v6029 = vpack.c.b16 %v5957, %v5953
        %v6030 = vpack.c.b16 %v5958, %v5954
        %v6031 = vpack.c.b16 %v5963, %v5959
        %v6032 = vpack.c.b16 %v5964, %v5960
        %v6033 = vpack.c.b16 %v5965, %v5961
        %v6034 = vpack.c.b16 %v5966, %v5962
        %v6035 = vpack.c.b16 %v5971, %v5967
        %v6036 = vpack.c.b16 %v5972, %v5968
        %v6037 = vpack.c.b16 %v5973, %v5969
        %v6038 = vpack.c.b16 %v5974, %v5970
        %6103 = vmatprep.subr.bf16.mxu0 %v5976
        %6104 = vmatpush1.bf16.msra.mxu0 %v5975
        %6105 = vmatprep.subr.bf16.mxu0 %v5980
        %6106 = vmatpush1.bf16.msra.mxu0 %v5979
        %6107 = vmatprep.subr.bf16.mxu0 %v5984
        %6108 = vmatpush1.bf16.msra.mxu0 %v5983
        %6109 = vmatprep.subr.bf16.mxu0 %v5988
        %6110 = vmatpush1.bf16.msra.mxu0 %v5987
        %6111 = vmatprep.subr.bf16.mxu0 %v5992
        %6112 = vmatpush1.bf16.msra.mxu0 %v5991
        %6113 = vmatprep.subr.bf16.mxu0 %v5996
        %6114 = vmatpush1.bf16.msra.mxu0 %v5995
        %6115 = vmatprep.subr.bf16.mxu0 %v6000
        %6116 = vmatpush1.bf16.msra.mxu0 %v5999
        %6117 = vmatprep.subr.bf16.mxu0 %v6004
        %6118 = vmatpush1.bf16.msra.mxu0 %v6003
        %6119 = vmatprep.subr.bf16.mxu0 %v6008
        %6120 = vmatpush1.bf16.msra.mxu0 %v6007
        %6121 = vmatprep.subr.bf16.mxu0 %v6012
        %6122 = vmatpush1.bf16.msra.mxu0 %v6011
        %6123 = vmatprep.subr.bf16.mxu0 %v6016
        %6124 = vmatpush1.bf16.msra.mxu0 %v6015
        %6125 = vmatprep.subr.bf16.mxu0 %v6020
        %6126 = vmatpush1.bf16.msra.mxu0 %v6019
        %6127 = vmatprep.subr.bf16.mxu0 %v6024
        %6128 = vmatpush1.bf16.msra.mxu0 %v6023
        %6129 = vmatprep.subr.bf16.mxu0 %v6028
        %6130 = vmatpush1.bf16.msra.mxu0 %v6027
        %6131 = vmatprep.subr.bf16.mxu0 %v6032
        %6132 = vmatpush1.bf16.msra.mxu0 %v6031
        %6133 = vmatprep.subr.bf16.mxu0 %v6036
        %6134 = vmatpush1.bf16.msra.mxu0 %v6035
        %6135 = vmatprep.mubr.bf16.mxu0 %v5682
        %6136 = vmatmul.mubr.bf16.gmra.mrb[0].mxu0 %v5681
        %v6137 = vpop.f32.mrb[0].mxu0
        %v6138 = vadd.f32 %v5766, %v6137
        %v6139 = vpop.f32.mrb[0].mxu0
        %v6140 = vadd.f32 %v5770, %v6139
        %v6141 = vpop.f32.mrb[0].mxu0
        %v6142 = vadd.f32 %v5766, %v6141
        %v6143 = vpop.f32.mrb[0].mxu0
        %v6144 = vadd.f32 %v5770, %v6143
        %6145 = vmatprep.mubr.bf16.mxu0 %v5684
        %6146 = vmatmul.mubr.bf16.gmra.mrb[0].mxu0 %v5683
        %v6147 = vpop.f32.mrb[0].mxu0
        %v6148 = vadd.f32 %v5766, %v6147
        %v6149 = vpop.f32.mrb[0].mxu0
        %v6150 = vadd.f32 %v5770, %v6149
        %v6151 = vpop.f32.mrb[0].mxu0
        %v6152 = vadd.f32 %v5766, %v6151
        %v6153 = vpop.f32.mrb[0].mxu0
        %v6154 = vadd.f32 %v5770, %v6153
        %6155 = vmatprep.mubr.bf16.mxu0 %v5686
        %6156 = vmatmul.mubr.bf16.gmra.mrb[0].mxu0 %v5685
        %v6157 = vpop.f32.mrb[0].mxu0
        %v6158 = vadd.f32 %v5766, %v6157
        %v6159 = vpop.f32.mrb[0].mxu0
        %v6160 = vadd.f32 %v5770, %v6159
        %v6161 = vpop.f32.mrb[0].mxu0
        %v6162 = vadd.f32 %v5766, %v6161
        %v6163 = vpop.f32.mrb[0].mxu0
        %v6164 = vadd.f32 %v5770, %v6163
        %6165 = vmatprep.mubr.bf16.mxu0 %v5688
        %6166 = vmatmul.mubr.bf16.gmra.mrb[0].mxu0 %v5687
        %v6167 = vpop.f32.mrb[0].mxu0
        %v6168 = vadd.f32 %v5766, %v6167
        %v6169 = vpop.f32.mrb[0].mxu0
        %v6170 = vadd.f32 %v5770, %v6169
        %v6171 = vpop.f32.mrb[0].mxu0
        %v6172 = vadd.f32 %v5766, %v6171
        %v6173 = vpop.f32.mrb[0].mxu0
        %v6174 = vadd.f32 %v5770, %v6173
        %6175 = vmatprep.mubr.bf16.mxu0 %v5690
        %6176 = vmatmul.mubr.bf16.gmra.mrb[0].mxu0 %v5689
        %v6177 = vpop.f32.mrb[0].mxu0
        %v6178 = vadd.f32 %v5766, %v6177
        %v6179 = vpop.f32.mrb[0].mxu0
        %v6180 = vadd.f32 %v5770, %v6179
        %v6181 = vpop.f32.mrb[0].mxu0
        %v6182 = vadd.f32 %v5766, %v6181
        %v6183 = vpop.f32.mrb[0].mxu0
        %v6184 = vadd.f32 %v5770, %v6183
        %6185 = vmatprep.mubr.bf16.mxu0 %v5692
        %6186 = vmatmul.mubr.bf16.gmra.mrb[0].mxu0 %v5691
        %v6187 = vpop.f32.mrb[0].mxu0
        %v6188 = vadd.f32 %v5766, %v6187
        %v6189 = vpop.f32.mrb[0].mxu0
        %v6190 = vadd.f32 %v5770, %v6189
        %v6191 = vpop.f32.mrb[0].mxu0
        %v6192 = vadd.f32 %v5766, %v6191
        %v6193 = vpop.f32.mrb[0].mxu0
        %v6194 = vadd.f32 %v5770, %v6193
        %6195 = vmatprep.mubr.bf16.mxu0 %v5694
        %6196 = vmatmul.mubr.bf16.gmra.mrb[0].mxu0 %v5693
        %v6197 = vpop.f32.mrb[0].mxu0
        %v6198 = vadd.f32 %v5766, %v6197
        %v6199 = vpop.f32.mrb[0].mxu0
        %v6200 = vadd.f32 %v5770, %v6199
        %v6201 = vpop.f32.mrb[0].mxu0
        %v6202 = vadd.f32 %v5766, %v6201
        %v6203 = vpop.f32.mrb[0].mxu0
        %v6204 = vadd.f32 %v5770, %v6203
        %6205 = vmatprep.mubr.bf16.mxu0 %v5696
        %6206 = vmatmul.mubr.bf16.gmra.mrb[0].mxu0 %v5695
        %v6207 = vpop.f32.mrb[0].mxu0
        %v6208 = vadd.f32 %v5766, %v6207
        %v6209 = vpop.f32.mrb[0].mxu0
        %v6210 = vadd.f32 %v5770, %v6209
        %v6211 = vpop.f32.mrb[0].mxu0
        %v6212 = vadd.f32 %v5766, %v6211
        %v6213 = vpop.f32.mrb[0].mxu0
        %v6214 = vadd.f32 %v5770, %v6213
        %6215 = vdwg.mxu0
        %6216 = vmatprep.subr.bf16.mxu0 %v5978
        %6217 = vmatpush1.bf16.msra.mxu0 %v5977
        %6218 = vmatprep.subr.bf16.mxu0 %v5982
        %6219 = vmatpush1.bf16.msra.mxu0 %v5981
        %6220 = vmatprep.subr.bf16.mxu0 %v5986
        %6221 = vmatpush1.bf16.msra.mxu0 %v5985
        %6222 = vmatprep.subr.bf16.mxu0 %v5990
        %6223 = vmatpush1.bf16.msra.mxu0 %v5989
        %6224 = vmatprep.subr.bf16.mxu0 %v5994
        %6225 = vmatpush1.bf16.msra.mxu0 %v5993
        %6226 = vmatprep.subr.bf16.mxu0 %v5998
        %6227 = vmatpush1.bf16.msra.mxu0 %v5997
        %6228 = vmatprep.subr.bf16.mxu0 %v6002
        %6229 = vmatpush1.bf16.msra.mxu0 %v6001
        %6230 = vmatprep.subr.bf16.mxu0 %v6006
        %6231 = vmatpush1.bf16.msra.mxu0 %v6005
        %6232 = vmatprep.subr.bf16.mxu0 %v6010
        %6233 = vmatpush1.bf16.msra.mxu0 %v6009
        %6234 = vmatprep.subr.bf16.mxu0 %v6014
        %6235 = vmatpush1.bf16.msra.mxu0 %v6013
        %6236 = vmatprep.subr.bf16.mxu0 %v6018
        %6237 = vmatpush1.bf16.msra.mxu0 %v6017
        %6238 = vmatprep.subr.bf16.mxu0 %v6022
        %6239 = vmatpush1.bf16.msra.mxu0 %v6021
        %6240 = vmatprep.subr.bf16.mxu0 %v6026
        %6241 = vmatpush1.bf16.msra.mxu0 %v6025
        %6242 = vmatprep.subr.bf16.mxu0 %v6030
        %6243 = vmatpush1.bf16.msra.mxu0 %v6029
        %6244 = vmatprep.subr.bf16.mxu0 %v6034
        %6245 = vmatpush1.bf16.msra.mxu0 %v6033
        %6246 = vmatprep.subr.bf16.mxu0 %v6038
        %6247 = vmatpush1.bf16.msra.mxu0 %v6037
        %6248 = vmatprep.mubr.bf16.mxu0 %v5682
        %6249 = vmatmul.mubr.bf16.gmra.mrb[0].mxu0 %v5681
        %v6250 = vpop.f32.mrb[0].mxu0
        %v6251 = vadd.f32 %v5774, %v6250
        %v6252 = vpop.f32.mrb[0].mxu0
        %v6253 = vadd.f32 %v5778, %v6252
        %v6254 = vpop.f32.mrb[0].mxu0
        %v6255 = vadd.f32 %v5774, %v6254
        %v6256 = vpop.f32.mrb[0].mxu0
        %v6257 = vadd.f32 %v5778, %v6256
        %6258 = vmatprep.mubr.bf16.mxu0 %v5684
        %6259 = vmatmul.mubr.bf16.gmra.mrb[0].mxu0 %v5683
        %v6260 = vpop.f32.mrb[0].mxu0
        %v6261 = vadd.f32 %v5774, %v6260
        %v6262 = vpop.f32.mrb[0].mxu0
        %v6263 = vadd.f32 %v5778, %v6262
        %v6264 = vpop.f32.mrb[0].mxu0
        %v6265 = vadd.f32 %v5774, %v6264
        %v6266 = vpop.f32.mrb[0].mxu0
        %v6267 = vadd.f32 %v5778, %v6266
        %6268 = vmatprep.mubr.bf16.mxu0 %v5686
        %6269 = vmatmul.mubr.bf16.gmra.mrb[0].mxu0 %v5685
        %v6270 = vpop.f32.mrb[0].mxu0
        %v6271 = vadd.f32 %v5774, %v6270
        %v6272 = vpop.f32.mrb[0].mxu0
        %v6273 = vadd.f32 %v5778, %v6272
        %v6274 = vpop.f32.mrb[0].mxu0
        %v6275 = vadd.f32 %v5774, %v6274
        %v6276 = vpop.f32.mrb[0].mxu0
        %v6277 = vadd.f32 %v5778, %v6276
        %6278 = vmatprep.mubr.bf16.mxu0 %v5688
        %6279 = vmatmul.mubr.bf16.gmra.mrb[0].mxu0 %v5687
        %v6280 = vpop.f32.mrb[0].mxu0
        %v6281 = vadd.f32 %v5774, %v6280
        %v6282 = vpop.f32.mrb[0].mxu0
        %v6283 = vadd.f32 %v5778, %v6282
        %v6284 = vpop.f32.mrb[0].mxu0
        %v6285 = vadd.f32 %v5774, %v6284
        %v6286 = vpop.f32.mrb[0].mxu0
        %v6287 = vadd.f32 %v5778, %v6286
        %6288 = vmatprep.mubr.bf16.mxu0 %v5690
        %6289 = vmatmul.mubr.bf16.gmra.mrb[0].mxu0 %v5689
        %v6290 = vpop.f32.mrb[0].mxu0
        %v6291 = vadd.f32 %v5774, %v6290
        %v6292 = vpop.f32.mrb[0].mxu0
        %v6293 = vadd.f32 %v5778, %v6292
        %v6294 = vpop.f32.mrb[0].mxu0
        %v6295 = vadd.f32 %v5774, %v6294
        %v6296 = vpop.f32.mrb[0].mxu0
        %v6297 = vadd.f32 %v5778, %v6296
        %6298 = vmatprep.mubr.bf16.mxu0 %v5692
        %6299 = vmatmul.mubr.bf16.gmra.mrb[0].mxu0 %v5691
        %v6300 = vpop.f32.mrb[0].mxu0
        %v6301 = vadd.f32 %v5774, %v6300
        %v6302 = vpop.f32.mrb[0].mxu0
        %v6303 = vadd.f32 %v5778, %v6302
        %v6304 = vpop.f32.mrb[0].mxu0
        %v6305 = vadd.f32 %v5774, %v6304
        %v6306 = vpop.f32.mrb[0].mxu0
        %v6307 = vadd.f32 %v5778, %v6306
        %6308 = vmatprep.mubr.bf16.mxu0 %v5694
        %6309 = vmatmul.mubr.bf16.gmra.mrb[0].mxu0 %v5693
        %v6310 = vpop.f32.mrb[0].mxu0
        %v6311 = vadd.f32 %v5774, %v6310
        %v6312 = vpop.f32.mrb[0].mxu0
        %v6313 = vadd.f32 %v5778, %v6312
        %v6314 = vpop.f32.mrb[0].mxu0
        %v6315 = vadd.f32 %v5774, %v6314
        %v6316 = vpop.f32.mrb[0].mxu0
        %v6317 = vadd.f32 %v5778, %v6316
        %6318 = vmatprep.mubr.bf16.mxu0 %v5696
        %6319 = vmatmul.mubr.bf16.gmra.mrb[0].mxu0 %v5695
        %v6320 = vpop.f32.mrb[0].mxu0
        %v6321 = vadd.f32 %v5774, %v6320
        %v6322 = vpop.f32.mrb[0].mxu0
        %v6323 = vadd.f32 %v5778, %v6322
        %v6324 = vpop.f32.mrb[0].mxu0
        %v6325 = vadd.f32 %v5774, %v6324
        %v6326 = vpop.f32.mrb[0].mxu0
        %v6327 = vadd.f32 %v5778, %v6326
        %6328 = vdwg.mxu0
        %6329 = vst [vmem:[%s614] sm:$0xff] %v6138
        %6330 = vst [vmem:[%s614 + $0x8] sm:$0xff] %v6140
        %6331 = vst [vmem:[%s614 + $0x10] sm:$0xff] %v6251
        %6332 = vst [vmem:[%s614 + $0x18] sm:$0xff] %v6253
        %6333 = vst [vmem:[%s614 + $0x20] sm:$0xff] %v6142
        %6334 = vst [vmem:[%s614 + $0x28] sm:$0xff] %v6144
        %6335 = vst [vmem:[%s614 + $0x30] sm:$0xff] %v6255
        %6336 = vst [vmem:[%s614 + $0x38] sm:$0xff] %v6257
        %6337 = vst [vmem:[%s614 + $0x40] sm:$0xff] %v6148
        %6338 = vst [vmem:[%s614 + $0x48] sm:$0xff] %v6150
        %6339 = vst [vmem:[%s614 + $0x50] sm:$0xff] %v6261
        %6340 = vst [vmem:[%s614 + $0x58] sm:$0xff] %v6263
        %6341 = vst [vmem:[%s614 + $0x60] sm:$0xff] %v6152
        %6342 = vst [vmem:[%s614 + $0x68] sm:$0xff] %v6154
        %6343 = vst [vmem:[%s614 + $0x70] sm:$0xff] %v6265
        %6344 = vst [vmem:[%s614 + $0x78] sm:$0xff] %v6267
        %6345 = vst [vmem:[%s614 + $0x80] sm:$0xff] %v6158
        %6346 = vst [vmem:[%s614 + $0x88] sm:$0xff] %v6160
        %6347 = vst [vmem:[%s614 + $0x90] sm:$0xff] %v6271
        %6348 = vst [vmem:[%s614 + $0x98] sm:$0xff] %v6273
        %6349 = vst [vmem:[%s614 + $0xa0] sm:$0xff] %v6162
        %6350 = vst [vmem:[%s614 + $0xa8] sm:$0xff] %v6164
        %6351 = vst [vmem:[%s614 + $0xb0] sm:$0xff] %v6275
        %6352 = vst [vmem:[%s614 + $0xb8] sm:$0xff] %v6277
        %6353 = vst [vmem:[%s614 + $0xc0] sm:$0xff] %v6168
        %6354 = vst [vmem:[%s614 + $0xc8] sm:$0xff] %v6170
        %6355 = vst [vmem:[%s614 + $0xd0] sm:$0xff] %v6281
        %6356 = vst [vmem:[%s614 + $0xd8] sm:$0xff] %v6283
        %6357 = vst [vmem:[%s614 + $0xe0] sm:$0xff] %v6172
        %6358 = vst [vmem:[%s614 + $0xe8] sm:$0xff] %v6174
        %6359 = vst [vmem:[%s614 + $0xf0] sm:$0xff] %v6285
        %6360 = vst [vmem:[%s614 + $0xf8] sm:$0xff] %v6287
        %6361 = vst [vmem:[%s614 + $0x100] sm:$0xff] %v6178
        %6362 = vst [vmem:[%s614 + $0x108] sm:$0xff] %v6180
        %6363 = vst [vmem:[%s614 + $0x110] sm:$0xff] %v6291
        %6364 = vst [vmem:[%s614 + $0x118] sm:$0xff] %v6293
        %6365 = vst [vmem:[%s614 + $0x120] sm:$0xff] %v6182
        %6366 = vst [vmem:[%s614 + $0x128] sm:$0xff] %v6184
        %6367 = vst [vmem:[%s614 + $0x130] sm:$0xff] %v6295
        %6368 = vst [vmem:[%s614 + $0x138] sm:$0xff] %v6297
        %6369 = vst [vmem:[%s614 + $0x140] sm:$0xff] %v6188
        %6370 = vst [vmem:[%s614 + $0x148] sm:$0xff] %v6190
        %6371 = vst [vmem:[%s614 + $0x150] sm:$0xff] %v6301
        %6372 = vst [vmem:[%s614 + $0x158] sm:$0xff] %v6303
        %6373 = vst [vmem:[%s614 + $0x160] sm:$0xff] %v6192
        %6374 = vst [vmem:[%s614 + $0x168] sm:$0xff] %v6194
        %6375 = vst [vmem:[%s614 + $0x170] sm:$0xff] %v6305
        %6376 = vst [vmem:[%s614 + $0x178] sm:$0xff] %v6307
        %6377 = vst [vmem:[%s614 + $0x180] sm:$0xff] %v6198
        %6378 = vst [vmem:[%s614 + $0x188] sm:$0xff] %v6200
        %6379 = vst [vmem:[%s614 + $0x190] sm:$0xff] %v6311
        %6380 = vst [vmem:[%s614 + $0x198] sm:$0xff] %v6313
        %6381 = vst [vmem:[%s614 + $0x1a0] sm:$0xff] %v6202
        %6382 = vst [vmem:[%s614 + $0x1a8] sm:$0xff] %v6204
        %6383 = vst [vmem:[%s614 + $0x1b0] sm:$0xff] %v6315
        %6384 = vst [vmem:[%s614 + $0x1b8] sm:$0xff] %v6317
        %6385 = vst [vmem:[%s614 + $0x1c0] sm:$0xff] %v6208
        %6386 = vst [vmem:[%s614 + $0x1c8] sm:$0xff] %v6210
        %6387 = vst [vmem:[%s614 + $0x1d0] sm:$0xff] %v6321
        %6388 = vst [vmem:[%s614 + $0x1d8] sm:$0xff] %v6323
        %6389 = vst [vmem:[%s614 + $0x1e0] sm:$0xff] %v6212
        %6390 = vst [vmem:[%s614 + $0x1e8] sm:$0xff] %v6214
        %6391 = vst [vmem:[%s614 + $0x1f0] sm:$0xff] %v6325
        %6392 = vst [vmem:[%s614 + $0x1f8] sm:$0xff] %v6327
        %s6393 = sand.u32 %s349, 1
        %s6394 = scalar_lea.sflag [#allocation4], %s6393
        %s6395 = sand.u32 %s349, 1
        %s6396 = smul.addr %s6395, 512
        %s6397 = scalar_lea.vmem [#allocation16], %s6396
        // Predicated region
        $region109: #{generator_mlp_forward.1} parent=75 // pred_check
          %p6398 = pneg %p359
        $region110: #{generator_mlp_forward.1} parent=75 // pred_check_branch
          %6400 = sbr.rel (%p6398) target = $region112
        $region111: #{generator_mlp_forward.1} parent=75 // pred_region
          %s6401 = smul.u32 16, %s37
          %s6403 = ssub.s32 8192, 8192
          %6404 = vsyncadd %s6394, %s6403
          %s6405 = smul.addr %s6401, 4
          %s6406 = smul.addr %s6405, 128
          %s6407 = scalar_lea.hbm %s14, %s6406
          %s6408 = sshll.u32 %s6397, 4
          %s6409 = int_to_ptr.vmem [resolvable:$true] %s6408
          %6414 = dma.vmem_to_hbm [thread:$0]  %s6409, 8192, %s6407, %s6394, 512, 512, 32
        $region112: #{generator_mlp_forward.1} parent=75 // pred_fallthru
          _
      $region76: #{generator_mlp_forward.1} parent=5 // pred_fallthru
        _
      %p6415 = scmp.le.s32.totalorder 2, %s32
      // Predicated region
      $region113: #{generator_mlp_forward.1} parent=5 // pred_check
        %p6416 = pneg %p6415
      $region114: #{generator_mlp_forward.1} parent=5 // pred_check_branch
        %6418 = sbr.rel (%p6416) target = $region116
      $region115: #{generator_mlp_forward.1} parent=5 // pred_region
        %s6419 = ssub.s32 %s32, 2
        // Predicated region
        $region117: #{generator_mlp_forward.1} parent=115 // pred_check
          %p6420 = pneg %p365
        $region118: #{generator_mlp_forward.1} parent=115 // pred_check_branch
          %6422 = sbr.rel (%p6420) target = $region120
        $region119: #{generator_mlp_forward.1} parent=115 // pred_region
          %s6423 = sand.u32 %s350, 1
          %s6424 = scalar_lea.sflag [#allocation4], %s6423
          %s6425 = sand.u32 %s350, 1
          %s6426 = smul.addr %s6425, 512
          %s6427 = scalar_lea.vmem [#allocation16], %s6426
          %6428 = dma.done %s6424, 8192
        $region120: #{generator_mlp_forward.1} parent=115 // pred_fallthru
          _
      $region116: #{generator_mlp_forward.1} parent=5 // pred_fallthru
        _
    $region6: #{generator_mlp_forward.1} parent=1 // loop_footer
      %s36 = sadd.s32 1, %s32
    $region7: #{generator_mlp_forward.1} parent=1 // loop_footer_branch
      %31 = sbr.rel target = $region3
    $region8: #{generator_mlp_forward.1} parent=1 // loop_exit
      _
    %6429 = vsyncpa [#allocation3], 1
    %s6430 = scalar_lea.sflag [#allocation3], 1
    %6431 = vsyncpa %s6430, 1
    %6432 = vsyncpa [#allocation6], 1
    %s6433 = scalar_lea.sflag [#allocation6], 1
    %6434 = vsyncpa %s6433, 1
    %6435 = vsyncpa [#allocation9], 1
    %6436 = vsyncpa [#allocation12], 1
    %6437 = vsyncpa [#allocation15], 1
    %6438 = vsyncpa [#allocation4], 1
    %s6439 = scalar_lea.sflag [#allocation4], 1
    %6440 = vsyncpa %s6439, 1

</llo_original>
